<compile_context>
chip_gen: v6e
topology: v6e:2x2x1
jax: 0.10.0
libtpu: 0.0.40
codegen_flags: <defaults>
</compile_context>

<pallas_src>
import math

import jax
import jax.numpy as jnp
from jax import lax
from jax.experimental import pallas as pl
from jax.experimental.pallas import tpu as pltpu


def decision_node_kernel(x_ref, xt_ref, w_ref, wt_ref, b_ref, c_ref,
                         sp_ref, gini_ref):
    # x_ref:   [tm, K0]   f32   aligned bulk of x (streamed straight from HBM)
    # xt_ref:  [tm, 128]  bf16  zero-padded remainder columns of x
    # w_ref:   [L,  K0]   bf16  Linear weight bulk (PyTorch [out, in] layout)
    # wt_ref:  [L,  128]  bf16  zero-padded remainder columns of the weight
    # b_ref:   [1,  L]    f32   Linear bias
    # c_ref:   [C, tm, L] f32   contribution pattern: c_ref[c, r, l] = contribution[r % T, l, c]
    # sp_ref:  [tm, L]    f32   symbolic_paths output tile
    # gini_ref:[tm, L]    f32   class_value output tile

    # Linear: bf16 inputs, f32 MXU accumulation.  x is cast in-kernel so the
    # caller's f32 array is read exactly once from HBM (no padded copy).
    x_bf = x_ref[...].astype(jnp.bfloat16)
    y = lax.dot_general(x_bf, w_ref[...],
                        dimension_numbers=(((1,), (1,)), ((), ())),
                        preferred_element_type=jnp.float32)
    y += lax.dot_general(xt_ref[...], wt_ref[...],
                         dimension_numbers=(((1,), (1,)), ((), ())),
                         preferred_element_type=jnp.float32)

    # Bias + Hardtanh (default clamp to [-1, 1]).
    y = jnp.clip(y + b_ref[...], -1.0, 1.0)
    sp_ref[...] = y

    # softmax over the (tiny, static) class axis + sum_c (1 - p_c^2), done as
    # dense [tm, L] elementwise work.  Two passes recompute y * contrib to keep
    # the number of live [tm, L] slabs small (no epilogue spills).
    nclass = c_ref.shape[0]
    m = y * c_ref[0]
    for c in range(1, nclass):
        m = jnp.maximum(m, y * c_ref[c])
    denom = jnp.zeros_like(y)
    sum_e2 = jnp.zeros_like(y)
    for c in range(nclass):
        e = jnp.exp(y * c_ref[c] - m)
        denom = denom + e
        sum_e2 = sum_e2 + e * e
    # sum_c (1 - p_c^2) == C - (sum_c e_c^2) / denom^2   (exact division)
    gini_ref[...] = jnp.float32(nclass) - sum_e2 / (denom * denom)


def decision_node_forward(x, weight, bias, contribution, *, tm_target=512):
    """x: [B, T, K] f32; weight: [L, K] (PyTorch nn.Linear layout); bias: [L];
    contribution: [T, L, C].
    Returns (symbolic_paths [B, T, L], class_value [B, T, L])."""
    B, T, K = x.shape
    L = weight.shape[0]
    C = contribution.shape[-1]
    M = B * T

    # Split the contraction into a lane-aligned bulk + a <128-wide remainder so
    # every MXU contraction dim is a multiple of 128 without copying/padding x.
    K0 = (K // 128) * 128
    rem = K - K0

    x2 = x.reshape(M, K)                       # view-level reshape; streamed as f32
    if rem:
        x_tail = jnp.pad(x2[:, K0:].astype(jnp.bfloat16), ((0, 0), (0, 128 - rem)))
        w_tail = jnp.pad(weight[:, K0:].astype(jnp.bfloat16), ((0, 0), (0, 128 - rem)))
    else:
        x_tail = jnp.zeros((M, 128), jnp.bfloat16)
        w_tail = jnp.zeros((L, 128), jnp.bfloat16)
    w_main = weight[:, :K0].astype(jnp.bfloat16)
    b2 = bias.reshape(1, L).astype(jnp.float32)

    # ---- M tiling ---------------------------------------------------------
    # tm must be a multiple of 8 (sublanes) and of T (so tree == row % T holds
    # inside every tile), unless a single tile covers the whole (tiny) batch.
    base = (8 * T) // math.gcd(8, T)

    try:
        vmem_cap = int(pltpu.get_tpu_info().vmem_capacity_bytes)
    except Exception:
        vmem_cap = 64 * 1024 * 1024            # conservative (v7x per-core VMEM)
    # Per-row VMEM: double-buffered f32 x block + in-kernel bf16 cast + small stuff.
    per_row = K0 * (2 * 4 + 2) + 2 * 128 * 2 + 2 * C * L * 4 + 4 * L * 4
    budget = min(int(0.70 * vmem_cap), 48 * 1024 * 1024)   # safe on v7x's 64 MiB
    tm_cap = max(base, (int(budget // per_row) // base) * base)
    tm_cap = min(tm_cap, max(base, (tm_target // base) * base))

    if M <= base:
        # Tiny-batch latency path: one grid step, block rows == M, no padding.
        tm = M
    else:
        # Expose >= 2 M tiles so v7x's two TensorCores both get work.
        tm_two = pl.cdiv(pl.cdiv(M, 2), base) * base
        tm = max(base, min(tm_cap, tm_two))
    grid_m = pl.cdiv(M, tm)                    # last tile may be partial (masked)

    # Batch-independent contribution pattern: ct[c, r, l] = contribution[r % T, l, c]
    ct = jnp.transpose(contribution.astype(jnp.float32), (2, 0, 1))   # [C, T, L]
    ct = jnp.tile(ct, (1, tm // T, 1))                                # [C, tm, L]

    vmem_need = (2 * tm * K0 * 4 + tm * K0 * 2      # x double-buffer (f32) + bf16 cast
                 + 2 * tm * 128 * 2 + 2 * L * 128 * 2   # remainder slabs
                 + 2 * L * K0 * 2                       # weight (bf16, resident)
                 + 2 * C * tm * L * 4                   # contribution pattern
                 + 4 * tm * L * 4                       # outputs (double-buffered)
                 + (4 << 20))                           # headroom for temps
    vmem_limit = int(min(max(vmem_need, 32 * 1024 * 1024), vmem_cap))

    sp, gini = pl.pallas_call(
        decision_node_kernel,
        out_shape=(
            jax.ShapeDtypeStruct((M, L), jnp.float32),
            jax.ShapeDtypeStruct((M, L), jnp.float32),
        ),
        grid=(grid_m,),
        in_specs=[
            pl.BlockSpec((tm, K0), lambda i: (i, 0)),       # x bulk (f32, streamed)
            pl.BlockSpec((tm, 128), lambda i: (i, 0)),      # x remainder (bf16)
            pl.BlockSpec((L, K0), lambda i: (0, 0)),        # weight bulk (resident)
            pl.BlockSpec((L, 128), lambda i: (0, 0)),       # weight remainder
            pl.BlockSpec((1, L), lambda i: (0, 0)),         # bias
            pl.BlockSpec((C, tm, L), lambda i: (0, 0, 0)),  # contribution pattern
        ],
        out_specs=(
            pl.BlockSpec((tm, L), lambda i: (i, 0)),
            pl.BlockSpec((tm, L), lambda i: (i, 0)),
        ),
        compiler_params=pltpu.CompilerParams(
            dimension_semantics=("parallel",),
            vmem_limit_bytes=vmem_limit,
        ),
    )(x2, x_tail, w_main, w_tail, b2, ct)

    return sp.reshape(B, T, L), gini.reshape(B, T, L)


if __name__ == "__main__":
    # Shapes consistent with the module: number_of_trees=3, max_num_of_leaf_nodes=8,
    # classes=4; nn.Linear in_features fixed at 16080.
    T, L, C = 3, 8, 4
    K = 16080

    key = jax.random.PRNGKey(0)
    k1, k2, k3, k4, k5 = jax.random.split(key, 5)

    # Deterministic parameter init (mirrors nn.Linear fan-in bound and
    # contribution ~ U(-1, 1)); weight kept in PyTorch [out_features, in_features].
    bound = 1.0 / (K ** 0.5)
    w = jax.random.uniform(k2, (L, K), minval=-bound, maxval=bound, dtype=jnp.float32)
    b = jax.random.uniform(k3, (L,), minval=-bound, maxval=bound, dtype=jnp.float32)
    contribution = jax.random.uniform(k4, (T, L, C), minval=-1.0, maxval=1.0,
                                      dtype=jnp.float32)
    # NOTE: the module's torch.randn init of class_value is dead code (every
    # entry is overwritten before use), so it is intentionally not reproduced.

    def reference(xin):
        # Pure-JAX reference with the same bf16-input / f32-accumulate matmul policy.
        Bq = xin.shape[0]
        xb = xin.reshape(Bq * T, K).astype(jnp.bfloat16)
        wb = w.astype(jnp.bfloat16)
        y = lax.dot_general(xb, wb, (((1,), (1,)), ((), ())),
                            preferred_element_type=jnp.float32)
        y = jnp.clip(y + b[None, :], -1.0, 1.0)
        cv = y[:, :, None] * jnp.tile(contribution, (Bq, 1, 1))
        p = jax.nn.softmax(cv, axis=-1)
        g = jnp.sum(1.0 - p * p, axis=-1)
        return y.reshape(Bq, T, L), g.reshape(Bq, T, L)

    # 1) Tiny shipped shape (batch=2): single grid step, no padding anywhere.
    x_small = jax.random.normal(k1, (2, T, K), dtype=jnp.float32)
    sp, gini = decision_node_forward(x_small, w, b, contribution)
    jax.block_until_ready((sp, gini))
    sp_r, gini_r = reference(x_small)
    assert jnp.allclose(sp, sp_r, rtol=2e-3, atol=2e-3)
    assert jnp.allclose(gini, gini_r, rtol=2e-3, atol=2e-3)

    # 2) Moderate batch exercising the tiled path (2 "parallel" M tiles,
    #    including a partial last tile with masked writes).
    x_big = jax.random.normal(k5, (40, T, K), dtype=jnp.float32)
    sp2, gini2 = decision_node_forward(x_big, w, b, contribution)
    jax.block_until_ready((sp2, gini2))
    sp2_r, gini2_r = reference(x_big)
    assert jnp.allclose(sp2, sp2_r, rtol=2e-3, atol=2e-3)
    assert jnp.allclose(gini2, gini2_r, rtol=2e-3, atol=2e-3)

    print("KERNEL_OK")
</pallas_src>

<mosaic_0001>
module attributes {stable_mosaic.version = 11 : i64} {
  func.func @decision_node_kernel(%arg0: i32, %arg1: memref<6x16000xf32, #tpu.memory_space<vmem>>, %arg2: memref<6x128xbf16, #tpu.memory_space<vmem>>, %arg3: memref<8x16000xbf16, #tpu.memory_space<vmem>>, %arg4: memref<8x128xbf16, #tpu.memory_space<vmem>>, %arg5: memref<1x8xf32, #tpu.memory_space<vmem>>, %arg6: memref<4x6x8xf32, #tpu.memory_space<vmem>>, %arg7: memref<6x8xf32, #tpu.memory_space<vmem>>, %arg8: memref<6x8xf32, #tpu.memory_space<vmem>>) attributes {dimension_semantics = [#tpu.dimension_semantics<parallel>], iteration_bounds = array<i64: 1>, scalar_prefetch = 0 : i64, scratch_operands = 0 : i64, tpu.core_type = #tpu.core_type<tc>, window_params = [{transform_indices = @transform_0, window_bounds = array<i64: 6, 16000>}, {transform_indices = @transform_1, window_bounds = array<i64: 6, 128>}, {pipeline_mode = #tpu.pipeline_mode<synchronous>, transform_indices = @transform_2, window_bounds = array<i64: 8, 16000>}, {pipeline_mode = #tpu.pipeline_mode<synchronous>, transform_indices = @transform_3, window_bounds = array<i64: 8, 128>}, {pipeline_mode = #tpu.pipeline_mode<synchronous>, transform_indices = @transform_4, window_bounds = array<i64: 1, 8>}, {pipeline_mode = #tpu.pipeline_mode<synchronous>, transform_indices = @transform_5, window_bounds = array<i64: 4, 6, 8>}, {transform_indices = @transform_6, window_bounds = array<i64: 6, 8>}, {transform_indices = @transform_7, window_bounds = array<i64: 6, 8>}]} {
    %c0 = arith.constant 0 : index
    %c0_0 = arith.constant 0 : index
    %0 = vector.load %arg1[%c0, %c0_0] : memref<6x16000xf32, #tpu.memory_space<vmem>>, vector<6x16000xf32>
    %1 = arith.truncf %0 : vector<6x16000xf32> to vector<6x16000xbf16>
    %c0_1 = arith.constant 0 : index
    %c0_2 = arith.constant 0 : index
    %2 = vector.load %arg3[%c0_1, %c0_2] : memref<8x16000xbf16, #tpu.memory_space<vmem>>, vector<8x16000xbf16>
    %cst = arith.constant dense<0.000000e+00> : vector<6x8xf32>
    %3 = tpu.matmul %1, %2, %cst {dimension_numbers = #tpu.dot_dimension_numbers<[1], [1], [0], [0], [0, 0, 1, 0], [], []>} : vector<6x16000xbf16>, vector<8x16000xbf16>, vector<6x8xf32> -> vector<6x8xf32>
    %c0_3 = arith.constant 0 : index
    %c0_4 = arith.constant 0 : index
    %4 = vector.load %arg2[%c0_3, %c0_4] : memref<6x128xbf16, #tpu.memory_space<vmem>>, vector<6x128xbf16>
    %c0_5 = arith.constant 0 : index
    %c0_6 = arith.constant 0 : index
    %5 = vector.load %arg4[%c0_5, %c0_6] : memref<8x128xbf16, #tpu.memory_space<vmem>>, vector<8x128xbf16>
    %cst_7 = arith.constant dense<0.000000e+00> : vector<6x8xf32>
    %6 = tpu.matmul %4, %5, %cst_7 {dimension_numbers = #tpu.dot_dimension_numbers<[1], [1], [0], [0], [0, 0, 1, 0], [], []>} : vector<6x128xbf16>, vector<8x128xbf16>, vector<6x8xf32> -> vector<6x8xf32>
    %7 = arith.addf %3, %6 : vector<6x8xf32>
    %c0_8 = arith.constant 0 : index
    %c0_9 = arith.constant 0 : index
    %8 = vector.load %arg5[%c0_8, %c0_9] : memref<1x8xf32, #tpu.memory_space<vmem>>, vector<1x8xf32>
    %9 = vector.broadcast %8 : vector<1x8xf32> to vector<6x8xf32>
    %10 = arith.addf %7, %9 : vector<6x8xf32>
    %cst_10 = arith.constant -1.000000e+00 : f32
    %cst_11 = arith.constant 1.000000e+00 : f32
    %11 = vector.broadcast %cst_10 : f32 to vector<6x8xf32>
    %12 = arith.maximumf %11, %10 : vector<6x8xf32>
    %13 = vector.broadcast %cst_11 : f32 to vector<6x8xf32>
    %14 = arith.minimumf %13, %12 : vector<6x8xf32>
    %c0_12 = arith.constant 0 : index
    %c0_13 = arith.constant 0 : index
    %15 = vector.load %arg7[%c0_12, %c0_13] : memref<6x8xf32, #tpu.memory_space<vmem>>, vector<6x8xf32>
    tpu.vector_store %arg7[%c0_12, %c0_13], %14 {strides = array<i32>} : memref<6x8xf32, #tpu.memory_space<vmem>>, vector<6x8xf32>,
    %c0_14 = arith.constant 0 : index
    %c0_15 = arith.constant 0 : index
    %c0_16 = arith.constant 0 : index
    %16 = vector.load %arg6[%c0_14, %c0_15, %c0_16] : memref<4x6x8xf32, #tpu.memory_space<vmem>>, vector<1x6x8xf32>
    %17 = vector.shape_cast %16 : vector<1x6x8xf32> to vector<6x8xf32>
    %18 = arith.mulf %14, %17 : vector<6x8xf32>
    %c1 = arith.constant 1 : index
    %c0_17 = arith.constant 0 : index
    %c0_18 = arith.constant 0 : index
    %19 = vector.load %arg6[%c1, %c0_17, %c0_18] : memref<4x6x8xf32, #tpu.memory_space<vmem>>, vector<1x6x8xf32>
    %20 = vector.shape_cast %19 : vector<1x6x8xf32> to vector<6x8xf32>
    %21 = arith.mulf %14, %20 : vector<6x8xf32>
    %22 = arith.maximumf %18, %21 : vector<6x8xf32>
    %c2 = arith.constant 2 : index
    %c0_19 = arith.constant 0 : index
    %c0_20 = arith.constant 0 : index
    %23 = vector.load %arg6[%c2, %c0_19, %c0_20] : memref<4x6x8xf32, #tpu.memory_space<vmem>>, vector<1x6x8xf32>
    %24 = vector.shape_cast %23 : vector<1x6x8xf32> to vector<6x8xf32>
    %25 = arith.mulf %14, %24 : vector<6x8xf32>
    %26 = arith.maximumf %22, %25 : vector<6x8xf32>
    %c3 = arith.constant 3 : index
    %c0_21 = arith.constant 0 : index
    %c0_22 = arith.constant 0 : index
    %27 = vector.load %arg6[%c3, %c0_21, %c0_22] : memref<4x6x8xf32, #tpu.memory_space<vmem>>, vector<1x6x8xf32>
    %28 = vector.shape_cast %27 : vector<1x6x8xf32> to vector<6x8xf32>
    %29 = arith.mulf %14, %28 : vector<6x8xf32>
    %30 = arith.maximumf %26, %29 : vector<6x8xf32>
    %cst_23 = arith.constant 0.000000e+00 : f32
    %31 = vector.broadcast %cst_23 : f32 to vector<6x8xf32>
    %cst_24 = arith.constant 0.000000e+00 : f32
    %32 = vector.broadcast %cst_24 : f32 to vector<6x8xf32>
    %c0_25 = arith.constant 0 : index
    %c0_26 = arith.constant 0 : index
    %c0_27 = arith.constant 0 : index
    %33 = vector.load %arg6[%c0_25, %c0_26, %c0_27] : memref<4x6x8xf32, #tpu.memory_space<vmem>>, vector<1x6x8xf32>
    %34 = vector.shape_cast %33 : vector<1x6x8xf32> to vector<6x8xf32>
    %35 = arith.mulf %14, %34 : vector<6x8xf32>
    %36 = arith.subf %35, %30 : vector<6x8xf32>
    %37 = math.exp %36 : vector<6x8xf32>
    %38 = arith.addf %31, %37 : vector<6x8xf32>
    %39 = arith.mulf %37, %37 : vector<6x8xf32>
    %40 = arith.addf %32, %39 : vector<6x8xf32>
    %c1_28 = arith.constant 1 : index
    %c0_29 = arith.constant 0 : index
    %c0_30 = arith.constant 0 : index
    %41 = vector.load %arg6[%c1_28, %c0_29, %c0_30] : memref<4x6x8xf32, #tpu.memory_space<vmem>>, vector<1x6x8xf32>
    %42 = vector.shape_cast %41 : vector<1x6x8xf32> to vector<6x8xf32>
    %43 = arith.mulf %14, %42 : vector<6x8xf32>
    %44 = arith.subf %43, %30 : vector<6x8xf32>
    %45 = math.exp %44 : vector<6x8xf32>
    %46 = arith.addf %38, %45 : vector<6x8xf32>
    %47 = arith.mulf %45, %45 : vector<6x8xf32>
    %48 = arith.addf %40, %47 : vector<6x8xf32>
    %c2_31 = arith.constant 2 : index
    %c0_32 = arith.constant 0 : index
    %c0_33 = arith.constant 0 : index
    %49 = vector.load %arg6[%c2_31, %c0_32, %c0_33] : memref<4x6x8xf32, #tpu.memory_space<vmem>>, vector<1x6x8xf32>
    %50 = vector.shape_cast %49 : vector<1x6x8xf32> to vector<6x8xf32>
    %51 = arith.mulf %14, %50 : vector<6x8xf32>
    %52 = arith.subf %51, %30 : vector<6x8xf32>
    %53 = math.exp %52 : vector<6x8xf32>
    %54 = arith.addf %46, %53 : vector<6x8xf32>
    %55 = arith.mulf %53, %53 : vector<6x8xf32>
    %56 = arith.addf %48, %55 : vector<6x8xf32>
    %c3_34 = arith.constant 3 : index
    %c0_35 = arith.constant 0 : index
    %c0_36 = arith.constant 0 : index
    %57 = vector.load %arg6[%c3_34, %c0_35, %c0_36] : memref<4x6x8xf32, #tpu.memory_space<vmem>>, vector<1x6x8xf32>
    %58 = vector.shape_cast %57 : vector<1x6x8xf32> to vector<6x8xf32>
    %59 = arith.mulf %14, %58 : vector<6x8xf32>
    %60 = arith.subf %59, %30 : vector<6x8xf32>
    %61 = math.exp %60 : vector<6x8xf32>
    %62 = arith.addf %54, %61 : vector<6x8xf32>
    %63 = arith.mulf %61, %61 : vector<6x8xf32>
    %64 = arith.addf %56, %63 : vector<6x8xf32>
    %65 = arith.mulf %62, %62 : vector<6x8xf32>
    %66 = arith.divf %64, %65 : vector<6x8xf32>
    %cst_37 = arith.constant 4.000000e+00 : f32
    %67 = vector.broadcast %cst_37 : f32 to vector<6x8xf32>
    %68 = arith.subf %67, %66 : vector<6x8xf32>
    %c0_38 = arith.constant 0 : index
    %c0_39 = arith.constant 0 : index
    %69 = vector.load %arg8[%c0_38, %c0_39] : memref<6x8xf32, #tpu.memory_space<vmem>>, vector<6x8xf32>
    tpu.vector_store %arg8[%c0_38, %c0_39], %68 {strides = array<i32>} : memref<6x8xf32, #tpu.memory_space<vmem>>, vector<6x8xf32>,
    return
  }
  func.func @transform_0(%arg0: i32) -> (i32, i32) {
    %c0_i32 = arith.constant 0 : i32
    %c0_i32_0 = arith.constant 0 : i32
    return %arg0, %c0_i32 : i32, i32
  }
  func.func @transform_1(%arg0: i32) -> (i32, i32) {
    %c0_i32 = arith.constant 0 : i32
    %c0_i32_0 = arith.constant 0 : i32
    return %arg0, %c0_i32 : i32, i32
  }
  func.func @transform_2(%arg0: i32) -> (i32, i32) {
    %c0_i32 = arith.constant 0 : i32
    %c0_i32_0 = arith.constant 0 : i32
    %c0_i32_1 = arith.constant 0 : i32
    return %c0_i32, %c0_i32_0 : i32, i32
  }
  func.func @transform_3(%arg0: i32) -> (i32, i32) {
    %c0_i32 = arith.constant 0 : i32
    %c0_i32_0 = arith.constant 0 : i32
    %c0_i32_1 = arith.constant 0 : i32
    return %c0_i32, %c0_i32_0 : i32, i32
  }
  func.func @transform_4(%arg0: i32) -> (i32, i32) {
    %c0_i32 = arith.constant 0 : i32
    %c0_i32_0 = arith.constant 0 : i32
    %c0_i32_1 = arith.constant 0 : i32
    return %c0_i32, %c0_i32_0 : i32, i32
  }
  func.func @transform_5(%arg0: i32) -> (i32, i32, i32) {
    %c0_i32 = arith.constant 0 : i32
    %c0_i32_0 = arith.constant 0 : i32
    %c0_i32_1 = arith.constant 0 : i32
    %c0_i32_2 = arith.constant 0 : i32
    return %c0_i32, %c0_i32_0, %c0_i32_1 : i32, i32, i32
  }
  func.func @transform_6(%arg0: i32) -> (i32, i32) {
    %c0_i32 = arith.constant 0 : i32
    %c0_i32_0 = arith.constant 0 : i32
    return %arg0, %c0_i32 : i32, i32
  }
  func.func @transform_7(%arg0: i32) -> (i32, i32) {
    %c0_i32 = arith.constant 0 : i32
    %c0_i32_0 = arith.constant 0 : i32
    return %arg0, %c0_i32 : i32, i32
  }
}

</mosaic_0001>

<llo_original>
// kernel: tpu_custom_call.1
$region0: #{tpu_custom_call.1}
  #allocation0 [shape = 'u32[]', space=smem, size = 0x4, offset = 0x4, fixed_abs, tag = 'smem constant byte address 0x4 - core index']
  #allocation1 [shape = 'u32[144,128]{1,0:T(1,128)}', space=vmem, size = 0x12000, scoped, tag = 'internal scratch']
  %s0 = inlined_call_operand.hbm [shape: f32[6,16080], index: 0, kind: input, shape index: {}]
  %s1 = inlined_call_operand.vmem [shape: bf16[6,128], index: 1, kind: input, shape index: {}]
  %s2 = inlined_call_operand.hbm [shape: bf16[8,16000], index: 2, kind: input, shape index: {}]
  %s3 = inlined_call_operand.vmem [shape: bf16[8,128], index: 3, kind: input, shape index: {}]
  %s4 = inlined_call_operand.vmem [shape: f32[1,8], index: 4, kind: input, shape index: {}]
  %s5 = inlined_call_operand.vmem [shape: f32[4,6,8], index: 5, kind: input, shape index: {}]
  %s6 = inlined_call_operand.hbm [shape: f32[6,8], index: 6, kind: output, shape index: {0}]
  %s7 = inlined_call_operand.hbm [shape: f32[6,8], index: 7, kind: output, shape index: {1}]
  %8 = xla_tuple %s6, %s7
  %s9 = sld [smem:[#allocation0]]
  $region50: #{tpu_custom_call.1} parent=0
    _
  %s11 = ssub.s32 1, %s9
  %s12 = scalar_select 0, %s11, %s9
  $region1: #{tpu_custom_call.1} parent=0
    #allocation2 [shape = 'u8[512000]{0}', space=vmem, size = 0x7d000, scoped, tag = 'input window, operand 0, single buffered']
    #allocation3 [shape = 's32[1]{0}', space=sflag, size = 0x4, scoped, tag = 'scoped memory for tpu_custom_call.1']
    #allocation4 [shape = 's32[1]{0}', space=sflag, size = 0x4, scoped, tag = 'scoped memory for tpu_custom_call.1']
    #allocation5 [shape = 'u8[256000]{0}', space=vmem, size = 0x3e800, scoped, tag = 'input window, operand 2, single buffered']
    #allocation6 [shape = 's32[1]{0}', space=sflag, size = 0x4, scoped, tag = 'scoped memory for tpu_custom_call.1']
    #allocation7 [shape = 'u8[4096]{0}', space=vmem, size = 0x1000, scoped, tag = 'output window, operand 0, single buffered']
    #allocation8 [shape = 'u8[4096]{0}', space=vmem, size = 0x1000, scoped, tag = 'output window, operand 1, single buffered']
    #allocation9 [shape = 's32[1]{0}', space=sflag, size = 0x4, scoped, tag = 'scoped memory for tpu_custom_call.1']
    %13 = vsyncpa [#allocation3], 0
    %14 = vsyncpa [#allocation6], 0
    %15 = vsyncpa [#allocation4], 0
    %16 = vsyncpa [#allocation9], 0
    // Predicated region
    $region2: #{tpu_custom_call.1} parent=1 // pred_check
      _
    $region3: #{tpu_custom_call.1} parent=1 // pred_check_branch
      %18 = sbr.rel (0) target = $region5
    $region4: #{tpu_custom_call.1} parent=1 // pred_region
      %s20 = ssub.s32 16000, 16000
      %21 = vsyncadd [#allocation3], %s20
      %s23 = sshll.u32 [#allocation2], 4
      %s24 = int_to_ptr.vmem [resolvable:$true] %s23
      %26 = dma.hbm_to_vmem [thread:$0]  %s0, 16000, %s24, [#allocation3]
    $region5: #{tpu_custom_call.1} parent=1 // pred_fallthru
      _
    // Predicated region
    $region6: #{tpu_custom_call.1} parent=1 // pred_check
      _
    $region7: #{tpu_custom_call.1} parent=1 // pred_check_branch
      %28 = sbr.rel (0) target = $region9
    $region8: #{tpu_custom_call.1} parent=1 // pred_region
      _
    $region9: #{tpu_custom_call.1} parent=1 // pred_fallthru
      _
    // Predicated region
    $region10: #{tpu_custom_call.1} parent=1 // pred_check
      _
    $region11: #{tpu_custom_call.1} parent=1 // pred_check_branch
      %30 = sbr.rel (0) target = $region13
    $region12: #{tpu_custom_call.1} parent=1 // pred_region
      %s32 = ssub.s32 8000, 8000
      %33 = vsyncadd [#allocation6], %s32
      %s35 = sshll.u32 [#allocation5], 4
      %s36 = int_to_ptr.vmem [resolvable:$true] %s35
      %38 = dma.hbm_to_vmem [thread:$0]  %s2, 8000, %s36, [#allocation6]
    $region13: #{tpu_custom_call.1} parent=1 // pred_fallthru
      _
    // Predicated region
    $region14: #{tpu_custom_call.1} parent=1 // pred_check
      _
    $region15: #{tpu_custom_call.1} parent=1 // pred_check_branch
      %40 = sbr.rel (0) target = $region17
    $region16: #{tpu_custom_call.1} parent=1 // pred_region
      _
    $region17: #{tpu_custom_call.1} parent=1 // pred_fallthru
      _
    // Predicated region
    $region18: #{tpu_custom_call.1} parent=1 // pred_check
      _
    $region19: #{tpu_custom_call.1} parent=1 // pred_check_branch
      %42 = sbr.rel (0) target = $region21
    $region20: #{tpu_custom_call.1} parent=1 // pred_region
      _
    $region21: #{tpu_custom_call.1} parent=1 // pred_fallthru
      _
    // Predicated region
    $region22: #{tpu_custom_call.1} parent=1 // pred_check
      _
    $region23: #{tpu_custom_call.1} parent=1 // pred_check_branch
      %44 = sbr.rel (0) target = $region25
    $region24: #{tpu_custom_call.1} parent=1 // pred_region
      _
    $region25: #{tpu_custom_call.1} parent=1 // pred_fallthru
      _
    // Predicated region
    $region26: #{tpu_custom_call.1} parent=1 // pred_check
      _
    $region27: #{tpu_custom_call.1} parent=1 // pred_check_branch
      %46 = sbr.rel (0) target = $region29
    $region28: #{tpu_custom_call.1} parent=1 // pred_region
      %47 = dma.done [#allocation3], 16000
    $region29: #{tpu_custom_call.1} parent=1 // pred_fallthru
      _
    // Predicated region
    $region30: #{tpu_custom_call.1} parent=1 // pred_check
      _
    $region31: #{tpu_custom_call.1} parent=1 // pred_check_branch
      %49 = sbr.rel (0) target = $region33
    $region32: #{tpu_custom_call.1} parent=1 // pred_region
      %50 = dma.done [#allocation6], 8000
    $region33: #{tpu_custom_call.1} parent=1 // pred_fallthru
      _
    %v52 = vld [vmem:[#allocation2] sm:$0x3f]
    %v53 = vld [vmem:[#allocation2 + $0x8] sm:$0x3f]
    %v54 = vld [vmem:[#allocation2 + $0x10] sm:$0x3f]
    %v55 = vld [vmem:[#allocation2 + $0x18] sm:$0x3f]
    %v56 = vld [vmem:[#allocation2 + $0x20] sm:$0x3f]
    %v57 = vld [vmem:[#allocation2 + $0x28] sm:$0x3f]
    %v58 = vld [vmem:[#allocation2 + $0x30] sm:$0x3f]
    %v59 = vld [vmem:[#allocation2 + $0x38] sm:$0x3f]
    %v60 = vld [vmem:[#allocation2 + $0x40] sm:$0x3f]
    %v61 = vld [vmem:[#allocation2 + $0x48] sm:$0x3f]
    %v62 = vld [vmem:[#allocation2 + $0x50] sm:$0x3f]
    %v63 = vld [vmem:[#allocation2 + $0x58] sm:$0x3f]
    %v64 = vld [vmem:[#allocation2 + $0x60] sm:$0x3f]
    %v65 = vld [vmem:[#allocation2 + $0x68] sm:$0x3f]
    %v66 = vld [vmem:[#allocation2 + $0x70] sm:$0x3f]
    %v67 = vld [vmem:[#allocation2 + $0x78] sm:$0x3f]
    %v68 = vld [vmem:[#allocation2 + $0x80] sm:$0x3f]
    %v69 = vld [vmem:[#allocation2 + $0x88] sm:$0x3f]
    %v70 = vld [vmem:[#allocation2 + $0x90] sm:$0x3f]
    %v71 = vld [vmem:[#allocation2 + $0x98] sm:$0x3f]
    %v72 = vld [vmem:[#allocation2 + $0xa0] sm:$0x3f]
    %v73 = vld [vmem:[#allocation2 + $0xa8] sm:$0x3f]
    %v74 = vld [vmem:[#allocation2 + $0xb0] sm:$0x3f]
    %v75 = vld [vmem:[#allocation2 + $0xb8] sm:$0x3f]
    %v76 = vld [vmem:[#allocation2 + $0xc0] sm:$0x3f]
    %v77 = vld [vmem:[#allocation2 + $0xc8] sm:$0x3f]
    %v78 = vld [vmem:[#allocation2 + $0xd0] sm:$0x3f]
    %v79 = vld [vmem:[#allocation2 + $0xd8] sm:$0x3f]
    %v80 = vld [vmem:[#allocation2 + $0xe0] sm:$0x3f]
    %v81 = vld [vmem:[#allocation2 + $0xe8] sm:$0x3f]
    %v82 = vld [vmem:[#allocation2 + $0xf0] sm:$0x3f]
    %v83 = vld [vmem:[#allocation2 + $0xf8] sm:$0x3f]
    %v84 = vld [vmem:[#allocation2 + $0x100] sm:$0x3f]
    %v85 = vld [vmem:[#allocation2 + $0x108] sm:$0x3f]
    %v86 = vld [vmem:[#allocation2 + $0x110] sm:$0x3f]
    %v87 = vld [vmem:[#allocation2 + $0x118] sm:$0x3f]
    %v88 = vld [vmem:[#allocation2 + $0x120] sm:$0x3f]
    %v89 = vld [vmem:[#allocation2 + $0x128] sm:$0x3f]
    %v90 = vld [vmem:[#allocation2 + $0x130] sm:$0x3f]
    %v91 = vld [vmem:[#allocation2 + $0x138] sm:$0x3f]
    %v92 = vld [vmem:[#allocation2 + $0x140] sm:$0x3f]
    %v93 = vld [vmem:[#allocation2 + $0x148] sm:$0x3f]
    %v94 = vld [vmem:[#allocation2 + $0x150] sm:$0x3f]
    %v95 = vld [vmem:[#allocation2 + $0x158] sm:$0x3f]
    %v96 = vld [vmem:[#allocation2 + $0x160] sm:$0x3f]
    %v97 = vld [vmem:[#allocation2 + $0x168] sm:$0x3f]
    %v98 = vld [vmem:[#allocation2 + $0x170] sm:$0x3f]
    %v99 = vld [vmem:[#allocation2 + $0x178] sm:$0x3f]
    %v100 = vld [vmem:[#allocation2 + $0x180] sm:$0x3f]
    %v101 = vld [vmem:[#allocation2 + $0x188] sm:$0x3f]
    %v102 = vld [vmem:[#allocation2 + $0x190] sm:$0x3f]
    %v103 = vld [vmem:[#allocation2 + $0x198] sm:$0x3f]
    %v104 = vld [vmem:[#allocation2 + $0x1a0] sm:$0x3f]
    %v105 = vld [vmem:[#allocation2 + $0x1a8] sm:$0x3f]
    %v106 = vld [vmem:[#allocation2 + $0x1b0] sm:$0x3f]
    %v107 = vld [vmem:[#allocation2 + $0x1b8] sm:$0x3f]
    %v108 = vld [vmem:[#allocation2 + $0x1c0] sm:$0x3f]
    %v109 = vld [vmem:[#allocation2 + $0x1c8] sm:$0x3f]
    %v110 = vld [vmem:[#allocation2 + $0x1d0] sm:$0x3f]
    %v111 = vld [vmem:[#allocation2 + $0x1d8] sm:$0x3f]
    %v112 = vld [vmem:[#allocation2 + $0x1e0] sm:$0x3f]
    %v113 = vld [vmem:[#allocation2 + $0x1e8] sm:$0x3f]
    %v114 = vld [vmem:[#allocation2 + $0x1f0] sm:$0x3f]
    %v115 = vld [vmem:[#allocation2 + $0x1f8] sm:$0x3f]
    %v116 = vld [vmem:[#allocation2 + $0x200] sm:$0x3f]
    %v117 = vld [vmem:[#allocation2 + $0x208] sm:$0x3f]
    %v118 = vld [vmem:[#allocation2 + $0x210] sm:$0x3f]
    %v119 = vld [vmem:[#allocation2 + $0x218] sm:$0x3f]
    %v120 = vld [vmem:[#allocation2 + $0x220] sm:$0x3f]
    %v121 = vld [vmem:[#allocation2 + $0x228] sm:$0x3f]
    %v122 = vld [vmem:[#allocation2 + $0x230] sm:$0x3f]
    %v123 = vld [vmem:[#allocation2 + $0x238] sm:$0x3f]
    %v124 = vld [vmem:[#allocation2 + $0x240] sm:$0x3f]
    %v125 = vld [vmem:[#allocation2 + $0x248] sm:$0x3f]
    %v126 = vld [vmem:[#allocation2 + $0x250] sm:$0x3f]
    %v127 = vld [vmem:[#allocation2 + $0x258] sm:$0x3f]
    %v128 = vld [vmem:[#allocation2 + $0x260] sm:$0x3f]
    %v129 = vld [vmem:[#allocation2 + $0x268] sm:$0x3f]
    %v130 = vld [vmem:[#allocation2 + $0x270] sm:$0x3f]
    %v131 = vld [vmem:[#allocation2 + $0x278] sm:$0x3f]
    %v132 = vld [vmem:[#allocation2 + $0x280] sm:$0x3f]
    %v133 = vld [vmem:[#allocation2 + $0x288] sm:$0x3f]
    %v134 = vld [vmem:[#allocation2 + $0x290] sm:$0x3f]
    %v135 = vld [vmem:[#allocation2 + $0x298] sm:$0x3f]
    %v136 = vld [vmem:[#allocation2 + $0x2a0] sm:$0x3f]
    %v137 = vld [vmem:[#allocation2 + $0x2a8] sm:$0x3f]
    %v138 = vld [vmem:[#allocation2 + $0x2b0] sm:$0x3f]
    %v139 = vld [vmem:[#allocation2 + $0x2b8] sm:$0x3f]
    %v140 = vld [vmem:[#allocation2 + $0x2c0] sm:$0x3f]
    %v141 = vld [vmem:[#allocation2 + $0x2c8] sm:$0x3f]
    %v142 = vld [vmem:[#allocation2 + $0x2d0] sm:$0x3f]
    %v143 = vld [vmem:[#allocation2 + $0x2d8] sm:$0x3f]
    %v144 = vld [vmem:[#allocation2 + $0x2e0] sm:$0x3f]
    %v145 = vld [vmem:[#allocation2 + $0x2e8] sm:$0x3f]
    %v146 = vld [vmem:[#allocation2 + $0x2f0] sm:$0x3f]
    %v147 = vld [vmem:[#allocation2 + $0x2f8] sm:$0x3f]
    %v148 = vld [vmem:[#allocation2 + $0x300] sm:$0x3f]
    %v149 = vld [vmem:[#allocation2 + $0x308] sm:$0x3f]
    %v150 = vld [vmem:[#allocation2 + $0x310] sm:$0x3f]
    %v151 = vld [vmem:[#allocation2 + $0x318] sm:$0x3f]
    %v152 = vld [vmem:[#allocation2 + $0x320] sm:$0x3f]
    %v153 = vld [vmem:[#allocation2 + $0x328] sm:$0x3f]
    %v154 = vld [vmem:[#allocation2 + $0x330] sm:$0x3f]
    %v155 = vld [vmem:[#allocation2 + $0x338] sm:$0x3f]
    %v156 = vld [vmem:[#allocation2 + $0x340] sm:$0x3f]
    %v157 = vld [vmem:[#allocation2 + $0x348] sm:$0x3f]
    %v158 = vld [vmem:[#allocation2 + $0x350] sm:$0x3f]
    %v159 = vld [vmem:[#allocation2 + $0x358] sm:$0x3f]
    %v160 = vld [vmem:[#allocation2 + $0x360] sm:$0x3f]
    %v161 = vld [vmem:[#allocation2 + $0x368] sm:$0x3f]
    %v162 = vld [vmem:[#allocation2 + $0x370] sm:$0x3f]
    %v163 = vld [vmem:[#allocation2 + $0x378] sm:$0x3f]
    %v164 = vld [vmem:[#allocation2 + $0x380] sm:$0x3f]
    %v165 = vld [vmem:[#allocation2 + $0x388] sm:$0x3f]
    %v166 = vld [vmem:[#allocation2 + $0x390] sm:$0x3f]
    %v167 = vld [vmem:[#allocation2 + $0x398] sm:$0x3f]
    %v168 = vld [vmem:[#allocation2 + $0x3a0] sm:$0x3f]
    %v169 = vld [vmem:[#allocation2 + $0x3a8] sm:$0x3f]
    %v170 = vld [vmem:[#allocation2 + $0x3b0] sm:$0x3f]
    %v171 = vld [vmem:[#allocation2 + $0x3b8] sm:$0x3f]
    %v172 = vld [vmem:[#allocation2 + $0x3c0] sm:$0x3f]
    %v173 = vld [vmem:[#allocation2 + $0x3c8] sm:$0x3f]
    %v174 = vld [vmem:[#allocation2 + $0x3d0] sm:$0x3f]
    %v175 = vld [vmem:[#allocation2 + $0x3d8] sm:$0x3f]
    %v176 = vld [vmem:[#allocation2 + $0x3e0] sm:$0x3f]
    %v177 = vpack.c.bf16 %v52, %v52
    %v178 = vpack.c.bf16 %v53, %v53
    %v179 = vpack.c.bf16 %v54, %v54
    %v180 = vpack.c.bf16 %v55, %v55
    %v181 = vpack.c.bf16 %v56, %v56
    %v182 = vpack.c.bf16 %v57, %v57
    %v183 = vpack.c.bf16 %v58, %v58
    %v184 = vpack.c.bf16 %v59, %v59
    %v185 = vpack.c.bf16 %v60, %v60
    %v186 = vpack.c.bf16 %v61, %v61
    %v187 = vpack.c.bf16 %v62, %v62
    %v188 = vpack.c.bf16 %v63, %v63
    %v189 = vpack.c.bf16 %v64, %v64
    %v190 = vpack.c.bf16 %v65, %v65
    %v191 = vpack.c.bf16 %v66, %v66
    %v192 = vpack.c.bf16 %v67, %v67
    %v193 = vpack.c.bf16 %v68, %v68
    %v194 = vpack.c.bf16 %v69, %v69
    %v195 = vpack.c.bf16 %v70, %v70
    %v196 = vpack.c.bf16 %v71, %v71
    %v197 = vpack.c.bf16 %v72, %v72
    %v198 = vpack.c.bf16 %v73, %v73
    %v199 = vpack.c.bf16 %v74, %v74
    %v200 = vpack.c.bf16 %v75, %v75
    %v201 = vpack.c.bf16 %v76, %v76
    %v202 = vpack.c.bf16 %v77, %v77
    %v203 = vpack.c.bf16 %v78, %v78
    %v204 = vpack.c.bf16 %v79, %v79
    %v205 = vpack.c.bf16 %v80, %v80
    %v206 = vpack.c.bf16 %v81, %v81
    %v207 = vpack.c.bf16 %v82, %v82
    %v208 = vpack.c.bf16 %v83, %v83
    %v209 = vpack.c.bf16 %v84, %v84
    %v210 = vpack.c.bf16 %v85, %v85
    %v211 = vpack.c.bf16 %v86, %v86
    %v212 = vpack.c.bf16 %v87, %v87
    %v213 = vpack.c.bf16 %v88, %v88
    %v214 = vpack.c.bf16 %v89, %v89
    %v215 = vpack.c.bf16 %v90, %v90
    %v216 = vpack.c.bf16 %v91, %v91
    %v217 = vpack.c.bf16 %v92, %v92
    %v218 = vpack.c.bf16 %v93, %v93
    %v219 = vpack.c.bf16 %v94, %v94
    %v220 = vpack.c.bf16 %v95, %v95
    %v221 = vpack.c.bf16 %v96, %v96
    %v222 = vpack.c.bf16 %v97, %v97
    %v223 = vpack.c.bf16 %v98, %v98
    %v224 = vpack.c.bf16 %v99, %v99
    %v225 = vpack.c.bf16 %v100, %v100
    %v226 = vpack.c.bf16 %v101, %v101
    %v227 = vpack.c.bf16 %v102, %v102
    %v228 = vpack.c.bf16 %v103, %v103
    %v229 = vpack.c.bf16 %v104, %v104
    %v230 = vpack.c.bf16 %v105, %v105
    %v231 = vpack.c.bf16 %v106, %v106
    %v232 = vpack.c.bf16 %v107, %v107
    %v233 = vpack.c.bf16 %v108, %v108
    %v234 = vpack.c.bf16 %v109, %v109
    %v235 = vpack.c.bf16 %v110, %v110
    %v236 = vpack.c.bf16 %v111, %v111
    %v237 = vpack.c.bf16 %v112, %v112
    %v238 = vpack.c.bf16 %v113, %v113
    %v239 = vpack.c.bf16 %v114, %v114
    %v240 = vpack.c.bf16 %v115, %v115
    %v241 = vpack.c.bf16 %v116, %v116
    %v242 = vpack.c.bf16 %v117, %v117
    %v243 = vpack.c.bf16 %v118, %v118
    %v244 = vpack.c.bf16 %v119, %v119
    %v245 = vpack.c.bf16 %v120, %v120
    %v246 = vpack.c.bf16 %v121, %v121
    %v247 = vpack.c.bf16 %v122, %v122
    %v248 = vpack.c.bf16 %v123, %v123
    %v249 = vpack.c.bf16 %v124, %v124
    %v250 = vpack.c.bf16 %v125, %v125
    %v251 = vpack.c.bf16 %v126, %v126
    %v252 = vpack.c.bf16 %v127, %v127
    %v253 = vpack.c.bf16 %v128, %v128
    %v254 = vpack.c.bf16 %v129, %v129
    %v255 = vpack.c.bf16 %v130, %v130
    %v256 = vpack.c.bf16 %v131, %v131
    %v257 = vpack.c.bf16 %v132, %v132
    %v258 = vpack.c.bf16 %v133, %v133
    %v259 = vpack.c.bf16 %v134, %v134
    %v260 = vpack.c.bf16 %v135, %v135
    %v261 = vpack.c.bf16 %v136, %v136
    %v262 = vpack.c.bf16 %v137, %v137
    %v263 = vpack.c.bf16 %v138, %v138
    %v264 = vpack.c.bf16 %v139, %v139
    %v265 = vpack.c.bf16 %v140, %v140
    %v266 = vpack.c.bf16 %v141, %v141
    %v267 = vpack.c.bf16 %v142, %v142
    %v268 = vpack.c.bf16 %v143, %v143
    %v269 = vpack.c.bf16 %v144, %v144
    %v270 = vpack.c.bf16 %v145, %v145
    %v271 = vpack.c.bf16 %v146, %v146
    %v272 = vpack.c.bf16 %v147, %v147
    %v273 = vpack.c.bf16 %v148, %v148
    %v274 = vpack.c.bf16 %v149, %v149
    %v275 = vpack.c.bf16 %v150, %v150
    %v276 = vpack.c.bf16 %v151, %v151
    %v277 = vpack.c.bf16 %v152, %v152
    %v278 = vpack.c.bf16 %v153, %v153
    %v279 = vpack.c.bf16 %v154, %v154
    %v280 = vpack.c.bf16 %v155, %v155
    %v281 = vpack.c.bf16 %v156, %v156
    %v282 = vpack.c.bf16 %v157, %v157
    %v283 = vpack.c.bf16 %v158, %v158
    %v284 = vpack.c.bf16 %v159, %v159
    %v285 = vpack.c.bf16 %v160, %v160
    %v286 = vpack.c.bf16 %v161, %v161
    %v287 = vpack.c.bf16 %v162, %v162
    %v288 = vpack.c.bf16 %v163, %v163
    %v289 = vpack.c.bf16 %v164, %v164
    %v290 = vpack.c.bf16 %v165, %v165
    %v291 = vpack.c.bf16 %v166, %v166
    %v292 = vpack.c.bf16 %v167, %v167
    %v293 = vpack.c.bf16 %v168, %v168
    %v294 = vpack.c.bf16 %v169, %v169
    %v295 = vpack.c.bf16 %v170, %v170
    %v296 = vpack.c.bf16 %v171, %v171
    %v297 = vpack.c.bf16 %v172, %v172
    %v298 = vpack.c.bf16 %v173, %v173
    %v299 = vpack.c.bf16 %v174, %v174
    %v300 = vpack.c.bf16 %v175, %v175
    %v301 = vpack.c.bf16 %v176, %v176
    %v302 = vld [vmem:[#allocation5] sm:$0xff]
    %v303 = vld [vmem:[#allocation5 + $0x8] sm:$0xff]
    %v304 = vld [vmem:[#allocation5 + $0x10] sm:$0xff]
    %v305 = vld [vmem:[#allocation5 + $0x18] sm:$0xff]
    %v306 = vld [vmem:[#allocation5 + $0x20] sm:$0xff]
    %v307 = vld [vmem:[#allocation5 + $0x28] sm:$0xff]
    %v308 = vld [vmem:[#allocation5 + $0x30] sm:$0xff]
    %v309 = vld [vmem:[#allocation5 + $0x38] sm:$0xff]
    %v310 = vld [vmem:[#allocation5 + $0x40] sm:$0xff]
    %v311 = vld [vmem:[#allocation5 + $0x48] sm:$0xff]
    %v312 = vld [vmem:[#allocation5 + $0x50] sm:$0xff]
    %v313 = vld [vmem:[#allocation5 + $0x58] sm:$0xff]
    %v314 = vld [vmem:[#allocation5 + $0x60] sm:$0xff]
    %v315 = vld [vmem:[#allocation5 + $0x68] sm:$0xff]
    %v316 = vld [vmem:[#allocation5 + $0x70] sm:$0xff]
    %v317 = vld [vmem:[#allocation5 + $0x78] sm:$0xff]
    %v318 = vld [vmem:[#allocation5 + $0x80] sm:$0xff]
    %v319 = vld [vmem:[#allocation5 + $0x88] sm:$0xff]
    %v320 = vld [vmem:[#allocation5 + $0x90] sm:$0xff]
    %v321 = vld [vmem:[#allocation5 + $0x98] sm:$0xff]
    %v322 = vld [vmem:[#allocation5 + $0xa0] sm:$0xff]
    %v323 = vld [vmem:[#allocation5 + $0xa8] sm:$0xff]
    %v324 = vld [vmem:[#allocation5 + $0xb0] sm:$0xff]
    %v325 = vld [vmem:[#allocation5 + $0xb8] sm:$0xff]
    %v326 = vld [vmem:[#allocation5 + $0xc0] sm:$0xff]
    %v327 = vld [vmem:[#allocation5 + $0xc8] sm:$0xff]
    %v328 = vld [vmem:[#allocation5 + $0xd0] sm:$0xff]
    %v329 = vld [vmem:[#allocation5 + $0xd8] sm:$0xff]
    %v330 = vld [vmem:[#allocation5 + $0xe0] sm:$0xff]
    %v331 = vld [vmem:[#allocation5 + $0xe8] sm:$0xff]
    %v332 = vld [vmem:[#allocation5 + $0xf0] sm:$0xff]
    %v333 = vld [vmem:[#allocation5 + $0xf8] sm:$0xff]
    %v334 = vld [vmem:[#allocation5 + $0x100] sm:$0xff]
    %v335 = vld [vmem:[#allocation5 + $0x108] sm:$0xff]
    %v336 = vld [vmem:[#allocation5 + $0x110] sm:$0xff]
    %v337 = vld [vmem:[#allocation5 + $0x118] sm:$0xff]
    %v338 = vld [vmem:[#allocation5 + $0x120] sm:$0xff]
    %v339 = vld [vmem:[#allocation5 + $0x128] sm:$0xff]
    %v340 = vld [vmem:[#allocation5 + $0x130] sm:$0xff]
    %v341 = vld [vmem:[#allocation5 + $0x138] sm:$0xff]
    %v342 = vld [vmem:[#allocation5 + $0x140] sm:$0xff]
    %v343 = vld [vmem:[#allocation5 + $0x148] sm:$0xff]
    %v344 = vld [vmem:[#allocation5 + $0x150] sm:$0xff]
    %v345 = vld [vmem:[#allocation5 + $0x158] sm:$0xff]
    %v346 = vld [vmem:[#allocation5 + $0x160] sm:$0xff]
    %v347 = vld [vmem:[#allocation5 + $0x168] sm:$0xff]
    %v348 = vld [vmem:[#allocation5 + $0x170] sm:$0xff]
    %v349 = vld [vmem:[#allocation5 + $0x178] sm:$0xff]
    %v350 = vld [vmem:[#allocation5 + $0x180] sm:$0xff]
    %v351 = vld [vmem:[#allocation5 + $0x188] sm:$0xff]
    %v352 = vld [vmem:[#allocation5 + $0x190] sm:$0xff]
    %v353 = vld [vmem:[#allocation5 + $0x198] sm:$0xff]
    %v354 = vld [vmem:[#allocation5 + $0x1a0] sm:$0xff]
    %v355 = vld [vmem:[#allocation5 + $0x1a8] sm:$0xff]
    %v356 = vld [vmem:[#allocation5 + $0x1b0] sm:$0xff]
    %v357 = vld [vmem:[#allocation5 + $0x1b8] sm:$0xff]
    %v358 = vld [vmem:[#allocation5 + $0x1c0] sm:$0xff]
    %v359 = vld [vmem:[#allocation5 + $0x1c8] sm:$0xff]
    %v360 = vld [vmem:[#allocation5 + $0x1d0] sm:$0xff]
    %v361 = vld [vmem:[#allocation5 + $0x1d8] sm:$0xff]
    %v362 = vld [vmem:[#allocation5 + $0x1e0] sm:$0xff]
    %v363 = vld [vmem:[#allocation5 + $0x1e8] sm:$0xff]
    %v364 = vld [vmem:[#allocation5 + $0x1f0] sm:$0xf]
    %v365 = vld [vmem:[%s1] sm:$0x7]
    %v366 = vld [vmem:[%s3] sm:$0xf]
    %367 = vmatprep.subr.bf16.mxu0 0
    %368 = vmatpush1.bf16.xpose.msra.mxu0 0
    %369 = vmatprep.subr.bf16.mxu0 0
    %370 = vmatpush1.bf16.xpose.msra.mxu0 0
    %371 = vmatprep.subr.bf16.mxu0 0
    %372 = vmatpush1.bf16.xpose.msra.mxu0 0
    %373 = vmatprep.subr.bf16.mxu0 0
    %374 = vmatpush1.bf16.xpose.msra.mxu0 0
    %375 = vmatprep.subr.bf16.mxu0 0
    %376 = vmatpush1.bf16.xpose.msra.mxu0 0
    %377 = vmatprep.subr.bf16.mxu0 0
    %378 = vmatpush1.bf16.xpose.msra.mxu0 0
    %379 = vmatprep.subr.bf16.mxu0 0
    %380 = vmatpush1.bf16.xpose.msra.mxu0 0
    %381 = vmatprep.subr.bf16.mxu0 0
    %382 = vmatpush1.bf16.xpose.msra.mxu0 %v366
    %383 = vmatprep.subr.bf16.mxu0 0
    %384 = vmatpush2.bf16.xpose.msra.mxu0 0
    %385 = vmatprep.subr.bf16.mxu0 0
    %386 = vmatpush2.bf16.xpose.msra.mxu0 0
    %387 = vmatprep.subr.bf16.mxu0 0
    %388 = vmatpush2.bf16.xpose.msra.mxu0 0
    %389 = vmatprep.subr.bf16.mxu0 0
    %390 = vmatpush2.bf16.xpose.msra.mxu0 0
    %391 = vmatprep.subr.bf16.mxu0 0
    %392 = vmatpush2.bf16.xpose.msra.mxu0 0
    %393 = vmatprep.subr.bf16.mxu0 0
    %394 = vmatpush2.bf16.xpose.msra.mxu0 0
    %395 = vmatprep.subr.bf16.mxu0 0
    %396 = vmatpush2.bf16.xpose.msra.mxu0 0
    %397 = vmatprep.subr.bf16.mxu0 0
    %398 = vmatpush2.bf16.xpose.msra.mxu0 0
    %399 = vmatprep.mubr.bf16.mxu0 0
    %400 = vmatmul.mubr.bf16.gmra.mxu0 %v365
    %v401 = vpop.f32.mrf.mxu0
    %v402 = vadd.f32 0.0, %v401
    %v403 = vpop.f32.mrf.mxu0
    %v404 = vpop.f32.mrf.mxu0
    %v405 = vpop.f32.mrf.mxu0
    %406 = vdwg.mxu0
    %v470 = vunpack.c.l.b16 %v302
    %v471 = vunpack.c.h.b16 %v302
    %v472 = vunpack.c.l.b16 %v303
    %v473 = vunpack.c.h.b16 %v303
    %v474 = vunpack.c.l.b16 %v304
    %v475 = vunpack.c.h.b16 %v304
    %v476 = vunpack.c.l.b16 %v305
    %v477 = vunpack.c.h.b16 %v305
    %v478 = vunpack.c.l.b16 %v306
    %v479 = vunpack.c.h.b16 %v306
    %v480 = vunpack.c.l.b16 %v307
    %v481 = vunpack.c.h.b16 %v307
    %v482 = vunpack.c.l.b16 %v308
    %v483 = vunpack.c.h.b16 %v308
    %v484 = vunpack.c.l.b16 %v309
    %v485 = vunpack.c.h.b16 %v309
    %v486 = vunpack.c.l.b16 %v310
    %v487 = vunpack.c.h.b16 %v310
    %v488 = vunpack.c.l.b16 %v311
    %v489 = vunpack.c.h.b16 %v311
    %v490 = vunpack.c.l.b16 %v312
    %v491 = vunpack.c.h.b16 %v312
    %v492 = vunpack.c.l.b16 %v313
    %v493 = vunpack.c.h.b16 %v313
    %v494 = vunpack.c.l.b16 %v314
    %v495 = vunpack.c.h.b16 %v314
    %v496 = vunpack.c.l.b16 %v315
    %v497 = vunpack.c.h.b16 %v315
    %v498 = vunpack.c.l.b16 %v316
    %v499 = vunpack.c.h.b16 %v316
    %v500 = vunpack.c.l.b16 %v317
    %v501 = vunpack.c.h.b16 %v317
    %v502 = vunpack.c.l.b16 %v318
    %v503 = vunpack.c.h.b16 %v318
    %v504 = vunpack.c.l.b16 %v319
    %v505 = vunpack.c.h.b16 %v319
    %v506 = vunpack.c.l.b16 %v320
    %v507 = vunpack.c.h.b16 %v320
    %v508 = vunpack.c.l.b16 %v321
    %v509 = vunpack.c.h.b16 %v321
    %v510 = vunpack.c.l.b16 %v322
    %v511 = vunpack.c.h.b16 %v322
    %v512 = vunpack.c.l.b16 %v323
    %v513 = vunpack.c.h.b16 %v323
    %v514 = vunpack.c.l.b16 %v324
    %v515 = vunpack.c.h.b16 %v324
    %v516 = vunpack.c.l.b16 %v325
    %v517 = vunpack.c.h.b16 %v325
    %v518 = vunpack.c.l.b16 %v326
    %v519 = vunpack.c.h.b16 %v326
    %v520 = vunpack.c.l.b16 %v327
    %v521 = vunpack.c.h.b16 %v327
    %v522 = vunpack.c.l.b16 %v328
    %v523 = vunpack.c.h.b16 %v328
    %v524 = vunpack.c.l.b16 %v329
    %v525 = vunpack.c.h.b16 %v329
    %v526 = vunpack.c.l.b16 %v330
    %v527 = vunpack.c.h.b16 %v330
    %v528 = vunpack.c.l.b16 %v331
    %v529 = vunpack.c.h.b16 %v331
    %v530 = vunpack.c.l.b16 %v332
    %v531 = vunpack.c.h.b16 %v332
    %v532 = vunpack.c.l.b16 %v333
    %v533 = vunpack.c.h.b16 %v333
    %v534 = vunpack.c.l.b16 %v334
    %v535 = vunpack.c.h.b16 %v334
    %v536 = vunpack.c.l.b16 %v335
    %v537 = vunpack.c.h.b16 %v335
    %v538 = vunpack.c.l.b16 %v336
    %v539 = vunpack.c.h.b16 %v336
    %v540 = vunpack.c.l.b16 %v337
    %v541 = vunpack.c.h.b16 %v337
    %v542 = vunpack.c.l.b16 %v338
    %v543 = vunpack.c.h.b16 %v338
    %v544 = vunpack.c.l.b16 %v339
    %v545 = vunpack.c.h.b16 %v339
    %v546 = vunpack.c.l.b16 %v340
    %v547 = vunpack.c.h.b16 %v340
    %v548 = vunpack.c.l.b16 %v341
    %v549 = vunpack.c.h.b16 %v341
    %v550 = vunpack.c.l.b16 %v342
    %v551 = vunpack.c.h.b16 %v342
    %v552 = vunpack.c.l.b16 %v343
    %v553 = vunpack.c.h.b16 %v343
    %v554 = vunpack.c.l.b16 %v344
    %v555 = vunpack.c.h.b16 %v344
    %v556 = vunpack.c.l.b16 %v345
    %v557 = vunpack.c.h.b16 %v345
    %v558 = vunpack.c.l.b16 %v346
    %v559 = vunpack.c.h.b16 %v346
    %v560 = vunpack.c.l.b16 %v347
    %v561 = vunpack.c.h.b16 %v347
    %v562 = vunpack.c.l.b16 %v348
    %v563 = vunpack.c.h.b16 %v348
    %v564 = vunpack.c.l.b16 %v349
    %v565 = vunpack.c.h.b16 %v349
    %v566 = vunpack.c.l.b16 %v350
    %v567 = vunpack.c.h.b16 %v350
    %v568 = vunpack.c.l.b16 %v351
    %v569 = vunpack.c.h.b16 %v351
    %v570 = vunpack.c.l.b16 %v352
    %v571 = vunpack.c.h.b16 %v352
    %v572 = vunpack.c.l.b16 %v353
    %v573 = vunpack.c.h.b16 %v353
    %v574 = vunpack.c.l.b16 %v354
    %v575 = vunpack.c.h.b16 %v354
    %v576 = vunpack.c.l.b16 %v355
    %v577 = vunpack.c.h.b16 %v355
    %v578 = vunpack.c.l.b16 %v356
    %v579 = vunpack.c.h.b16 %v356
    %v580 = vunpack.c.l.b16 %v357
    %v581 = vunpack.c.h.b16 %v357
    %v582 = vunpack.c.l.b16 %v358
    %v583 = vunpack.c.h.b16 %v358
    %v584 = vunpack.c.l.b16 %v359
    %v585 = vunpack.c.h.b16 %v359
    %v586 = vunpack.c.l.b16 %v360
    %v587 = vunpack.c.h.b16 %v360
    %v588 = vunpack.c.l.b16 %v361
    %v589 = vunpack.c.h.b16 %v361
    %v590 = vunpack.c.l.b16 %v362
    %v591 = vunpack.c.h.b16 %v362
    %v592 = vunpack.c.l.b16 %v363
    %v593 = vunpack.c.h.b16 %v363
    %v594 = vunpack.c.l.b16 %v364
    %v595 = vpack.c.b16 %v470, %v470
    %v596 = vpack.c.b16 %v471, %v471
    %v597 = vpack.c.b16 %v472, %v472
    %v598 = vpack.c.b16 %v473, %v473
    %v599 = vpack.c.b16 %v474, %v474
    %v600 = vpack.c.b16 %v475, %v475
    %v601 = vpack.c.b16 %v476, %v476
    %v602 = vpack.c.b16 %v477, %v477
    %v603 = vpack.c.b16 %v478, %v478
    %v604 = vpack.c.b16 %v479, %v479
    %v605 = vpack.c.b16 %v480, %v480
    %v606 = vpack.c.b16 %v481, %v481
    %v607 = vpack.c.b16 %v482, %v482
    %v608 = vpack.c.b16 %v483, %v483
    %v609 = vpack.c.b16 %v484, %v484
    %v610 = vpack.c.b16 %v485, %v485
    %v611 = vpack.c.b16 %v486, %v486
    %v612 = vpack.c.b16 %v487, %v487
    %v613 = vpack.c.b16 %v488, %v488
    %v614 = vpack.c.b16 %v489, %v489
    %v615 = vpack.c.b16 %v490, %v490
    %v616 = vpack.c.b16 %v491, %v491
    %v617 = vpack.c.b16 %v492, %v492
    %v618 = vpack.c.b16 %v493, %v493
    %v619 = vpack.c.b16 %v494, %v494
    %v620 = vpack.c.b16 %v495, %v495
    %v621 = vpack.c.b16 %v496, %v496
    %v622 = vpack.c.b16 %v497, %v497
    %v623 = vpack.c.b16 %v498, %v498
    %v624 = vpack.c.b16 %v499, %v499
    %v625 = vpack.c.b16 %v500, %v500
    %v626 = vpack.c.b16 %v501, %v501
    %v627 = vpack.c.b16 %v502, %v502
    %v628 = vpack.c.b16 %v503, %v503
    %v629 = vpack.c.b16 %v504, %v504
    %v630 = vpack.c.b16 %v505, %v505
    %v631 = vpack.c.b16 %v506, %v506
    %v632 = vpack.c.b16 %v507, %v507
    %v633 = vpack.c.b16 %v508, %v508
    %v634 = vpack.c.b16 %v509, %v509
    %v635 = vpack.c.b16 %v510, %v510
    %v636 = vpack.c.b16 %v511, %v511
    %v637 = vpack.c.b16 %v512, %v512
    %v638 = vpack.c.b16 %v513, %v513
    %v639 = vpack.c.b16 %v514, %v514
    %v640 = vpack.c.b16 %v515, %v515
    %v641 = vpack.c.b16 %v516, %v516
    %v642 = vpack.c.b16 %v517, %v517
    %v643 = vpack.c.b16 %v518, %v518
    %v644 = vpack.c.b16 %v519, %v519
    %v645 = vpack.c.b16 %v520, %v520
    %v646 = vpack.c.b16 %v521, %v521
    %v647 = vpack.c.b16 %v522, %v522
    %v648 = vpack.c.b16 %v523, %v523
    %v649 = vpack.c.b16 %v524, %v524
    %v650 = vpack.c.b16 %v525, %v525
    %v651 = vpack.c.b16 %v526, %v526
    %v652 = vpack.c.b16 %v527, %v527
    %v653 = vpack.c.b16 %v528, %v528
    %v654 = vpack.c.b16 %v529, %v529
    %v655 = vpack.c.b16 %v530, %v530
    %v656 = vpack.c.b16 %v531, %v531
    %v657 = vpack.c.b16 %v532, %v532
    %v658 = vpack.c.b16 %v533, %v533
    %v659 = vpack.c.b16 %v534, %v534
    %v660 = vpack.c.b16 %v535, %v535
    %v661 = vpack.c.b16 %v536, %v536
    %v662 = vpack.c.b16 %v537, %v537
    %v663 = vpack.c.b16 %v538, %v538
    %v664 = vpack.c.b16 %v539, %v539
    %v665 = vpack.c.b16 %v540, %v540
    %v666 = vpack.c.b16 %v541, %v541
    %v667 = vpack.c.b16 %v542, %v542
    %v668 = vpack.c.b16 %v543, %v543
    %v669 = vpack.c.b16 %v544, %v544
    %v670 = vpack.c.b16 %v545, %v545
    %v671 = vpack.c.b16 %v546, %v546
    %v672 = vpack.c.b16 %v547, %v547
    %v673 = vpack.c.b16 %v548, %v548
    %v674 = vpack.c.b16 %v549, %v549
    %v675 = vpack.c.b16 %v550, %v550
    %v676 = vpack.c.b16 %v551, %v551
    %v677 = vpack.c.b16 %v552, %v552
    %v678 = vpack.c.b16 %v553, %v553
    %v679 = vpack.c.b16 %v554, %v554
    %v680 = vpack.c.b16 %v555, %v555
    %v681 = vpack.c.b16 %v556, %v556
    %v682 = vpack.c.b16 %v557, %v557
    %v683 = vpack.c.b16 %v558, %v558
    %v684 = vpack.c.b16 %v559, %v559
    %v685 = vpack.c.b16 %v560, %v560
    %v686 = vpack.c.b16 %v561, %v561
    %v687 = vpack.c.b16 %v562, %v562
    %v688 = vpack.c.b16 %v563, %v563
    %v689 = vpack.c.b16 %v564, %v564
    %v690 = vpack.c.b16 %v565, %v565
    %v691 = vpack.c.b16 %v566, %v566
    %v692 = vpack.c.b16 %v567, %v567
    %v693 = vpack.c.b16 %v568, %v568
    %v694 = vpack.c.b16 %v569, %v569
    %v695 = vpack.c.b16 %v570, %v570
    %v696 = vpack.c.b16 %v571, %v571
    %v697 = vpack.c.b16 %v572, %v572
    %v698 = vpack.c.b16 %v573, %v573
    %v699 = vpack.c.b16 %v574, %v574
    %v700 = vpack.c.b16 %v575, %v575
    %v701 = vpack.c.b16 %v576, %v576
    %v702 = vpack.c.b16 %v577, %v577
    %v703 = vpack.c.b16 %v578, %v578
    %v704 = vpack.c.b16 %v579, %v579
    %v705 = vpack.c.b16 %v580, %v580
    %v706 = vpack.c.b16 %v581, %v581
    %v707 = vpack.c.b16 %v582, %v582
    %v708 = vpack.c.b16 %v583, %v583
    %v709 = vpack.c.b16 %v584, %v584
    %v710 = vpack.c.b16 %v585, %v585
    %v711 = vpack.c.b16 %v586, %v586
    %v712 = vpack.c.b16 %v587, %v587
    %v713 = vpack.c.b16 %v588, %v588
    %v714 = vpack.c.b16 %v589, %v589
    %v715 = vpack.c.b16 %v590, %v590
    %v716 = vpack.c.b16 %v591, %v591
    %v717 = vpack.c.b16 %v592, %v592
    %v718 = vpack.c.b16 %v593, %v593
    %v719 = vpack.c.b16 %v594, %v594
    %845 = vmatprep.subr.bf16.mxu0 0
    %846 = vmatpush1.bf16.xpose.msra.mxu0 0
    %847 = vmatprep.subr.bf16.mxu0 0
    %848 = vmatpush1.bf16.xpose.msra.mxu0 0
    %849 = vmatprep.subr.bf16.mxu0 0
    %850 = vmatpush1.bf16.xpose.msra.mxu0 0
    %851 = vmatprep.subr.bf16.mxu0 0
    %852 = vmatpush1.bf16.xpose.msra.mxu0 0
    %853 = vmatprep.subr.bf16.mxu0 0
    %854 = vmatpush1.bf16.xpose.msra.mxu0 0
    %855 = vmatprep.subr.bf16.mxu0 0
    %856 = vmatpush1.bf16.xpose.msra.mxu0 0
    %857 = vmatprep.subr.bf16.mxu0 0
    %858 = vmatpush1.bf16.xpose.msra.mxu0 0
    %859 = vmatprep.subr.bf16.mxu0 %v596
    %860 = vmatpush1.bf16.xpose.msra.mxu0 %v595
    %861 = vmatprep.subr.bf16.mxu0 0
    %862 = vmatpush2.bf16.xpose.msra.mxu0 0
    %863 = vmatprep.subr.bf16.mxu0 0
    %864 = vmatpush2.bf16.xpose.msra.mxu0 0
    %865 = vmatprep.subr.bf16.mxu0 0
    %866 = vmatpush2.bf16.xpose.msra.mxu0 0
    %867 = vmatprep.subr.bf16.mxu0 0
    %868 = vmatpush2.bf16.xpose.msra.mxu0 0
    %869 = vmatprep.subr.bf16.mxu0 0
    %870 = vmatpush2.bf16.xpose.msra.mxu0 0
    %871 = vmatprep.subr.bf16.mxu0 0
    %872 = vmatpush2.bf16.xpose.msra.mxu0 0
    %873 = vmatprep.subr.bf16.mxu0 0
    %874 = vmatpush2.bf16.xpose.msra.mxu0 0
    %875 = vmatprep.subr.bf16.mxu0 0
    %876 = vmatpush2.bf16.xpose.msra.mxu0 0
    %877 = vmatprep.mubr.bf16.mxu0 %v178
    %878 = vmatmul.mubr.bf16.gmra.mxu0 %v177
    %v879 = vpop.f32.mrf.mxu0
    %v880 = vadd.f32 %v402, %v879
    %v881 = vpop.f32.mrf.mxu0
    %v882 = vpop.f32.mrf.mxu0
    %v883 = vpop.f32.mrf.mxu0
    %884 = vdwg.mxu0
    %885 = vmatprep.subr.bf16.mxu0 0
    %886 = vmatpush1.bf16.xpose.msra.mxu0 0
    %887 = vmatprep.subr.bf16.mxu0 0
    %888 = vmatpush1.bf16.xpose.msra.mxu0 0
    %889 = vmatprep.subr.bf16.mxu0 0
    %890 = vmatpush1.bf16.xpose.msra.mxu0 0
    %891 = vmatprep.subr.bf16.mxu0 0
    %892 = vmatpush1.bf16.xpose.msra.mxu0 0
    %893 = vmatprep.subr.bf16.mxu0 0
    %894 = vmatpush1.bf16.xpose.msra.mxu0 0
    %895 = vmatprep.subr.bf16.mxu0 0
    %896 = vmatpush1.bf16.xpose.msra.mxu0 0
    %897 = vmatprep.subr.bf16.mxu0 0
    %898 = vmatpush1.bf16.xpose.msra.mxu0 0
    %899 = vmatprep.subr.bf16.mxu0 %v598
    %900 = vmatpush1.bf16.xpose.msra.mxu0 %v597
    %901 = vmatprep.subr.bf16.mxu0 0
    %902 = vmatpush2.bf16.xpose.msra.mxu0 0
    %903 = vmatprep.subr.bf16.mxu0 0
    %904 = vmatpush2.bf16.xpose.msra.mxu0 0
    %905 = vmatprep.subr.bf16.mxu0 0
    %906 = vmatpush2.bf16.xpose.msra.mxu0 0
    %907 = vmatprep.subr.bf16.mxu0 0
    %908 = vmatpush2.bf16.xpose.msra.mxu0 0
    %909 = vmatprep.subr.bf16.mxu0 0
    %910 = vmatpush2.bf16.xpose.msra.mxu0 0
    %911 = vmatprep.subr.bf16.mxu0 0
    %912 = vmatpush2.bf16.xpose.msra.mxu0 0
    %913 = vmatprep.subr.bf16.mxu0 0
    %914 = vmatpush2.bf16.xpose.msra.mxu0 0
    %915 = vmatprep.subr.bf16.mxu0 0
    %916 = vmatpush2.bf16.xpose.msra.mxu0 0
    %917 = vmatprep.mubr.bf16.mxu0 %v180
    %918 = vmatmul.mubr.bf16.gmra.mxu0 %v179
    %v919 = vpop.f32.mrf.mxu0
    %v920 = vadd.f32 %v880, %v919
    %v921 = vpop.f32.mrf.mxu0
    %v922 = vpop.f32.mrf.mxu0
    %v923 = vpop.f32.mrf.mxu0
    %924 = vdwg.mxu0
    %925 = vmatprep.subr.bf16.mxu0 0
    %926 = vmatpush1.bf16.xpose.msra.mxu0 0
    %927 = vmatprep.subr.bf16.mxu0 0
    %928 = vmatpush1.bf16.xpose.msra.mxu0 0
    %929 = vmatprep.subr.bf16.mxu0 0
    %930 = vmatpush1.bf16.xpose.msra.mxu0 0
    %931 = vmatprep.subr.bf16.mxu0 0
    %932 = vmatpush1.bf16.xpose.msra.mxu0 0
    %933 = vmatprep.subr.bf16.mxu0 0
    %934 = vmatpush1.bf16.xpose.msra.mxu0 0
    %935 = vmatprep.subr.bf16.mxu0 0
    %936 = vmatpush1.bf16.xpose.msra.mxu0 0
    %937 = vmatprep.subr.bf16.mxu0 0
    %938 = vmatpush1.bf16.xpose.msra.mxu0 0
    %939 = vmatprep.subr.bf16.mxu0 %v600
    %940 = vmatpush1.bf16.xpose.msra.mxu0 %v599
    %941 = vmatprep.subr.bf16.mxu0 0
    %942 = vmatpush2.bf16.xpose.msra.mxu0 0
    %943 = vmatprep.subr.bf16.mxu0 0
    %944 = vmatpush2.bf16.xpose.msra.mxu0 0
    %945 = vmatprep.subr.bf16.mxu0 0
    %946 = vmatpush2.bf16.xpose.msra.mxu0 0
    %947 = vmatprep.subr.bf16.mxu0 0
    %948 = vmatpush2.bf16.xpose.msra.mxu0 0
    %949 = vmatprep.subr.bf16.mxu0 0
    %950 = vmatpush2.bf16.xpose.msra.mxu0 0
    %951 = vmatprep.subr.bf16.mxu0 0
    %952 = vmatpush2.bf16.xpose.msra.mxu0 0
    %953 = vmatprep.subr.bf16.mxu0 0
    %954 = vmatpush2.bf16.xpose.msra.mxu0 0
    %955 = vmatprep.subr.bf16.mxu0 0
    %956 = vmatpush2.bf16.xpose.msra.mxu0 0
    %957 = vmatprep.mubr.bf16.mxu0 %v182
    %958 = vmatmul.mubr.bf16.gmra.mxu0 %v181
    %v959 = vpop.f32.mrf.mxu0
    %v960 = vadd.f32 %v920, %v959
    %v961 = vpop.f32.mrf.mxu0
    %v962 = vpop.f32.mrf.mxu0
    %v963 = vpop.f32.mrf.mxu0
    %964 = vdwg.mxu0
    %965 = vmatprep.subr.bf16.mxu0 0
    %966 = vmatpush1.bf16.xpose.msra.mxu0 0
    %967 = vmatprep.subr.bf16.mxu0 0
    %968 = vmatpush1.bf16.xpose.msra.mxu0 0
    %969 = vmatprep.subr.bf16.mxu0 0
    %970 = vmatpush1.bf16.xpose.msra.mxu0 0
    %971 = vmatprep.subr.bf16.mxu0 0
    %972 = vmatpush1.bf16.xpose.msra.mxu0 0
    %973 = vmatprep.subr.bf16.mxu0 0
    %974 = vmatpush1.bf16.xpose.msra.mxu0 0
    %975 = vmatprep.subr.bf16.mxu0 0
    %976 = vmatpush1.bf16.xpose.msra.mxu0 0
    %977 = vmatprep.subr.bf16.mxu0 0
    %978 = vmatpush1.bf16.xpose.msra.mxu0 0
    %979 = vmatprep.subr.bf16.mxu0 %v602
    %980 = vmatpush1.bf16.xpose.msra.mxu0 %v601
    %981 = vmatprep.subr.bf16.mxu0 0
    %982 = vmatpush2.bf16.xpose.msra.mxu0 0
    %983 = vmatprep.subr.bf16.mxu0 0
    %984 = vmatpush2.bf16.xpose.msra.mxu0 0
    %985 = vmatprep.subr.bf16.mxu0 0
    %986 = vmatpush2.bf16.xpose.msra.mxu0 0
    %987 = vmatprep.subr.bf16.mxu0 0
    %988 = vmatpush2.bf16.xpose.msra.mxu0 0
    %989 = vmatprep.subr.bf16.mxu0 0
    %990 = vmatpush2.bf16.xpose.msra.mxu0 0
    %991 = vmatprep.subr.bf16.mxu0 0
    %992 = vmatpush2.bf16.xpose.msra.mxu0 0
    %993 = vmatprep.subr.bf16.mxu0 0
    %994 = vmatpush2.bf16.xpose.msra.mxu0 0
    %995 = vmatprep.subr.bf16.mxu0 0
    %996 = vmatpush2.bf16.xpose.msra.mxu0 0
    %997 = vmatprep.mubr.bf16.mxu0 %v184
    %998 = vmatmul.mubr.bf16.gmra.mxu0 %v183
    %v999 = vpop.f32.mrf.mxu0
    %v1000 = vadd.f32 %v960, %v999
    %v1001 = vpop.f32.mrf.mxu0
    %v1002 = vpop.f32.mrf.mxu0
    %v1003 = vpop.f32.mrf.mxu0
    %1004 = vdwg.mxu0
    %1005 = vmatprep.subr.bf16.mxu0 0
    %1006 = vmatpush1.bf16.xpose.msra.mxu0 0
    %1007 = vmatprep.subr.bf16.mxu0 0
    %1008 = vmatpush1.bf16.xpose.msra.mxu0 0
    %1009 = vmatprep.subr.bf16.mxu0 0
    %1010 = vmatpush1.bf16.xpose.msra.mxu0 0
    %1011 = vmatprep.subr.bf16.mxu0 0
    %1012 = vmatpush1.bf16.xpose.msra.mxu0 0
    %1013 = vmatprep.subr.bf16.mxu0 0
    %1014 = vmatpush1.bf16.xpose.msra.mxu0 0
    %1015 = vmatprep.subr.bf16.mxu0 0
    %1016 = vmatpush1.bf16.xpose.msra.mxu0 0
    %1017 = vmatprep.subr.bf16.mxu0 0
    %1018 = vmatpush1.bf16.xpose.msra.mxu0 0
    %1019 = vmatprep.subr.bf16.mxu0 %v604
    %1020 = vmatpush1.bf16.xpose.msra.mxu0 %v603
    %1021 = vmatprep.subr.bf16.mxu0 0
    %1022 = vmatpush2.bf16.xpose.msra.mxu0 0
    %1023 = vmatprep.subr.bf16.mxu0 0
    %1024 = vmatpush2.bf16.xpose.msra.mxu0 0
    %1025 = vmatprep.subr.bf16.mxu0 0
    %1026 = vmatpush2.bf16.xpose.msra.mxu0 0
    %1027 = vmatprep.subr.bf16.mxu0 0
    %1028 = vmatpush2.bf16.xpose.msra.mxu0 0
    %1029 = vmatprep.subr.bf16.mxu0 0
    %1030 = vmatpush2.bf16.xpose.msra.mxu0 0
    %1031 = vmatprep.subr.bf16.mxu0 0
    %1032 = vmatpush2.bf16.xpose.msra.mxu0 0
    %1033 = vmatprep.subr.bf16.mxu0 0
    %1034 = vmatpush2.bf16.xpose.msra.mxu0 0
    %1035 = vmatprep.subr.bf16.mxu0 0
    %1036 = vmatpush2.bf16.xpose.msra.mxu0 0
    %1037 = vmatprep.mubr.bf16.mxu0 %v186
    %1038 = vmatmul.mubr.bf16.gmra.mxu0 %v185
    %v1039 = vpop.f32.mrf.mxu0
    %v1040 = vadd.f32 %v1000, %v1039
    %v1041 = vpop.f32.mrf.mxu0
    %v1042 = vpop.f32.mrf.mxu0
    %v1043 = vpop.f32.mrf.mxu0
    %1044 = vdwg.mxu0
    %1045 = vmatprep.subr.bf16.mxu0 0
    %1046 = vmatpush1.bf16.xpose.msra.mxu0 0
    %1047 = vmatprep.subr.bf16.mxu0 0
    %1048 = vmatpush1.bf16.xpose.msra.mxu0 0
    %1049 = vmatprep.subr.bf16.mxu0 0
    %1050 = vmatpush1.bf16.xpose.msra.mxu0 0
    %1051 = vmatprep.subr.bf16.mxu0 0
    %1052 = vmatpush1.bf16.xpose.msra.mxu0 0
    %1053 = vmatprep.subr.bf16.mxu0 0
    %1054 = vmatpush1.bf16.xpose.msra.mxu0 0
    %1055 = vmatprep.subr.bf16.mxu0 0
    %1056 = vmatpush1.bf16.xpose.msra.mxu0 0
    %1057 = vmatprep.subr.bf16.mxu0 0
    %1058 = vmatpush1.bf16.xpose.msra.mxu0 0
    %1059 = vmatprep.subr.bf16.mxu0 %v606
    %1060 = vmatpush1.bf16.xpose.msra.mxu0 %v605
    %1061 = vmatprep.subr.bf16.mxu0 0
    %1062 = vmatpush2.bf16.xpose.msra.mxu0 0
    %1063 = vmatprep.subr.bf16.mxu0 0
    %1064 = vmatpush2.bf16.xpose.msra.mxu0 0
    %1065 = vmatprep.subr.bf16.mxu0 0
    %1066 = vmatpush2.bf16.xpose.msra.mxu0 0
    %1067 = vmatprep.subr.bf16.mxu0 0
    %1068 = vmatpush2.bf16.xpose.msra.mxu0 0
    %1069 = vmatprep.subr.bf16.mxu0 0
    %1070 = vmatpush2.bf16.xpose.msra.mxu0 0
    %1071 = vmatprep.subr.bf16.mxu0 0
    %1072 = vmatpush2.bf16.xpose.msra.mxu0 0
    %1073 = vmatprep.subr.bf16.mxu0 0
    %1074 = vmatpush2.bf16.xpose.msra.mxu0 0
    %1075 = vmatprep.subr.bf16.mxu0 0
    %1076 = vmatpush2.bf16.xpose.msra.mxu0 0
    %1077 = vmatprep.mubr.bf16.mxu0 %v188
    %1078 = vmatmul.mubr.bf16.gmra.mxu0 %v187
    %v1079 = vpop.f32.mrf.mxu0
    %v1080 = vadd.f32 %v1040, %v1079
    %v1081 = vpop.f32.mrf.mxu0
    %v1082 = vpop.f32.mrf.mxu0
    %v1083 = vpop.f32.mrf.mxu0
    %1084 = vdwg.mxu0
    %1085 = vmatprep.subr.bf16.mxu0 0
    %1086 = vmatpush1.bf16.xpose.msra.mxu0 0
    %1087 = vmatprep.subr.bf16.mxu0 0
    %1088 = vmatpush1.bf16.xpose.msra.mxu0 0
    %1089 = vmatprep.subr.bf16.mxu0 0
    %1090 = vmatpush1.bf16.xpose.msra.mxu0 0
    %1091 = vmatprep.subr.bf16.mxu0 0
    %1092 = vmatpush1.bf16.xpose.msra.mxu0 0
    %1093 = vmatprep.subr.bf16.mxu0 0
    %1094 = vmatpush1.bf16.xpose.msra.mxu0 0
    %1095 = vmatprep.subr.bf16.mxu0 0
    %1096 = vmatpush1.bf16.xpose.msra.mxu0 0
    %1097 = vmatprep.subr.bf16.mxu0 0
    %1098 = vmatpush1.bf16.xpose.msra.mxu0 0
    %1099 = vmatprep.subr.bf16.mxu0 %v608
    %1100 = vmatpush1.bf16.xpose.msra.mxu0 %v607
    %1101 = vmatprep.subr.bf16.mxu0 0
    %1102 = vmatpush2.bf16.xpose.msra.mxu0 0
    %1103 = vmatprep.subr.bf16.mxu0 0
    %1104 = vmatpush2.bf16.xpose.msra.mxu0 0
    %1105 = vmatprep.subr.bf16.mxu0 0
    %1106 = vmatpush2.bf16.xpose.msra.mxu0 0
    %1107 = vmatprep.subr.bf16.mxu0 0
    %1108 = vmatpush2.bf16.xpose.msra.mxu0 0
    %1109 = vmatprep.subr.bf16.mxu0 0
    %1110 = vmatpush2.bf16.xpose.msra.mxu0 0
    %1111 = vmatprep.subr.bf16.mxu0 0
    %1112 = vmatpush2.bf16.xpose.msra.mxu0 0
    %1113 = vmatprep.subr.bf16.mxu0 0
    %1114 = vmatpush2.bf16.xpose.msra.mxu0 0
    %1115 = vmatprep.subr.bf16.mxu0 0
    %1116 = vmatpush2.bf16.xpose.msra.mxu0 0
    %1117 = vmatprep.mubr.bf16.mxu0 %v190
    %1118 = vmatmul.mubr.bf16.gmra.mxu0 %v189
    %v1119 = vpop.f32.mrf.mxu0
    %v1120 = vadd.f32 %v1080, %v1119
    %v1121 = vpop.f32.mrf.mxu0
    %v1122 = vpop.f32.mrf.mxu0
    %v1123 = vpop.f32.mrf.mxu0
    %1124 = vdwg.mxu0
    %1125 = vmatprep.subr.bf16.mxu0 0
    %1126 = vmatpush1.bf16.xpose.msra.mxu0 0
    %1127 = vmatprep.subr.bf16.mxu0 0
    %1128 = vmatpush1.bf16.xpose.msra.mxu0 0
    %1129 = vmatprep.subr.bf16.mxu0 0
    %1130 = vmatpush1.bf16.xpose.msra.mxu0 0
    %1131 = vmatprep.subr.bf16.mxu0 0
    %1132 = vmatpush1.bf16.xpose.msra.mxu0 0
    %1133 = vmatprep.subr.bf16.mxu0 0
    %1134 = vmatpush1.bf16.xpose.msra.mxu0 0
    %1135 = vmatprep.subr.bf16.mxu0 0
    %1136 = vmatpush1.bf16.xpose.msra.mxu0 0
    %1137 = vmatprep.subr.bf16.mxu0 0
    %1138 = vmatpush1.bf16.xpose.msra.mxu0 0
    %1139 = vmatprep.subr.bf16.mxu0 %v610
    %1140 = vmatpush1.bf16.xpose.msra.mxu0 %v609
    %1141 = vmatprep.subr.bf16.mxu0 0
    %1142 = vmatpush2.bf16.xpose.msra.mxu0 0
    %1143 = vmatprep.subr.bf16.mxu0 0
    %1144 = vmatpush2.bf16.xpose.msra.mxu0 0
    %1145 = vmatprep.subr.bf16.mxu0 0
    %1146 = vmatpush2.bf16.xpose.msra.mxu0 0
    %1147 = vmatprep.subr.bf16.mxu0 0
    %1148 = vmatpush2.bf16.xpose.msra.mxu0 0
    %1149 = vmatprep.subr.bf16.mxu0 0
    %1150 = vmatpush2.bf16.xpose.msra.mxu0 0
    %1151 = vmatprep.subr.bf16.mxu0 0
    %1152 = vmatpush2.bf16.xpose.msra.mxu0 0
    %1153 = vmatprep.subr.bf16.mxu0 0
    %1154 = vmatpush2.bf16.xpose.msra.mxu0 0
    %1155 = vmatprep.subr.bf16.mxu0 0
    %1156 = vmatpush2.bf16.xpose.msra.mxu0 0
    %1157 = vmatprep.mubr.bf16.mxu0 %v192
    %1158 = vmatmul.mubr.bf16.gmra.mxu0 %v191
    %v1159 = vpop.f32.mrf.mxu0
    %v1160 = vadd.f32 %v1120, %v1159
    %v1161 = vpop.f32.mrf.mxu0
    %v1162 = vpop.f32.mrf.mxu0
    %v1163 = vpop.f32.mrf.mxu0
    %1164 = vdwg.mxu0
    %1165 = vmatprep.subr.bf16.mxu0 0
    %1166 = vmatpush1.bf16.xpose.msra.mxu0 0
    %1167 = vmatprep.subr.bf16.mxu0 0
    %1168 = vmatpush1.bf16.xpose.msra.mxu0 0
    %1169 = vmatprep.subr.bf16.mxu0 0
    %1170 = vmatpush1.bf16.xpose.msra.mxu0 0
    %1171 = vmatprep.subr.bf16.mxu0 0
    %1172 = vmatpush1.bf16.xpose.msra.mxu0 0
    %1173 = vmatprep.subr.bf16.mxu0 0
    %1174 = vmatpush1.bf16.xpose.msra.mxu0 0
    %1175 = vmatprep.subr.bf16.mxu0 0
    %1176 = vmatpush1.bf16.xpose.msra.mxu0 0
    %1177 = vmatprep.subr.bf16.mxu0 0
    %1178 = vmatpush1.bf16.xpose.msra.mxu0 0
    %1179 = vmatprep.subr.bf16.mxu0 %v612
    %1180 = vmatpush1.bf16.xpose.msra.mxu0 %v611
    %1181 = vmatprep.subr.bf16.mxu0 0
    %1182 = vmatpush2.bf16.xpose.msra.mxu0 0
    %1183 = vmatprep.subr.bf16.mxu0 0
    %1184 = vmatpush2.bf16.xpose.msra.mxu0 0
    %1185 = vmatprep.subr.bf16.mxu0 0
    %1186 = vmatpush2.bf16.xpose.msra.mxu0 0
    %1187 = vmatprep.subr.bf16.mxu0 0
    %1188 = vmatpush2.bf16.xpose.msra.mxu0 0
    %1189 = vmatprep.subr.bf16.mxu0 0
    %1190 = vmatpush2.bf16.xpose.msra.mxu0 0
    %1191 = vmatprep.subr.bf16.mxu0 0
    %1192 = vmatpush2.bf16.xpose.msra.mxu0 0
    %1193 = vmatprep.subr.bf16.mxu0 0
    %1194 = vmatpush2.bf16.xpose.msra.mxu0 0
    %1195 = vmatprep.subr.bf16.mxu0 0
    %1196 = vmatpush2.bf16.xpose.msra.mxu0 0
    %1197 = vmatprep.mubr.bf16.mxu0 %v194
    %1198 = vmatmul.mubr.bf16.gmra.mxu0 %v193
    %v1199 = vpop.f32.mrf.mxu0
    %v1200 = vadd.f32 %v1160, %v1199
    %v1201 = vpop.f32.mrf.mxu0
    %v1202 = vpop.f32.mrf.mxu0
    %v1203 = vpop.f32.mrf.mxu0
    %1204 = vdwg.mxu0
    %1205 = vmatprep.subr.bf16.mxu0 0
    %1206 = vmatpush1.bf16.xpose.msra.mxu0 0
    %1207 = vmatprep.subr.bf16.mxu0 0
    %1208 = vmatpush1.bf16.xpose.msra.mxu0 0
    %1209 = vmatprep.subr.bf16.mxu0 0
    %1210 = vmatpush1.bf16.xpose.msra.mxu0 0
    %1211 = vmatprep.subr.bf16.mxu0 0
    %1212 = vmatpush1.bf16.xpose.msra.mxu0 0
    %1213 = vmatprep.subr.bf16.mxu0 0
    %1214 = vmatpush1.bf16.xpose.msra.mxu0 0
    %1215 = vmatprep.subr.bf16.mxu0 0
    %1216 = vmatpush1.bf16.xpose.msra.mxu0 0
    %1217 = vmatprep.subr.bf16.mxu0 0
    %1218 = vmatpush1.bf16.xpose.msra.mxu0 0
    %1219 = vmatprep.subr.bf16.mxu0 %v614
    %1220 = vmatpush1.bf16.xpose.msra.mxu0 %v613
    %1221 = vmatprep.subr.bf16.mxu0 0
    %1222 = vmatpush2.bf16.xpose.msra.mxu0 0
    %1223 = vmatprep.subr.bf16.mxu0 0
    %1224 = vmatpush2.bf16.xpose.msra.mxu0 0
    %1225 = vmatprep.subr.bf16.mxu0 0
    %1226 = vmatpush2.bf16.xpose.msra.mxu0 0
    %1227 = vmatprep.subr.bf16.mxu0 0
    %1228 = vmatpush2.bf16.xpose.msra.mxu0 0
    %1229 = vmatprep.subr.bf16.mxu0 0
    %1230 = vmatpush2.bf16.xpose.msra.mxu0 0
    %1231 = vmatprep.subr.bf16.mxu0 0
    %1232 = vmatpush2.bf16.xpose.msra.mxu0 0
    %1233 = vmatprep.subr.bf16.mxu0 0
    %1234 = vmatpush2.bf16.xpose.msra.mxu0 0
    %1235 = vmatprep.subr.bf16.mxu0 0
    %1236 = vmatpush2.bf16.xpose.msra.mxu0 0
    %1237 = vmatprep.mubr.bf16.mxu0 %v196
    %1238 = vmatmul.mubr.bf16.gmra.mxu0 %v195
    %v1239 = vpop.f32.mrf.mxu0
    %v1240 = vadd.f32 %v1200, %v1239
    %v1241 = vpop.f32.mrf.mxu0
    %v1242 = vpop.f32.mrf.mxu0
    %v1243 = vpop.f32.mrf.mxu0
    %1244 = vdwg.mxu0
    %1245 = vmatprep.subr.bf16.mxu0 0
    %1246 = vmatpush1.bf16.xpose.msra.mxu0 0
    %1247 = vmatprep.subr.bf16.mxu0 0
    %1248 = vmatpush1.bf16.xpose.msra.mxu0 0
    %1249 = vmatprep.subr.bf16.mxu0 0
    %1250 = vmatpush1.bf16.xpose.msra.mxu0 0
    %1251 = vmatprep.subr.bf16.mxu0 0
    %1252 = vmatpush1.bf16.xpose.msra.mxu0 0
    %1253 = vmatprep.subr.bf16.mxu0 0
    %1254 = vmatpush1.bf16.xpose.msra.mxu0 0
    %1255 = vmatprep.subr.bf16.mxu0 0
    %1256 = vmatpush1.bf16.xpose.msra.mxu0 0
    %1257 = vmatprep.subr.bf16.mxu0 0
    %1258 = vmatpush1.bf16.xpose.msra.mxu0 0
    %1259 = vmatprep.subr.bf16.mxu0 %v616
    %1260 = vmatpush1.bf16.xpose.msra.mxu0 %v615
    %1261 = vmatprep.subr.bf16.mxu0 0
    %1262 = vmatpush2.bf16.xpose.msra.mxu0 0
    %1263 = vmatprep.subr.bf16.mxu0 0
    %1264 = vmatpush2.bf16.xpose.msra.mxu0 0
    %1265 = vmatprep.subr.bf16.mxu0 0
    %1266 = vmatpush2.bf16.xpose.msra.mxu0 0
    %1267 = vmatprep.subr.bf16.mxu0 0
    %1268 = vmatpush2.bf16.xpose.msra.mxu0 0
    %1269 = vmatprep.subr.bf16.mxu0 0
    %1270 = vmatpush2.bf16.xpose.msra.mxu0 0
    %1271 = vmatprep.subr.bf16.mxu0 0
    %1272 = vmatpush2.bf16.xpose.msra.mxu0 0
    %1273 = vmatprep.subr.bf16.mxu0 0
    %1274 = vmatpush2.bf16.xpose.msra.mxu0 0
    %1275 = vmatprep.subr.bf16.mxu0 0
    %1276 = vmatpush2.bf16.xpose.msra.mxu0 0
    %1277 = vmatprep.mubr.bf16.mxu0 %v198
    %1278 = vmatmul.mubr.bf16.gmra.mxu0 %v197
    %v1279 = vpop.f32.mrf.mxu0
    %v1280 = vadd.f32 %v1240, %v1279
    %v1281 = vpop.f32.mrf.mxu0
    %v1282 = vpop.f32.mrf.mxu0
    %v1283 = vpop.f32.mrf.mxu0
    %1284 = vdwg.mxu0
    %1285 = vmatprep.subr.bf16.mxu0 0
    %1286 = vmatpush1.bf16.xpose.msra.mxu0 0
    %1287 = vmatprep.subr.bf16.mxu0 0
    %1288 = vmatpush1.bf16.xpose.msra.mxu0 0
    %1289 = vmatprep.subr.bf16.mxu0 0
    %1290 = vmatpush1.bf16.xpose.msra.mxu0 0
    %1291 = vmatprep.subr.bf16.mxu0 0
    %1292 = vmatpush1.bf16.xpose.msra.mxu0 0
    %1293 = vmatprep.subr.bf16.mxu0 0
    %1294 = vmatpush1.bf16.xpose.msra.mxu0 0
    %1295 = vmatprep.subr.bf16.mxu0 0
    %1296 = vmatpush1.bf16.xpose.msra.mxu0 0
    %1297 = vmatprep.subr.bf16.mxu0 0
    %1298 = vmatpush1.bf16.xpose.msra.mxu0 0
    %1299 = vmatprep.subr.bf16.mxu0 %v618
    %1300 = vmatpush1.bf16.xpose.msra.mxu0 %v617
    %1301 = vmatprep.subr.bf16.mxu0 0
    %1302 = vmatpush2.bf16.xpose.msra.mxu0 0
    %1303 = vmatprep.subr.bf16.mxu0 0
    %1304 = vmatpush2.bf16.xpose.msra.mxu0 0
    %1305 = vmatprep.subr.bf16.mxu0 0
    %1306 = vmatpush2.bf16.xpose.msra.mxu0 0
    %1307 = vmatprep.subr.bf16.mxu0 0
    %1308 = vmatpush2.bf16.xpose.msra.mxu0 0
    %1309 = vmatprep.subr.bf16.mxu0 0
    %1310 = vmatpush2.bf16.xpose.msra.mxu0 0
    %1311 = vmatprep.subr.bf16.mxu0 0
    %1312 = vmatpush2.bf16.xpose.msra.mxu0 0
    %1313 = vmatprep.subr.bf16.mxu0 0
    %1314 = vmatpush2.bf16.xpose.msra.mxu0 0
    %1315 = vmatprep.subr.bf16.mxu0 0
    %1316 = vmatpush2.bf16.xpose.msra.mxu0 0
    %1317 = vmatprep.mubr.bf16.mxu0 %v200
    %1318 = vmatmul.mubr.bf16.gmra.mxu0 %v199
    %v1319 = vpop.f32.mrf.mxu0
    %v1320 = vadd.f32 %v1280, %v1319
    %v1321 = vpop.f32.mrf.mxu0
    %v1322 = vpop.f32.mrf.mxu0
    %v1323 = vpop.f32.mrf.mxu0
    %1324 = vdwg.mxu0
    %1325 = vmatprep.subr.bf16.mxu0 0
    %1326 = vmatpush1.bf16.xpose.msra.mxu0 0
    %1327 = vmatprep.subr.bf16.mxu0 0
    %1328 = vmatpush1.bf16.xpose.msra.mxu0 0
    %1329 = vmatprep.subr.bf16.mxu0 0
    %1330 = vmatpush1.bf16.xpose.msra.mxu0 0
    %1331 = vmatprep.subr.bf16.mxu0 0
    %1332 = vmatpush1.bf16.xpose.msra.mxu0 0
    %1333 = vmatprep.subr.bf16.mxu0 0
    %1334 = vmatpush1.bf16.xpose.msra.mxu0 0
    %1335 = vmatprep.subr.bf16.mxu0 0
    %1336 = vmatpush1.bf16.xpose.msra.mxu0 0
    %1337 = vmatprep.subr.bf16.mxu0 0
    %1338 = vmatpush1.bf16.xpose.msra.mxu0 0
    %1339 = vmatprep.subr.bf16.mxu0 %v620
    %1340 = vmatpush1.bf16.xpose.msra.mxu0 %v619
    %1341 = vmatprep.subr.bf16.mxu0 0
    %1342 = vmatpush2.bf16.xpose.msra.mxu0 0
    %1343 = vmatprep.subr.bf16.mxu0 0
    %1344 = vmatpush2.bf16.xpose.msra.mxu0 0
    %1345 = vmatprep.subr.bf16.mxu0 0
    %1346 = vmatpush2.bf16.xpose.msra.mxu0 0
    %1347 = vmatprep.subr.bf16.mxu0 0
    %1348 = vmatpush2.bf16.xpose.msra.mxu0 0
    %1349 = vmatprep.subr.bf16.mxu0 0
    %1350 = vmatpush2.bf16.xpose.msra.mxu0 0
    %1351 = vmatprep.subr.bf16.mxu0 0
    %1352 = vmatpush2.bf16.xpose.msra.mxu0 0
    %1353 = vmatprep.subr.bf16.mxu0 0
    %1354 = vmatpush2.bf16.xpose.msra.mxu0 0
    %1355 = vmatprep.subr.bf16.mxu0 0
    %1356 = vmatpush2.bf16.xpose.msra.mxu0 0
    %1357 = vmatprep.mubr.bf16.mxu0 %v202
    %1358 = vmatmul.mubr.bf16.gmra.mxu0 %v201
    %v1359 = vpop.f32.mrf.mxu0
    %v1360 = vadd.f32 %v1320, %v1359
    %v1361 = vpop.f32.mrf.mxu0
    %v1362 = vpop.f32.mrf.mxu0
    %v1363 = vpop.f32.mrf.mxu0
    %1364 = vdwg.mxu0
    %1365 = vmatprep.subr.bf16.mxu0 0
    %1366 = vmatpush1.bf16.xpose.msra.mxu0 0
    %1367 = vmatprep.subr.bf16.mxu0 0
    %1368 = vmatpush1.bf16.xpose.msra.mxu0 0
    %1369 = vmatprep.subr.bf16.mxu0 0
    %1370 = vmatpush1.bf16.xpose.msra.mxu0 0
    %1371 = vmatprep.subr.bf16.mxu0 0
    %1372 = vmatpush1.bf16.xpose.msra.mxu0 0
    %1373 = vmatprep.subr.bf16.mxu0 0
    %1374 = vmatpush1.bf16.xpose.msra.mxu0 0
    %1375 = vmatprep.subr.bf16.mxu0 0
    %1376 = vmatpush1.bf16.xpose.msra.mxu0 0
    %1377 = vmatprep.subr.bf16.mxu0 0
    %1378 = vmatpush1.bf16.xpose.msra.mxu0 0
    %1379 = vmatprep.subr.bf16.mxu0 %v622
    %1380 = vmatpush1.bf16.xpose.msra.mxu0 %v621
    %1381 = vmatprep.subr.bf16.mxu0 0
    %1382 = vmatpush2.bf16.xpose.msra.mxu0 0
    %1383 = vmatprep.subr.bf16.mxu0 0
    %1384 = vmatpush2.bf16.xpose.msra.mxu0 0
    %1385 = vmatprep.subr.bf16.mxu0 0
    %1386 = vmatpush2.bf16.xpose.msra.mxu0 0
    %1387 = vmatprep.subr.bf16.mxu0 0
    %1388 = vmatpush2.bf16.xpose.msra.mxu0 0
    %1389 = vmatprep.subr.bf16.mxu0 0
    %1390 = vmatpush2.bf16.xpose.msra.mxu0 0
    %1391 = vmatprep.subr.bf16.mxu0 0
    %1392 = vmatpush2.bf16.xpose.msra.mxu0 0
    %1393 = vmatprep.subr.bf16.mxu0 0
    %1394 = vmatpush2.bf16.xpose.msra.mxu0 0
    %1395 = vmatprep.subr.bf16.mxu0 0
    %1396 = vmatpush2.bf16.xpose.msra.mxu0 0
    %1397 = vmatprep.mubr.bf16.mxu0 %v204
    %1398 = vmatmul.mubr.bf16.gmra.mxu0 %v203
    %v1399 = vpop.f32.mrf.mxu0
    %v1400 = vadd.f32 %v1360, %v1399
    %v1401 = vpop.f32.mrf.mxu0
    %v1402 = vpop.f32.mrf.mxu0
    %v1403 = vpop.f32.mrf.mxu0
    %1404 = vdwg.mxu0
    %1405 = vmatprep.subr.bf16.mxu0 0
    %1406 = vmatpush1.bf16.xpose.msra.mxu0 0
    %1407 = vmatprep.subr.bf16.mxu0 0
    %1408 = vmatpush1.bf16.xpose.msra.mxu0 0
    %1409 = vmatprep.subr.bf16.mxu0 0
    %1410 = vmatpush1.bf16.xpose.msra.mxu0 0
    %1411 = vmatprep.subr.bf16.mxu0 0
    %1412 = vmatpush1.bf16.xpose.msra.mxu0 0
    %1413 = vmatprep.subr.bf16.mxu0 0
    %1414 = vmatpush1.bf16.xpose.msra.mxu0 0
    %1415 = vmatprep.subr.bf16.mxu0 0
    %1416 = vmatpush1.bf16.xpose.msra.mxu0 0
    %1417 = vmatprep.subr.bf16.mxu0 0
    %1418 = vmatpush1.bf16.xpose.msra.mxu0 0
    %1419 = vmatprep.subr.bf16.mxu0 %v624
    %1420 = vmatpush1.bf16.xpose.msra.mxu0 %v623
    %1421 = vmatprep.subr.bf16.mxu0 0
    %1422 = vmatpush2.bf16.xpose.msra.mxu0 0
    %1423 = vmatprep.subr.bf16.mxu0 0
    %1424 = vmatpush2.bf16.xpose.msra.mxu0 0
    %1425 = vmatprep.subr.bf16.mxu0 0
    %1426 = vmatpush2.bf16.xpose.msra.mxu0 0
    %1427 = vmatprep.subr.bf16.mxu0 0
    %1428 = vmatpush2.bf16.xpose.msra.mxu0 0
    %1429 = vmatprep.subr.bf16.mxu0 0
    %1430 = vmatpush2.bf16.xpose.msra.mxu0 0
    %1431 = vmatprep.subr.bf16.mxu0 0
    %1432 = vmatpush2.bf16.xpose.msra.mxu0 0
    %1433 = vmatprep.subr.bf16.mxu0 0
    %1434 = vmatpush2.bf16.xpose.msra.mxu0 0
    %1435 = vmatprep.subr.bf16.mxu0 0
    %1436 = vmatpush2.bf16.xpose.msra.mxu0 0
    %1437 = vmatprep.mubr.bf16.mxu0 %v206
    %1438 = vmatmul.mubr.bf16.gmra.mxu0 %v205
    %v1439 = vpop.f32.mrf.mxu0
    %v1440 = vadd.f32 %v1400, %v1439
    %v1441 = vpop.f32.mrf.mxu0
    %v1442 = vpop.f32.mrf.mxu0
    %v1443 = vpop.f32.mrf.mxu0
    %1444 = vdwg.mxu0
    %1445 = vmatprep.subr.bf16.mxu0 0
    %1446 = vmatpush1.bf16.xpose.msra.mxu0 0
    %1447 = vmatprep.subr.bf16.mxu0 0
    %1448 = vmatpush1.bf16.xpose.msra.mxu0 0
    %1449 = vmatprep.subr.bf16.mxu0 0
    %1450 = vmatpush1.bf16.xpose.msra.mxu0 0
    %1451 = vmatprep.subr.bf16.mxu0 0
    %1452 = vmatpush1.bf16.xpose.msra.mxu0 0
    %1453 = vmatprep.subr.bf16.mxu0 0
    %1454 = vmatpush1.bf16.xpose.msra.mxu0 0
    %1455 = vmatprep.subr.bf16.mxu0 0
    %1456 = vmatpush1.bf16.xpose.msra.mxu0 0
    %1457 = vmatprep.subr.bf16.mxu0 0
    %1458 = vmatpush1.bf16.xpose.msra.mxu0 0
    %1459 = vmatprep.subr.bf16.mxu0 %v626
    %1460 = vmatpush1.bf16.xpose.msra.mxu0 %v625
    %1461 = vmatprep.subr.bf16.mxu0 0
    %1462 = vmatpush2.bf16.xpose.msra.mxu0 0
    %1463 = vmatprep.subr.bf16.mxu0 0
    %1464 = vmatpush2.bf16.xpose.msra.mxu0 0
    %1465 = vmatprep.subr.bf16.mxu0 0
    %1466 = vmatpush2.bf16.xpose.msra.mxu0 0
    %1467 = vmatprep.subr.bf16.mxu0 0
    %1468 = vmatpush2.bf16.xpose.msra.mxu0 0
    %1469 = vmatprep.subr.bf16.mxu0 0
    %1470 = vmatpush2.bf16.xpose.msra.mxu0 0
    %1471 = vmatprep.subr.bf16.mxu0 0
    %1472 = vmatpush2.bf16.xpose.msra.mxu0 0
    %1473 = vmatprep.subr.bf16.mxu0 0
    %1474 = vmatpush2.bf16.xpose.msra.mxu0 0
    %1475 = vmatprep.subr.bf16.mxu0 0
    %1476 = vmatpush2.bf16.xpose.msra.mxu0 0
    %1477 = vmatprep.mubr.bf16.mxu0 %v208
    %1478 = vmatmul.mubr.bf16.gmra.mxu0 %v207
    %v1479 = vpop.f32.mrf.mxu0
    %v1480 = vadd.f32 %v1440, %v1479
    %v1481 = vpop.f32.mrf.mxu0
    %v1482 = vpop.f32.mrf.mxu0
    %v1483 = vpop.f32.mrf.mxu0
    %1484 = vdwg.mxu0
    %1485 = vmatprep.subr.bf16.mxu0 0
    %1486 = vmatpush1.bf16.xpose.msra.mxu0 0
    %1487 = vmatprep.subr.bf16.mxu0 0
    %1488 = vmatpush1.bf16.xpose.msra.mxu0 0
    %1489 = vmatprep.subr.bf16.mxu0 0
    %1490 = vmatpush1.bf16.xpose.msra.mxu0 0
    %1491 = vmatprep.subr.bf16.mxu0 0
    %1492 = vmatpush1.bf16.xpose.msra.mxu0 0
    %1493 = vmatprep.subr.bf16.mxu0 0
    %1494 = vmatpush1.bf16.xpose.msra.mxu0 0
    %1495 = vmatprep.subr.bf16.mxu0 0
    %1496 = vmatpush1.bf16.xpose.msra.mxu0 0
    %1497 = vmatprep.subr.bf16.mxu0 0
    %1498 = vmatpush1.bf16.xpose.msra.mxu0 0
    %1499 = vmatprep.subr.bf16.mxu0 %v628
    %1500 = vmatpush1.bf16.xpose.msra.mxu0 %v627
    %1501 = vmatprep.subr.bf16.mxu0 0
    %1502 = vmatpush2.bf16.xpose.msra.mxu0 0
    %1503 = vmatprep.subr.bf16.mxu0 0
    %1504 = vmatpush2.bf16.xpose.msra.mxu0 0
    %1505 = vmatprep.subr.bf16.mxu0 0
    %1506 = vmatpush2.bf16.xpose.msra.mxu0 0
    %1507 = vmatprep.subr.bf16.mxu0 0
    %1508 = vmatpush2.bf16.xpose.msra.mxu0 0
    %1509 = vmatprep.subr.bf16.mxu0 0
    %1510 = vmatpush2.bf16.xpose.msra.mxu0 0
    %1511 = vmatprep.subr.bf16.mxu0 0
    %1512 = vmatpush2.bf16.xpose.msra.mxu0 0
    %1513 = vmatprep.subr.bf16.mxu0 0
    %1514 = vmatpush2.bf16.xpose.msra.mxu0 0
    %1515 = vmatprep.subr.bf16.mxu0 0
    %1516 = vmatpush2.bf16.xpose.msra.mxu0 0
    %1517 = vmatprep.mubr.bf16.mxu0 %v210
    %1518 = vmatmul.mubr.bf16.gmra.mxu0 %v209
    %v1519 = vpop.f32.mrf.mxu0
    %v1520 = vadd.f32 %v1480, %v1519
    %v1521 = vpop.f32.mrf.mxu0
    %v1522 = vpop.f32.mrf.mxu0
    %v1523 = vpop.f32.mrf.mxu0
    %1524 = vdwg.mxu0
    %1525 = vmatprep.subr.bf16.mxu0 0
    %1526 = vmatpush1.bf16.xpose.msra.mxu0 0
    %1527 = vmatprep.subr.bf16.mxu0 0
    %1528 = vmatpush1.bf16.xpose.msra.mxu0 0
    %1529 = vmatprep.subr.bf16.mxu0 0
    %1530 = vmatpush1.bf16.xpose.msra.mxu0 0
    %1531 = vmatprep.subr.bf16.mxu0 0
    %1532 = vmatpush1.bf16.xpose.msra.mxu0 0
    %1533 = vmatprep.subr.bf16.mxu0 0
    %1534 = vmatpush1.bf16.xpose.msra.mxu0 0
    %1535 = vmatprep.subr.bf16.mxu0 0
    %1536 = vmatpush1.bf16.xpose.msra.mxu0 0
    %1537 = vmatprep.subr.bf16.mxu0 0
    %1538 = vmatpush1.bf16.xpose.msra.mxu0 0
    %1539 = vmatprep.subr.bf16.mxu0 %v630
    %1540 = vmatpush1.bf16.xpose.msra.mxu0 %v629
    %1541 = vmatprep.subr.bf16.mxu0 0
    %1542 = vmatpush2.bf16.xpose.msra.mxu0 0
    %1543 = vmatprep.subr.bf16.mxu0 0
    %1544 = vmatpush2.bf16.xpose.msra.mxu0 0
    %1545 = vmatprep.subr.bf16.mxu0 0
    %1546 = vmatpush2.bf16.xpose.msra.mxu0 0
    %1547 = vmatprep.subr.bf16.mxu0 0
    %1548 = vmatpush2.bf16.xpose.msra.mxu0 0
    %1549 = vmatprep.subr.bf16.mxu0 0
    %1550 = vmatpush2.bf16.xpose.msra.mxu0 0
    %1551 = vmatprep.subr.bf16.mxu0 0
    %1552 = vmatpush2.bf16.xpose.msra.mxu0 0
    %1553 = vmatprep.subr.bf16.mxu0 0
    %1554 = vmatpush2.bf16.xpose.msra.mxu0 0
    %1555 = vmatprep.subr.bf16.mxu0 0
    %1556 = vmatpush2.bf16.xpose.msra.mxu0 0
    %1557 = vmatprep.mubr.bf16.mxu0 %v212
    %1558 = vmatmul.mubr.bf16.gmra.mxu0 %v211
    %v1559 = vpop.f32.mrf.mxu0
    %v1560 = vadd.f32 %v1520, %v1559
    %v1561 = vpop.f32.mrf.mxu0
    %v1562 = vpop.f32.mrf.mxu0
    %v1563 = vpop.f32.mrf.mxu0
    %1564 = vdwg.mxu0
    %1565 = vmatprep.subr.bf16.mxu0 0
    %1566 = vmatpush1.bf16.xpose.msra.mxu0 0
    %1567 = vmatprep.subr.bf16.mxu0 0
    %1568 = vmatpush1.bf16.xpose.msra.mxu0 0
    %1569 = vmatprep.subr.bf16.mxu0 0
    %1570 = vmatpush1.bf16.xpose.msra.mxu0 0
    %1571 = vmatprep.subr.bf16.mxu0 0
    %1572 = vmatpush1.bf16.xpose.msra.mxu0 0
    %1573 = vmatprep.subr.bf16.mxu0 0
    %1574 = vmatpush1.bf16.xpose.msra.mxu0 0
    %1575 = vmatprep.subr.bf16.mxu0 0
    %1576 = vmatpush1.bf16.xpose.msra.mxu0 0
    %1577 = vmatprep.subr.bf16.mxu0 0
    %1578 = vmatpush1.bf16.xpose.msra.mxu0 0
    %1579 = vmatprep.subr.bf16.mxu0 %v632
    %1580 = vmatpush1.bf16.xpose.msra.mxu0 %v631
    %1581 = vmatprep.subr.bf16.mxu0 0
    %1582 = vmatpush2.bf16.xpose.msra.mxu0 0
    %1583 = vmatprep.subr.bf16.mxu0 0
    %1584 = vmatpush2.bf16.xpose.msra.mxu0 0
    %1585 = vmatprep.subr.bf16.mxu0 0
    %1586 = vmatpush2.bf16.xpose.msra.mxu0 0
    %1587 = vmatprep.subr.bf16.mxu0 0
    %1588 = vmatpush2.bf16.xpose.msra.mxu0 0
    %1589 = vmatprep.subr.bf16.mxu0 0
    %1590 = vmatpush2.bf16.xpose.msra.mxu0 0
    %1591 = vmatprep.subr.bf16.mxu0 0
    %1592 = vmatpush2.bf16.xpose.msra.mxu0 0
    %1593 = vmatprep.subr.bf16.mxu0 0
    %1594 = vmatpush2.bf16.xpose.msra.mxu0 0
    %1595 = vmatprep.subr.bf16.mxu0 0
    %1596 = vmatpush2.bf16.xpose.msra.mxu0 0
    %1597 = vmatprep.mubr.bf16.mxu0 %v214
    %1598 = vmatmul.mubr.bf16.gmra.mxu0 %v213
    %v1599 = vpop.f32.mrf.mxu0
    %v1600 = vadd.f32 %v1560, %v1599
    %v1601 = vpop.f32.mrf.mxu0
    %v1602 = vpop.f32.mrf.mxu0
    %v1603 = vpop.f32.mrf.mxu0
    %1604 = vdwg.mxu0
    %1605 = vmatprep.subr.bf16.mxu0 0
    %1606 = vmatpush1.bf16.xpose.msra.mxu0 0
    %1607 = vmatprep.subr.bf16.mxu0 0
    %1608 = vmatpush1.bf16.xpose.msra.mxu0 0
    %1609 = vmatprep.subr.bf16.mxu0 0
    %1610 = vmatpush1.bf16.xpose.msra.mxu0 0
    %1611 = vmatprep.subr.bf16.mxu0 0
    %1612 = vmatpush1.bf16.xpose.msra.mxu0 0
    %1613 = vmatprep.subr.bf16.mxu0 0
    %1614 = vmatpush1.bf16.xpose.msra.mxu0 0
    %1615 = vmatprep.subr.bf16.mxu0 0
    %1616 = vmatpush1.bf16.xpose.msra.mxu0 0
    %1617 = vmatprep.subr.bf16.mxu0 0
    %1618 = vmatpush1.bf16.xpose.msra.mxu0 0
    %1619 = vmatprep.subr.bf16.mxu0 %v634
    %1620 = vmatpush1.bf16.xpose.msra.mxu0 %v633
    %1621 = vmatprep.subr.bf16.mxu0 0
    %1622 = vmatpush2.bf16.xpose.msra.mxu0 0
    %1623 = vmatprep.subr.bf16.mxu0 0
    %1624 = vmatpush2.bf16.xpose.msra.mxu0 0
    %1625 = vmatprep.subr.bf16.mxu0 0
    %1626 = vmatpush2.bf16.xpose.msra.mxu0 0
    %1627 = vmatprep.subr.bf16.mxu0 0
    %1628 = vmatpush2.bf16.xpose.msra.mxu0 0
    %1629 = vmatprep.subr.bf16.mxu0 0
    %1630 = vmatpush2.bf16.xpose.msra.mxu0 0
    %1631 = vmatprep.subr.bf16.mxu0 0
    %1632 = vmatpush2.bf16.xpose.msra.mxu0 0
    %1633 = vmatprep.subr.bf16.mxu0 0
    %1634 = vmatpush2.bf16.xpose.msra.mxu0 0
    %1635 = vmatprep.subr.bf16.mxu0 0
    %1636 = vmatpush2.bf16.xpose.msra.mxu0 0
    %1637 = vmatprep.mubr.bf16.mxu0 %v216
    %1638 = vmatmul.mubr.bf16.gmra.mxu0 %v215
    %v1639 = vpop.f32.mrf.mxu0
    %v1640 = vadd.f32 %v1600, %v1639
    %v1641 = vpop.f32.mrf.mxu0
    %v1642 = vpop.f32.mrf.mxu0
    %v1643 = vpop.f32.mrf.mxu0
    %1644 = vdwg.mxu0
    %1645 = vmatprep.subr.bf16.mxu0 0
    %1646 = vmatpush1.bf16.xpose.msra.mxu0 0
    %1647 = vmatprep.subr.bf16.mxu0 0
    %1648 = vmatpush1.bf16.xpose.msra.mxu0 0
    %1649 = vmatprep.subr.bf16.mxu0 0
    %1650 = vmatpush1.bf16.xpose.msra.mxu0 0
    %1651 = vmatprep.subr.bf16.mxu0 0
    %1652 = vmatpush1.bf16.xpose.msra.mxu0 0
    %1653 = vmatprep.subr.bf16.mxu0 0
    %1654 = vmatpush1.bf16.xpose.msra.mxu0 0
    %1655 = vmatprep.subr.bf16.mxu0 0
    %1656 = vmatpush1.bf16.xpose.msra.mxu0 0
    %1657 = vmatprep.subr.bf16.mxu0 0
    %1658 = vmatpush1.bf16.xpose.msra.mxu0 0
    %1659 = vmatprep.subr.bf16.mxu0 %v636
    %1660 = vmatpush1.bf16.xpose.msra.mxu0 %v635
    %1661 = vmatprep.subr.bf16.mxu0 0
    %1662 = vmatpush2.bf16.xpose.msra.mxu0 0
    %1663 = vmatprep.subr.bf16.mxu0 0
    %1664 = vmatpush2.bf16.xpose.msra.mxu0 0
    %1665 = vmatprep.subr.bf16.mxu0 0
    %1666 = vmatpush2.bf16.xpose.msra.mxu0 0
    %1667 = vmatprep.subr.bf16.mxu0 0
    %1668 = vmatpush2.bf16.xpose.msra.mxu0 0
    %1669 = vmatprep.subr.bf16.mxu0 0
    %1670 = vmatpush2.bf16.xpose.msra.mxu0 0
    %1671 = vmatprep.subr.bf16.mxu0 0
    %1672 = vmatpush2.bf16.xpose.msra.mxu0 0
    %1673 = vmatprep.subr.bf16.mxu0 0
    %1674 = vmatpush2.bf16.xpose.msra.mxu0 0
    %1675 = vmatprep.subr.bf16.mxu0 0
    %1676 = vmatpush2.bf16.xpose.msra.mxu0 0
    %1677 = vmatprep.mubr.bf16.mxu0 %v218
    %1678 = vmatmul.mubr.bf16.gmra.mxu0 %v217
    %v1679 = vpop.f32.mrf.mxu0
    %v1680 = vadd.f32 %v1640, %v1679
    %v1681 = vpop.f32.mrf.mxu0
    %v1682 = vpop.f32.mrf.mxu0
    %v1683 = vpop.f32.mrf.mxu0
    %1684 = vdwg.mxu0
    %1685 = vmatprep.subr.bf16.mxu0 0
    %1686 = vmatpush1.bf16.xpose.msra.mxu0 0
    %1687 = vmatprep.subr.bf16.mxu0 0
    %1688 = vmatpush1.bf16.xpose.msra.mxu0 0
    %1689 = vmatprep.subr.bf16.mxu0 0
    %1690 = vmatpush1.bf16.xpose.msra.mxu0 0
    %1691 = vmatprep.subr.bf16.mxu0 0
    %1692 = vmatpush1.bf16.xpose.msra.mxu0 0
    %1693 = vmatprep.subr.bf16.mxu0 0
    %1694 = vmatpush1.bf16.xpose.msra.mxu0 0
    %1695 = vmatprep.subr.bf16.mxu0 0
    %1696 = vmatpush1.bf16.xpose.msra.mxu0 0
    %1697 = vmatprep.subr.bf16.mxu0 0
    %1698 = vmatpush1.bf16.xpose.msra.mxu0 0
    %1699 = vmatprep.subr.bf16.mxu0 %v638
    %1700 = vmatpush1.bf16.xpose.msra.mxu0 %v637
    %1701 = vmatprep.subr.bf16.mxu0 0
    %1702 = vmatpush2.bf16.xpose.msra.mxu0 0
    %1703 = vmatprep.subr.bf16.mxu0 0
    %1704 = vmatpush2.bf16.xpose.msra.mxu0 0
    %1705 = vmatprep.subr.bf16.mxu0 0
    %1706 = vmatpush2.bf16.xpose.msra.mxu0 0
    %1707 = vmatprep.subr.bf16.mxu0 0
    %1708 = vmatpush2.bf16.xpose.msra.mxu0 0
    %1709 = vmatprep.subr.bf16.mxu0 0
    %1710 = vmatpush2.bf16.xpose.msra.mxu0 0
    %1711 = vmatprep.subr.bf16.mxu0 0
    %1712 = vmatpush2.bf16.xpose.msra.mxu0 0
    %1713 = vmatprep.subr.bf16.mxu0 0
    %1714 = vmatpush2.bf16.xpose.msra.mxu0 0
    %1715 = vmatprep.subr.bf16.mxu0 0
    %1716 = vmatpush2.bf16.xpose.msra.mxu0 0
    %1717 = vmatprep.mubr.bf16.mxu0 %v220
    %1718 = vmatmul.mubr.bf16.gmra.mxu0 %v219
    %v1719 = vpop.f32.mrf.mxu0
    %v1720 = vadd.f32 %v1680, %v1719
    %v1721 = vpop.f32.mrf.mxu0
    %v1722 = vpop.f32.mrf.mxu0
    %v1723 = vpop.f32.mrf.mxu0
    %1724 = vdwg.mxu0
    %1725 = vmatprep.subr.bf16.mxu0 0
    %1726 = vmatpush1.bf16.xpose.msra.mxu0 0
    %1727 = vmatprep.subr.bf16.mxu0 0
    %1728 = vmatpush1.bf16.xpose.msra.mxu0 0
    %1729 = vmatprep.subr.bf16.mxu0 0
    %1730 = vmatpush1.bf16.xpose.msra.mxu0 0
    %1731 = vmatprep.subr.bf16.mxu0 0
    %1732 = vmatpush1.bf16.xpose.msra.mxu0 0
    %1733 = vmatprep.subr.bf16.mxu0 0
    %1734 = vmatpush1.bf16.xpose.msra.mxu0 0
    %1735 = vmatprep.subr.bf16.mxu0 0
    %1736 = vmatpush1.bf16.xpose.msra.mxu0 0
    %1737 = vmatprep.subr.bf16.mxu0 0
    %1738 = vmatpush1.bf16.xpose.msra.mxu0 0
    %1739 = vmatprep.subr.bf16.mxu0 %v640
    %1740 = vmatpush1.bf16.xpose.msra.mxu0 %v639
    %1741 = vmatprep.subr.bf16.mxu0 0
    %1742 = vmatpush2.bf16.xpose.msra.mxu0 0
    %1743 = vmatprep.subr.bf16.mxu0 0
    %1744 = vmatpush2.bf16.xpose.msra.mxu0 0
    %1745 = vmatprep.subr.bf16.mxu0 0
    %1746 = vmatpush2.bf16.xpose.msra.mxu0 0
    %1747 = vmatprep.subr.bf16.mxu0 0
    %1748 = vmatpush2.bf16.xpose.msra.mxu0 0
    %1749 = vmatprep.subr.bf16.mxu0 0
    %1750 = vmatpush2.bf16.xpose.msra.mxu0 0
    %1751 = vmatprep.subr.bf16.mxu0 0
    %1752 = vmatpush2.bf16.xpose.msra.mxu0 0
    %1753 = vmatprep.subr.bf16.mxu0 0
    %1754 = vmatpush2.bf16.xpose.msra.mxu0 0
    %1755 = vmatprep.subr.bf16.mxu0 0
    %1756 = vmatpush2.bf16.xpose.msra.mxu0 0
    %1757 = vmatprep.mubr.bf16.mxu0 %v222
    %1758 = vmatmul.mubr.bf16.gmra.mxu0 %v221
    %v1759 = vpop.f32.mrf.mxu0
    %v1760 = vadd.f32 %v1720, %v1759
    %v1761 = vpop.f32.mrf.mxu0
    %v1762 = vpop.f32.mrf.mxu0
    %v1763 = vpop.f32.mrf.mxu0
    %1764 = vdwg.mxu0
    %1765 = vmatprep.subr.bf16.mxu0 0
    %1766 = vmatpush1.bf16.xpose.msra.mxu0 0
    %1767 = vmatprep.subr.bf16.mxu0 0
    %1768 = vmatpush1.bf16.xpose.msra.mxu0 0
    %1769 = vmatprep.subr.bf16.mxu0 0
    %1770 = vmatpush1.bf16.xpose.msra.mxu0 0
    %1771 = vmatprep.subr.bf16.mxu0 0
    %1772 = vmatpush1.bf16.xpose.msra.mxu0 0
    %1773 = vmatprep.subr.bf16.mxu0 0
    %1774 = vmatpush1.bf16.xpose.msra.mxu0 0
    %1775 = vmatprep.subr.bf16.mxu0 0
    %1776 = vmatpush1.bf16.xpose.msra.mxu0 0
    %1777 = vmatprep.subr.bf16.mxu0 0
    %1778 = vmatpush1.bf16.xpose.msra.mxu0 0
    %1779 = vmatprep.subr.bf16.mxu0 %v642
    %1780 = vmatpush1.bf16.xpose.msra.mxu0 %v641
    %1781 = vmatprep.subr.bf16.mxu0 0
    %1782 = vmatpush2.bf16.xpose.msra.mxu0 0
    %1783 = vmatprep.subr.bf16.mxu0 0
    %1784 = vmatpush2.bf16.xpose.msra.mxu0 0
    %1785 = vmatprep.subr.bf16.mxu0 0
    %1786 = vmatpush2.bf16.xpose.msra.mxu0 0
    %1787 = vmatprep.subr.bf16.mxu0 0
    %1788 = vmatpush2.bf16.xpose.msra.mxu0 0
    %1789 = vmatprep.subr.bf16.mxu0 0
    %1790 = vmatpush2.bf16.xpose.msra.mxu0 0
    %1791 = vmatprep.subr.bf16.mxu0 0
    %1792 = vmatpush2.bf16.xpose.msra.mxu0 0
    %1793 = vmatprep.subr.bf16.mxu0 0
    %1794 = vmatpush2.bf16.xpose.msra.mxu0 0
    %1795 = vmatprep.subr.bf16.mxu0 0
    %1796 = vmatpush2.bf16.xpose.msra.mxu0 0
    %1797 = vmatprep.mubr.bf16.mxu0 %v224
    %1798 = vmatmul.mubr.bf16.gmra.mxu0 %v223
    %v1799 = vpop.f32.mrf.mxu0
    %v1800 = vadd.f32 %v1760, %v1799
    %v1801 = vpop.f32.mrf.mxu0
    %v1802 = vpop.f32.mrf.mxu0
    %v1803 = vpop.f32.mrf.mxu0
    %1804 = vdwg.mxu0
    %1805 = vmatprep.subr.bf16.mxu0 0
    %1806 = vmatpush1.bf16.xpose.msra.mxu0 0
    %1807 = vmatprep.subr.bf16.mxu0 0
    %1808 = vmatpush1.bf16.xpose.msra.mxu0 0
    %1809 = vmatprep.subr.bf16.mxu0 0
    %1810 = vmatpush1.bf16.xpose.msra.mxu0 0
    %1811 = vmatprep.subr.bf16.mxu0 0
    %1812 = vmatpush1.bf16.xpose.msra.mxu0 0
    %1813 = vmatprep.subr.bf16.mxu0 0
    %1814 = vmatpush1.bf16.xpose.msra.mxu0 0
    %1815 = vmatprep.subr.bf16.mxu0 0
    %1816 = vmatpush1.bf16.xpose.msra.mxu0 0
    %1817 = vmatprep.subr.bf16.mxu0 0
    %1818 = vmatpush1.bf16.xpose.msra.mxu0 0
    %1819 = vmatprep.subr.bf16.mxu0 %v644
    %1820 = vmatpush1.bf16.xpose.msra.mxu0 %v643
    %1821 = vmatprep.subr.bf16.mxu0 0
    %1822 = vmatpush2.bf16.xpose.msra.mxu0 0
    %1823 = vmatprep.subr.bf16.mxu0 0
    %1824 = vmatpush2.bf16.xpose.msra.mxu0 0
    %1825 = vmatprep.subr.bf16.mxu0 0
    %1826 = vmatpush2.bf16.xpose.msra.mxu0 0
    %1827 = vmatprep.subr.bf16.mxu0 0
    %1828 = vmatpush2.bf16.xpose.msra.mxu0 0
    %1829 = vmatprep.subr.bf16.mxu0 0
    %1830 = vmatpush2.bf16.xpose.msra.mxu0 0
    %1831 = vmatprep.subr.bf16.mxu0 0
    %1832 = vmatpush2.bf16.xpose.msra.mxu0 0
    %1833 = vmatprep.subr.bf16.mxu0 0
    %1834 = vmatpush2.bf16.xpose.msra.mxu0 0
    %1835 = vmatprep.subr.bf16.mxu0 0
    %1836 = vmatpush2.bf16.xpose.msra.mxu0 0
    %1837 = vmatprep.mubr.bf16.mxu0 %v226
    %1838 = vmatmul.mubr.bf16.gmra.mxu0 %v225
    %v1839 = vpop.f32.mrf.mxu0
    %v1840 = vadd.f32 %v1800, %v1839
    %v1841 = vpop.f32.mrf.mxu0
    %v1842 = vpop.f32.mrf.mxu0
    %v1843 = vpop.f32.mrf.mxu0
    %1844 = vdwg.mxu0
    %1845 = vmatprep.subr.bf16.mxu0 0
    %1846 = vmatpush1.bf16.xpose.msra.mxu0 0
    %1847 = vmatprep.subr.bf16.mxu0 0
    %1848 = vmatpush1.bf16.xpose.msra.mxu0 0
    %1849 = vmatprep.subr.bf16.mxu0 0
    %1850 = vmatpush1.bf16.xpose.msra.mxu0 0
    %1851 = vmatprep.subr.bf16.mxu0 0
    %1852 = vmatpush1.bf16.xpose.msra.mxu0 0
    %1853 = vmatprep.subr.bf16.mxu0 0
    %1854 = vmatpush1.bf16.xpose.msra.mxu0 0
    %1855 = vmatprep.subr.bf16.mxu0 0
    %1856 = vmatpush1.bf16.xpose.msra.mxu0 0
    %1857 = vmatprep.subr.bf16.mxu0 0
    %1858 = vmatpush1.bf16.xpose.msra.mxu0 0
    %1859 = vmatprep.subr.bf16.mxu0 %v646
    %1860 = vmatpush1.bf16.xpose.msra.mxu0 %v645
    %1861 = vmatprep.subr.bf16.mxu0 0
    %1862 = vmatpush2.bf16.xpose.msra.mxu0 0
    %1863 = vmatprep.subr.bf16.mxu0 0
    %1864 = vmatpush2.bf16.xpose.msra.mxu0 0
    %1865 = vmatprep.subr.bf16.mxu0 0
    %1866 = vmatpush2.bf16.xpose.msra.mxu0 0
    %1867 = vmatprep.subr.bf16.mxu0 0
    %1868 = vmatpush2.bf16.xpose.msra.mxu0 0
    %1869 = vmatprep.subr.bf16.mxu0 0
    %1870 = vmatpush2.bf16.xpose.msra.mxu0 0
    %1871 = vmatprep.subr.bf16.mxu0 0
    %1872 = vmatpush2.bf16.xpose.msra.mxu0 0
    %1873 = vmatprep.subr.bf16.mxu0 0
    %1874 = vmatpush2.bf16.xpose.msra.mxu0 0
    %1875 = vmatprep.subr.bf16.mxu0 0
    %1876 = vmatpush2.bf16.xpose.msra.mxu0 0
    %1877 = vmatprep.mubr.bf16.mxu0 %v228
    %1878 = vmatmul.mubr.bf16.gmra.mxu0 %v227
    %v1879 = vpop.f32.mrf.mxu0
    %v1880 = vadd.f32 %v1840, %v1879
    %v1881 = vpop.f32.mrf.mxu0
    %v1882 = vpop.f32.mrf.mxu0
    %v1883 = vpop.f32.mrf.mxu0
    %1884 = vdwg.mxu0
    %1885 = vmatprep.subr.bf16.mxu0 0
    %1886 = vmatpush1.bf16.xpose.msra.mxu0 0
    %1887 = vmatprep.subr.bf16.mxu0 0
    %1888 = vmatpush1.bf16.xpose.msra.mxu0 0
    %1889 = vmatprep.subr.bf16.mxu0 0
    %1890 = vmatpush1.bf16.xpose.msra.mxu0 0
    %1891 = vmatprep.subr.bf16.mxu0 0
    %1892 = vmatpush1.bf16.xpose.msra.mxu0 0
    %1893 = vmatprep.subr.bf16.mxu0 0
    %1894 = vmatpush1.bf16.xpose.msra.mxu0 0
    %1895 = vmatprep.subr.bf16.mxu0 0
    %1896 = vmatpush1.bf16.xpose.msra.mxu0 0
    %1897 = vmatprep.subr.bf16.mxu0 0
    %1898 = vmatpush1.bf16.xpose.msra.mxu0 0
    %1899 = vmatprep.subr.bf16.mxu0 %v648
    %1900 = vmatpush1.bf16.xpose.msra.mxu0 %v647
    %1901 = vmatprep.subr.bf16.mxu0 0
    %1902 = vmatpush2.bf16.xpose.msra.mxu0 0
    %1903 = vmatprep.subr.bf16.mxu0 0
    %1904 = vmatpush2.bf16.xpose.msra.mxu0 0
    %1905 = vmatprep.subr.bf16.mxu0 0
    %1906 = vmatpush2.bf16.xpose.msra.mxu0 0
    %1907 = vmatprep.subr.bf16.mxu0 0
    %1908 = vmatpush2.bf16.xpose.msra.mxu0 0
    %1909 = vmatprep.subr.bf16.mxu0 0
    %1910 = vmatpush2.bf16.xpose.msra.mxu0 0
    %1911 = vmatprep.subr.bf16.mxu0 0
    %1912 = vmatpush2.bf16.xpose.msra.mxu0 0
    %1913 = vmatprep.subr.bf16.mxu0 0
    %1914 = vmatpush2.bf16.xpose.msra.mxu0 0
    %1915 = vmatprep.subr.bf16.mxu0 0
    %1916 = vmatpush2.bf16.xpose.msra.mxu0 0
    %1917 = vmatprep.mubr.bf16.mxu0 %v230
    %1918 = vmatmul.mubr.bf16.gmra.mxu0 %v229
    %v1919 = vpop.f32.mrf.mxu0
    %v1920 = vadd.f32 %v1880, %v1919
    %v1921 = vpop.f32.mrf.mxu0
    %v1922 = vpop.f32.mrf.mxu0
    %v1923 = vpop.f32.mrf.mxu0
    %1924 = vdwg.mxu0
    %1925 = vmatprep.subr.bf16.mxu0 0
    %1926 = vmatpush1.bf16.xpose.msra.mxu0 0
    %1927 = vmatprep.subr.bf16.mxu0 0
    %1928 = vmatpush1.bf16.xpose.msra.mxu0 0
    %1929 = vmatprep.subr.bf16.mxu0 0
    %1930 = vmatpush1.bf16.xpose.msra.mxu0 0
    %1931 = vmatprep.subr.bf16.mxu0 0
    %1932 = vmatpush1.bf16.xpose.msra.mxu0 0
    %1933 = vmatprep.subr.bf16.mxu0 0
    %1934 = vmatpush1.bf16.xpose.msra.mxu0 0
    %1935 = vmatprep.subr.bf16.mxu0 0
    %1936 = vmatpush1.bf16.xpose.msra.mxu0 0
    %1937 = vmatprep.subr.bf16.mxu0 0
    %1938 = vmatpush1.bf16.xpose.msra.mxu0 0
    %1939 = vmatprep.subr.bf16.mxu0 %v650
    %1940 = vmatpush1.bf16.xpose.msra.mxu0 %v649
    %1941 = vmatprep.subr.bf16.mxu0 0
    %1942 = vmatpush2.bf16.xpose.msra.mxu0 0
    %1943 = vmatprep.subr.bf16.mxu0 0
    %1944 = vmatpush2.bf16.xpose.msra.mxu0 0
    %1945 = vmatprep.subr.bf16.mxu0 0
    %1946 = vmatpush2.bf16.xpose.msra.mxu0 0
    %1947 = vmatprep.subr.bf16.mxu0 0
    %1948 = vmatpush2.bf16.xpose.msra.mxu0 0
    %1949 = vmatprep.subr.bf16.mxu0 0
    %1950 = vmatpush2.bf16.xpose.msra.mxu0 0
    %1951 = vmatprep.subr.bf16.mxu0 0
    %1952 = vmatpush2.bf16.xpose.msra.mxu0 0
    %1953 = vmatprep.subr.bf16.mxu0 0
    %1954 = vmatpush2.bf16.xpose.msra.mxu0 0
    %1955 = vmatprep.subr.bf16.mxu0 0
    %1956 = vmatpush2.bf16.xpose.msra.mxu0 0
    %1957 = vmatprep.mubr.bf16.mxu0 %v232
    %1958 = vmatmul.mubr.bf16.gmra.mxu0 %v231
    %v1959 = vpop.f32.mrf.mxu0
    %v1960 = vadd.f32 %v1920, %v1959
    %v1961 = vpop.f32.mrf.mxu0
    %v1962 = vpop.f32.mrf.mxu0
    %v1963 = vpop.f32.mrf.mxu0
    %1964 = vdwg.mxu0
    %1965 = vmatprep.subr.bf16.mxu0 0
    %1966 = vmatpush1.bf16.xpose.msra.mxu0 0
    %1967 = vmatprep.subr.bf16.mxu0 0
    %1968 = vmatpush1.bf16.xpose.msra.mxu0 0
    %1969 = vmatprep.subr.bf16.mxu0 0
    %1970 = vmatpush1.bf16.xpose.msra.mxu0 0
    %1971 = vmatprep.subr.bf16.mxu0 0
    %1972 = vmatpush1.bf16.xpose.msra.mxu0 0
    %1973 = vmatprep.subr.bf16.mxu0 0
    %1974 = vmatpush1.bf16.xpose.msra.mxu0 0
    %1975 = vmatprep.subr.bf16.mxu0 0
    %1976 = vmatpush1.bf16.xpose.msra.mxu0 0
    %1977 = vmatprep.subr.bf16.mxu0 0
    %1978 = vmatpush1.bf16.xpose.msra.mxu0 0
    %1979 = vmatprep.subr.bf16.mxu0 %v652
    %1980 = vmatpush1.bf16.xpose.msra.mxu0 %v651
    %1981 = vmatprep.subr.bf16.mxu0 0
    %1982 = vmatpush2.bf16.xpose.msra.mxu0 0
    %1983 = vmatprep.subr.bf16.mxu0 0
    %1984 = vmatpush2.bf16.xpose.msra.mxu0 0
    %1985 = vmatprep.subr.bf16.mxu0 0
    %1986 = vmatpush2.bf16.xpose.msra.mxu0 0
    %1987 = vmatprep.subr.bf16.mxu0 0
    %1988 = vmatpush2.bf16.xpose.msra.mxu0 0
    %1989 = vmatprep.subr.bf16.mxu0 0
    %1990 = vmatpush2.bf16.xpose.msra.mxu0 0
    %1991 = vmatprep.subr.bf16.mxu0 0
    %1992 = vmatpush2.bf16.xpose.msra.mxu0 0
    %1993 = vmatprep.subr.bf16.mxu0 0
    %1994 = vmatpush2.bf16.xpose.msra.mxu0 0
    %1995 = vmatprep.subr.bf16.mxu0 0
    %1996 = vmatpush2.bf16.xpose.msra.mxu0 0
    %1997 = vmatprep.mubr.bf16.mxu0 %v234
    %1998 = vmatmul.mubr.bf16.gmra.mxu0 %v233
    %v1999 = vpop.f32.mrf.mxu0
    %v2000 = vadd.f32 %v1960, %v1999
    %v2001 = vpop.f32.mrf.mxu0
    %v2002 = vpop.f32.mrf.mxu0
    %v2003 = vpop.f32.mrf.mxu0
    %2004 = vdwg.mxu0
    %2005 = vmatprep.subr.bf16.mxu0 0
    %2006 = vmatpush1.bf16.xpose.msra.mxu0 0
    %2007 = vmatprep.subr.bf16.mxu0 0
    %2008 = vmatpush1.bf16.xpose.msra.mxu0 0
    %2009 = vmatprep.subr.bf16.mxu0 0
    %2010 = vmatpush1.bf16.xpose.msra.mxu0 0
    %2011 = vmatprep.subr.bf16.mxu0 0
    %2012 = vmatpush1.bf16.xpose.msra.mxu0 0
    %2013 = vmatprep.subr.bf16.mxu0 0
    %2014 = vmatpush1.bf16.xpose.msra.mxu0 0
    %2015 = vmatprep.subr.bf16.mxu0 0
    %2016 = vmatpush1.bf16.xpose.msra.mxu0 0
    %2017 = vmatprep.subr.bf16.mxu0 0
    %2018 = vmatpush1.bf16.xpose.msra.mxu0 0
    %2019 = vmatprep.subr.bf16.mxu0 %v654
    %2020 = vmatpush1.bf16.xpose.msra.mxu0 %v653
    %2021 = vmatprep.subr.bf16.mxu0 0
    %2022 = vmatpush2.bf16.xpose.msra.mxu0 0
    %2023 = vmatprep.subr.bf16.mxu0 0
    %2024 = vmatpush2.bf16.xpose.msra.mxu0 0
    %2025 = vmatprep.subr.bf16.mxu0 0
    %2026 = vmatpush2.bf16.xpose.msra.mxu0 0
    %2027 = vmatprep.subr.bf16.mxu0 0
    %2028 = vmatpush2.bf16.xpose.msra.mxu0 0
    %2029 = vmatprep.subr.bf16.mxu0 0
    %2030 = vmatpush2.bf16.xpose.msra.mxu0 0
    %2031 = vmatprep.subr.bf16.mxu0 0
    %2032 = vmatpush2.bf16.xpose.msra.mxu0 0
    %2033 = vmatprep.subr.bf16.mxu0 0
    %2034 = vmatpush2.bf16.xpose.msra.mxu0 0
    %2035 = vmatprep.subr.bf16.mxu0 0
    %2036 = vmatpush2.bf16.xpose.msra.mxu0 0
    %2037 = vmatprep.mubr.bf16.mxu0 %v236
    %2038 = vmatmul.mubr.bf16.gmra.mxu0 %v235
    %v2039 = vpop.f32.mrf.mxu0
    %v2040 = vadd.f32 %v2000, %v2039
    %v2041 = vpop.f32.mrf.mxu0
    %v2042 = vpop.f32.mrf.mxu0
    %v2043 = vpop.f32.mrf.mxu0
    %2044 = vdwg.mxu0
    %2045 = vmatprep.subr.bf16.mxu0 0
    %2046 = vmatpush1.bf16.xpose.msra.mxu0 0
    %2047 = vmatprep.subr.bf16.mxu0 0
    %2048 = vmatpush1.bf16.xpose.msra.mxu0 0
    %2049 = vmatprep.subr.bf16.mxu0 0
    %2050 = vmatpush1.bf16.xpose.msra.mxu0 0
    %2051 = vmatprep.subr.bf16.mxu0 0
    %2052 = vmatpush1.bf16.xpose.msra.mxu0 0
    %2053 = vmatprep.subr.bf16.mxu0 0
    %2054 = vmatpush1.bf16.xpose.msra.mxu0 0
    %2055 = vmatprep.subr.bf16.mxu0 0
    %2056 = vmatpush1.bf16.xpose.msra.mxu0 0
    %2057 = vmatprep.subr.bf16.mxu0 0
    %2058 = vmatpush1.bf16.xpose.msra.mxu0 0
    %2059 = vmatprep.subr.bf16.mxu0 %v656
    %2060 = vmatpush1.bf16.xpose.msra.mxu0 %v655
    %2061 = vmatprep.subr.bf16.mxu0 0
    %2062 = vmatpush2.bf16.xpose.msra.mxu0 0
    %2063 = vmatprep.subr.bf16.mxu0 0
    %2064 = vmatpush2.bf16.xpose.msra.mxu0 0
    %2065 = vmatprep.subr.bf16.mxu0 0
    %2066 = vmatpush2.bf16.xpose.msra.mxu0 0
    %2067 = vmatprep.subr.bf16.mxu0 0
    %2068 = vmatpush2.bf16.xpose.msra.mxu0 0
    %2069 = vmatprep.subr.bf16.mxu0 0
    %2070 = vmatpush2.bf16.xpose.msra.mxu0 0
    %2071 = vmatprep.subr.bf16.mxu0 0
    %2072 = vmatpush2.bf16.xpose.msra.mxu0 0
    %2073 = vmatprep.subr.bf16.mxu0 0
    %2074 = vmatpush2.bf16.xpose.msra.mxu0 0
    %2075 = vmatprep.subr.bf16.mxu0 0
    %2076 = vmatpush2.bf16.xpose.msra.mxu0 0
    %2077 = vmatprep.mubr.bf16.mxu0 %v238
    %2078 = vmatmul.mubr.bf16.gmra.mxu0 %v237
    %v2079 = vpop.f32.mrf.mxu0
    %v2080 = vadd.f32 %v2040, %v2079
    %v2081 = vpop.f32.mrf.mxu0
    %v2082 = vpop.f32.mrf.mxu0
    %v2083 = vpop.f32.mrf.mxu0
    %2084 = vdwg.mxu0
    %2085 = vmatprep.subr.bf16.mxu0 0
    %2086 = vmatpush1.bf16.xpose.msra.mxu0 0
    %2087 = vmatprep.subr.bf16.mxu0 0
    %2088 = vmatpush1.bf16.xpose.msra.mxu0 0
    %2089 = vmatprep.subr.bf16.mxu0 0
    %2090 = vmatpush1.bf16.xpose.msra.mxu0 0
    %2091 = vmatprep.subr.bf16.mxu0 0
    %2092 = vmatpush1.bf16.xpose.msra.mxu0 0
    %2093 = vmatprep.subr.bf16.mxu0 0
    %2094 = vmatpush1.bf16.xpose.msra.mxu0 0
    %2095 = vmatprep.subr.bf16.mxu0 0
    %2096 = vmatpush1.bf16.xpose.msra.mxu0 0
    %2097 = vmatprep.subr.bf16.mxu0 0
    %2098 = vmatpush1.bf16.xpose.msra.mxu0 0
    %2099 = vmatprep.subr.bf16.mxu0 %v658
    %2100 = vmatpush1.bf16.xpose.msra.mxu0 %v657
    %2101 = vmatprep.subr.bf16.mxu0 0
    %2102 = vmatpush2.bf16.xpose.msra.mxu0 0
    %2103 = vmatprep.subr.bf16.mxu0 0
    %2104 = vmatpush2.bf16.xpose.msra.mxu0 0
    %2105 = vmatprep.subr.bf16.mxu0 0
    %2106 = vmatpush2.bf16.xpose.msra.mxu0 0
    %2107 = vmatprep.subr.bf16.mxu0 0
    %2108 = vmatpush2.bf16.xpose.msra.mxu0 0
    %2109 = vmatprep.subr.bf16.mxu0 0
    %2110 = vmatpush2.bf16.xpose.msra.mxu0 0
    %2111 = vmatprep.subr.bf16.mxu0 0
    %2112 = vmatpush2.bf16.xpose.msra.mxu0 0
    %2113 = vmatprep.subr.bf16.mxu0 0
    %2114 = vmatpush2.bf16.xpose.msra.mxu0 0
    %2115 = vmatprep.subr.bf16.mxu0 0
    %2116 = vmatpush2.bf16.xpose.msra.mxu0 0
    %2117 = vmatprep.mubr.bf16.mxu0 %v240
    %2118 = vmatmul.mubr.bf16.gmra.mxu0 %v239
    %v2119 = vpop.f32.mrf.mxu0
    %v2120 = vadd.f32 %v2080, %v2119
    %v2121 = vpop.f32.mrf.mxu0
    %v2122 = vpop.f32.mrf.mxu0
    %v2123 = vpop.f32.mrf.mxu0
    %2124 = vdwg.mxu0
    %2125 = vmatprep.subr.bf16.mxu0 0
    %2126 = vmatpush1.bf16.xpose.msra.mxu0 0
    %2127 = vmatprep.subr.bf16.mxu0 0
    %2128 = vmatpush1.bf16.xpose.msra.mxu0 0
    %2129 = vmatprep.subr.bf16.mxu0 0
    %2130 = vmatpush1.bf16.xpose.msra.mxu0 0
    %2131 = vmatprep.subr.bf16.mxu0 0
    %2132 = vmatpush1.bf16.xpose.msra.mxu0 0
    %2133 = vmatprep.subr.bf16.mxu0 0
    %2134 = vmatpush1.bf16.xpose.msra.mxu0 0
    %2135 = vmatprep.subr.bf16.mxu0 0
    %2136 = vmatpush1.bf16.xpose.msra.mxu0 0
    %2137 = vmatprep.subr.bf16.mxu0 0
    %2138 = vmatpush1.bf16.xpose.msra.mxu0 0
    %2139 = vmatprep.subr.bf16.mxu0 %v660
    %2140 = vmatpush1.bf16.xpose.msra.mxu0 %v659
    %2141 = vmatprep.subr.bf16.mxu0 0
    %2142 = vmatpush2.bf16.xpose.msra.mxu0 0
    %2143 = vmatprep.subr.bf16.mxu0 0
    %2144 = vmatpush2.bf16.xpose.msra.mxu0 0
    %2145 = vmatprep.subr.bf16.mxu0 0
    %2146 = vmatpush2.bf16.xpose.msra.mxu0 0
    %2147 = vmatprep.subr.bf16.mxu0 0
    %2148 = vmatpush2.bf16.xpose.msra.mxu0 0
    %2149 = vmatprep.subr.bf16.mxu0 0
    %2150 = vmatpush2.bf16.xpose.msra.mxu0 0
    %2151 = vmatprep.subr.bf16.mxu0 0
    %2152 = vmatpush2.bf16.xpose.msra.mxu0 0
    %2153 = vmatprep.subr.bf16.mxu0 0
    %2154 = vmatpush2.bf16.xpose.msra.mxu0 0
    %2155 = vmatprep.subr.bf16.mxu0 0
    %2156 = vmatpush2.bf16.xpose.msra.mxu0 0
    %2157 = vmatprep.mubr.bf16.mxu0 %v242
    %2158 = vmatmul.mubr.bf16.gmra.mxu0 %v241
    %v2159 = vpop.f32.mrf.mxu0
    %v2160 = vadd.f32 %v2120, %v2159
    %v2161 = vpop.f32.mrf.mxu0
    %v2162 = vpop.f32.mrf.mxu0
    %v2163 = vpop.f32.mrf.mxu0
    %2164 = vdwg.mxu0
    %2165 = vmatprep.subr.bf16.mxu0 0
    %2166 = vmatpush1.bf16.xpose.msra.mxu0 0
    %2167 = vmatprep.subr.bf16.mxu0 0
    %2168 = vmatpush1.bf16.xpose.msra.mxu0 0
    %2169 = vmatprep.subr.bf16.mxu0 0
    %2170 = vmatpush1.bf16.xpose.msra.mxu0 0
    %2171 = vmatprep.subr.bf16.mxu0 0
    %2172 = vmatpush1.bf16.xpose.msra.mxu0 0
    %2173 = vmatprep.subr.bf16.mxu0 0
    %2174 = vmatpush1.bf16.xpose.msra.mxu0 0
    %2175 = vmatprep.subr.bf16.mxu0 0
    %2176 = vmatpush1.bf16.xpose.msra.mxu0 0
    %2177 = vmatprep.subr.bf16.mxu0 0
    %2178 = vmatpush1.bf16.xpose.msra.mxu0 0
    %2179 = vmatprep.subr.bf16.mxu0 %v662
    %2180 = vmatpush1.bf16.xpose.msra.mxu0 %v661
    %2181 = vmatprep.subr.bf16.mxu0 0
    %2182 = vmatpush2.bf16.xpose.msra.mxu0 0
    %2183 = vmatprep.subr.bf16.mxu0 0
    %2184 = vmatpush2.bf16.xpose.msra.mxu0 0
    %2185 = vmatprep.subr.bf16.mxu0 0
    %2186 = vmatpush2.bf16.xpose.msra.mxu0 0
    %2187 = vmatprep.subr.bf16.mxu0 0
    %2188 = vmatpush2.bf16.xpose.msra.mxu0 0
    %2189 = vmatprep.subr.bf16.mxu0 0
    %2190 = vmatpush2.bf16.xpose.msra.mxu0 0
    %2191 = vmatprep.subr.bf16.mxu0 0
    %2192 = vmatpush2.bf16.xpose.msra.mxu0 0
    %2193 = vmatprep.subr.bf16.mxu0 0
    %2194 = vmatpush2.bf16.xpose.msra.mxu0 0
    %2195 = vmatprep.subr.bf16.mxu0 0
    %2196 = vmatpush2.bf16.xpose.msra.mxu0 0
    %2197 = vmatprep.mubr.bf16.mxu0 %v244
    %2198 = vmatmul.mubr.bf16.gmra.mxu0 %v243
    %v2199 = vpop.f32.mrf.mxu0
    %v2200 = vadd.f32 %v2160, %v2199
    %v2201 = vpop.f32.mrf.mxu0
    %v2202 = vpop.f32.mrf.mxu0
    %v2203 = vpop.f32.mrf.mxu0
    %2204 = vdwg.mxu0
    %2205 = vmatprep.subr.bf16.mxu0 0
    %2206 = vmatpush1.bf16.xpose.msra.mxu0 0
    %2207 = vmatprep.subr.bf16.mxu0 0
    %2208 = vmatpush1.bf16.xpose.msra.mxu0 0
    %2209 = vmatprep.subr.bf16.mxu0 0
    %2210 = vmatpush1.bf16.xpose.msra.mxu0 0
    %2211 = vmatprep.subr.bf16.mxu0 0
    %2212 = vmatpush1.bf16.xpose.msra.mxu0 0
    %2213 = vmatprep.subr.bf16.mxu0 0
    %2214 = vmatpush1.bf16.xpose.msra.mxu0 0
    %2215 = vmatprep.subr.bf16.mxu0 0
    %2216 = vmatpush1.bf16.xpose.msra.mxu0 0
    %2217 = vmatprep.subr.bf16.mxu0 0
    %2218 = vmatpush1.bf16.xpose.msra.mxu0 0
    %2219 = vmatprep.subr.bf16.mxu0 %v664
    %2220 = vmatpush1.bf16.xpose.msra.mxu0 %v663
    %2221 = vmatprep.subr.bf16.mxu0 0
    %2222 = vmatpush2.bf16.xpose.msra.mxu0 0
    %2223 = vmatprep.subr.bf16.mxu0 0
    %2224 = vmatpush2.bf16.xpose.msra.mxu0 0
    %2225 = vmatprep.subr.bf16.mxu0 0
    %2226 = vmatpush2.bf16.xpose.msra.mxu0 0
    %2227 = vmatprep.subr.bf16.mxu0 0
    %2228 = vmatpush2.bf16.xpose.msra.mxu0 0
    %2229 = vmatprep.subr.bf16.mxu0 0
    %2230 = vmatpush2.bf16.xpose.msra.mxu0 0
    %2231 = vmatprep.subr.bf16.mxu0 0
    %2232 = vmatpush2.bf16.xpose.msra.mxu0 0
    %2233 = vmatprep.subr.bf16.mxu0 0
    %2234 = vmatpush2.bf16.xpose.msra.mxu0 0
    %2235 = vmatprep.subr.bf16.mxu0 0
    %2236 = vmatpush2.bf16.xpose.msra.mxu0 0
    %2237 = vmatprep.mubr.bf16.mxu0 %v246
    %2238 = vmatmul.mubr.bf16.gmra.mxu0 %v245
    %v2239 = vpop.f32.mrf.mxu0
    %v2240 = vadd.f32 %v2200, %v2239
    %v2241 = vpop.f32.mrf.mxu0
    %v2242 = vpop.f32.mrf.mxu0
    %v2243 = vpop.f32.mrf.mxu0
    %2244 = vdwg.mxu0
    %2245 = vmatprep.subr.bf16.mxu0 0
    %2246 = vmatpush1.bf16.xpose.msra.mxu0 0
    %2247 = vmatprep.subr.bf16.mxu0 0
    %2248 = vmatpush1.bf16.xpose.msra.mxu0 0
    %2249 = vmatprep.subr.bf16.mxu0 0
    %2250 = vmatpush1.bf16.xpose.msra.mxu0 0
    %2251 = vmatprep.subr.bf16.mxu0 0
    %2252 = vmatpush1.bf16.xpose.msra.mxu0 0
    %2253 = vmatprep.subr.bf16.mxu0 0
    %2254 = vmatpush1.bf16.xpose.msra.mxu0 0
    %2255 = vmatprep.subr.bf16.mxu0 0
    %2256 = vmatpush1.bf16.xpose.msra.mxu0 0
    %2257 = vmatprep.subr.bf16.mxu0 0
    %2258 = vmatpush1.bf16.xpose.msra.mxu0 0
    %2259 = vmatprep.subr.bf16.mxu0 %v666
    %2260 = vmatpush1.bf16.xpose.msra.mxu0 %v665
    %2261 = vmatprep.subr.bf16.mxu0 0
    %2262 = vmatpush2.bf16.xpose.msra.mxu0 0
    %2263 = vmatprep.subr.bf16.mxu0 0
    %2264 = vmatpush2.bf16.xpose.msra.mxu0 0
    %2265 = vmatprep.subr.bf16.mxu0 0
    %2266 = vmatpush2.bf16.xpose.msra.mxu0 0
    %2267 = vmatprep.subr.bf16.mxu0 0
    %2268 = vmatpush2.bf16.xpose.msra.mxu0 0
    %2269 = vmatprep.subr.bf16.mxu0 0
    %2270 = vmatpush2.bf16.xpose.msra.mxu0 0
    %2271 = vmatprep.subr.bf16.mxu0 0
    %2272 = vmatpush2.bf16.xpose.msra.mxu0 0
    %2273 = vmatprep.subr.bf16.mxu0 0
    %2274 = vmatpush2.bf16.xpose.msra.mxu0 0
    %2275 = vmatprep.subr.bf16.mxu0 0
    %2276 = vmatpush2.bf16.xpose.msra.mxu0 0
    %2277 = vmatprep.mubr.bf16.mxu0 %v248
    %2278 = vmatmul.mubr.bf16.gmra.mxu0 %v247
    %v2279 = vpop.f32.mrf.mxu0
    %v2280 = vadd.f32 %v2240, %v2279
    %v2281 = vpop.f32.mrf.mxu0
    %v2282 = vpop.f32.mrf.mxu0
    %v2283 = vpop.f32.mrf.mxu0
    %2284 = vdwg.mxu0
    %2285 = vmatprep.subr.bf16.mxu0 0
    %2286 = vmatpush1.bf16.xpose.msra.mxu0 0
    %2287 = vmatprep.subr.bf16.mxu0 0
    %2288 = vmatpush1.bf16.xpose.msra.mxu0 0
    %2289 = vmatprep.subr.bf16.mxu0 0
    %2290 = vmatpush1.bf16.xpose.msra.mxu0 0
    %2291 = vmatprep.subr.bf16.mxu0 0
    %2292 = vmatpush1.bf16.xpose.msra.mxu0 0
    %2293 = vmatprep.subr.bf16.mxu0 0
    %2294 = vmatpush1.bf16.xpose.msra.mxu0 0
    %2295 = vmatprep.subr.bf16.mxu0 0
    %2296 = vmatpush1.bf16.xpose.msra.mxu0 0
    %2297 = vmatprep.subr.bf16.mxu0 0
    %2298 = vmatpush1.bf16.xpose.msra.mxu0 0
    %2299 = vmatprep.subr.bf16.mxu0 %v668
    %2300 = vmatpush1.bf16.xpose.msra.mxu0 %v667
    %2301 = vmatprep.subr.bf16.mxu0 0
    %2302 = vmatpush2.bf16.xpose.msra.mxu0 0
    %2303 = vmatprep.subr.bf16.mxu0 0
    %2304 = vmatpush2.bf16.xpose.msra.mxu0 0
    %2305 = vmatprep.subr.bf16.mxu0 0
    %2306 = vmatpush2.bf16.xpose.msra.mxu0 0
    %2307 = vmatprep.subr.bf16.mxu0 0
    %2308 = vmatpush2.bf16.xpose.msra.mxu0 0
    %2309 = vmatprep.subr.bf16.mxu0 0
    %2310 = vmatpush2.bf16.xpose.msra.mxu0 0
    %2311 = vmatprep.subr.bf16.mxu0 0
    %2312 = vmatpush2.bf16.xpose.msra.mxu0 0
    %2313 = vmatprep.subr.bf16.mxu0 0
    %2314 = vmatpush2.bf16.xpose.msra.mxu0 0
    %2315 = vmatprep.subr.bf16.mxu0 0
    %2316 = vmatpush2.bf16.xpose.msra.mxu0 0
    %2317 = vmatprep.mubr.bf16.mxu0 %v250
    %2318 = vmatmul.mubr.bf16.gmra.mxu0 %v249
    %v2319 = vpop.f32.mrf.mxu0
    %v2320 = vadd.f32 %v2280, %v2319
    %v2321 = vpop.f32.mrf.mxu0
    %v2322 = vpop.f32.mrf.mxu0
    %v2323 = vpop.f32.mrf.mxu0
    %2324 = vdwg.mxu0
    %2325 = vmatprep.subr.bf16.mxu0 0
    %2326 = vmatpush1.bf16.xpose.msra.mxu0 0
    %2327 = vmatprep.subr.bf16.mxu0 0
    %2328 = vmatpush1.bf16.xpose.msra.mxu0 0
    %2329 = vmatprep.subr.bf16.mxu0 0
    %2330 = vmatpush1.bf16.xpose.msra.mxu0 0
    %2331 = vmatprep.subr.bf16.mxu0 0
    %2332 = vmatpush1.bf16.xpose.msra.mxu0 0
    %2333 = vmatprep.subr.bf16.mxu0 0
    %2334 = vmatpush1.bf16.xpose.msra.mxu0 0
    %2335 = vmatprep.subr.bf16.mxu0 0
    %2336 = vmatpush1.bf16.xpose.msra.mxu0 0
    %2337 = vmatprep.subr.bf16.mxu0 0
    %2338 = vmatpush1.bf16.xpose.msra.mxu0 0
    %2339 = vmatprep.subr.bf16.mxu0 %v670
    %2340 = vmatpush1.bf16.xpose.msra.mxu0 %v669
    %2341 = vmatprep.subr.bf16.mxu0 0
    %2342 = vmatpush2.bf16.xpose.msra.mxu0 0
    %2343 = vmatprep.subr.bf16.mxu0 0
    %2344 = vmatpush2.bf16.xpose.msra.mxu0 0
    %2345 = vmatprep.subr.bf16.mxu0 0
    %2346 = vmatpush2.bf16.xpose.msra.mxu0 0
    %2347 = vmatprep.subr.bf16.mxu0 0
    %2348 = vmatpush2.bf16.xpose.msra.mxu0 0
    %2349 = vmatprep.subr.bf16.mxu0 0
    %2350 = vmatpush2.bf16.xpose.msra.mxu0 0
    %2351 = vmatprep.subr.bf16.mxu0 0
    %2352 = vmatpush2.bf16.xpose.msra.mxu0 0
    %2353 = vmatprep.subr.bf16.mxu0 0
    %2354 = vmatpush2.bf16.xpose.msra.mxu0 0
    %2355 = vmatprep.subr.bf16.mxu0 0
    %2356 = vmatpush2.bf16.xpose.msra.mxu0 0
    %2357 = vmatprep.mubr.bf16.mxu0 %v252
    %2358 = vmatmul.mubr.bf16.gmra.mxu0 %v251
    %v2359 = vpop.f32.mrf.mxu0
    %v2360 = vadd.f32 %v2320, %v2359
    %v2361 = vpop.f32.mrf.mxu0
    %v2362 = vpop.f32.mrf.mxu0
    %v2363 = vpop.f32.mrf.mxu0
    %2364 = vdwg.mxu0
    %2365 = vmatprep.subr.bf16.mxu0 0
    %2366 = vmatpush1.bf16.xpose.msra.mxu0 0
    %2367 = vmatprep.subr.bf16.mxu0 0
    %2368 = vmatpush1.bf16.xpose.msra.mxu0 0
    %2369 = vmatprep.subr.bf16.mxu0 0
    %2370 = vmatpush1.bf16.xpose.msra.mxu0 0
    %2371 = vmatprep.subr.bf16.mxu0 0
    %2372 = vmatpush1.bf16.xpose.msra.mxu0 0
    %2373 = vmatprep.subr.bf16.mxu0 0
    %2374 = vmatpush1.bf16.xpose.msra.mxu0 0
    %2375 = vmatprep.subr.bf16.mxu0 0
    %2376 = vmatpush1.bf16.xpose.msra.mxu0 0
    %2377 = vmatprep.subr.bf16.mxu0 0
    %2378 = vmatpush1.bf16.xpose.msra.mxu0 0
    %2379 = vmatprep.subr.bf16.mxu0 %v672
    %2380 = vmatpush1.bf16.xpose.msra.mxu0 %v671
    %2381 = vmatprep.subr.bf16.mxu0 0
    %2382 = vmatpush2.bf16.xpose.msra.mxu0 0
    %2383 = vmatprep.subr.bf16.mxu0 0
    %2384 = vmatpush2.bf16.xpose.msra.mxu0 0
    %2385 = vmatprep.subr.bf16.mxu0 0
    %2386 = vmatpush2.bf16.xpose.msra.mxu0 0
    %2387 = vmatprep.subr.bf16.mxu0 0
    %2388 = vmatpush2.bf16.xpose.msra.mxu0 0
    %2389 = vmatprep.subr.bf16.mxu0 0
    %2390 = vmatpush2.bf16.xpose.msra.mxu0 0
    %2391 = vmatprep.subr.bf16.mxu0 0
    %2392 = vmatpush2.bf16.xpose.msra.mxu0 0
    %2393 = vmatprep.subr.bf16.mxu0 0
    %2394 = vmatpush2.bf16.xpose.msra.mxu0 0
    %2395 = vmatprep.subr.bf16.mxu0 0
    %2396 = vmatpush2.bf16.xpose.msra.mxu0 0
    %2397 = vmatprep.mubr.bf16.mxu0 %v254
    %2398 = vmatmul.mubr.bf16.gmra.mxu0 %v253
    %v2399 = vpop.f32.mrf.mxu0
    %v2400 = vadd.f32 %v2360, %v2399
    %v2401 = vpop.f32.mrf.mxu0
    %v2402 = vpop.f32.mrf.mxu0
    %v2403 = vpop.f32.mrf.mxu0
    %2404 = vdwg.mxu0
    %2405 = vmatprep.subr.bf16.mxu0 0
    %2406 = vmatpush1.bf16.xpose.msra.mxu0 0
    %2407 = vmatprep.subr.bf16.mxu0 0
    %2408 = vmatpush1.bf16.xpose.msra.mxu0 0
    %2409 = vmatprep.subr.bf16.mxu0 0
    %2410 = vmatpush1.bf16.xpose.msra.mxu0 0
    %2411 = vmatprep.subr.bf16.mxu0 0
    %2412 = vmatpush1.bf16.xpose.msra.mxu0 0
    %2413 = vmatprep.subr.bf16.mxu0 0
    %2414 = vmatpush1.bf16.xpose.msra.mxu0 0
    %2415 = vmatprep.subr.bf16.mxu0 0
    %2416 = vmatpush1.bf16.xpose.msra.mxu0 0
    %2417 = vmatprep.subr.bf16.mxu0 0
    %2418 = vmatpush1.bf16.xpose.msra.mxu0 0
    %2419 = vmatprep.subr.bf16.mxu0 %v674
    %2420 = vmatpush1.bf16.xpose.msra.mxu0 %v673
    %2421 = vmatprep.subr.bf16.mxu0 0
    %2422 = vmatpush2.bf16.xpose.msra.mxu0 0
    %2423 = vmatprep.subr.bf16.mxu0 0
    %2424 = vmatpush2.bf16.xpose.msra.mxu0 0
    %2425 = vmatprep.subr.bf16.mxu0 0
    %2426 = vmatpush2.bf16.xpose.msra.mxu0 0
    %2427 = vmatprep.subr.bf16.mxu0 0
    %2428 = vmatpush2.bf16.xpose.msra.mxu0 0
    %2429 = vmatprep.subr.bf16.mxu0 0
    %2430 = vmatpush2.bf16.xpose.msra.mxu0 0
    %2431 = vmatprep.subr.bf16.mxu0 0
    %2432 = vmatpush2.bf16.xpose.msra.mxu0 0
    %2433 = vmatprep.subr.bf16.mxu0 0
    %2434 = vmatpush2.bf16.xpose.msra.mxu0 0
    %2435 = vmatprep.subr.bf16.mxu0 0
    %2436 = vmatpush2.bf16.xpose.msra.mxu0 0
    %2437 = vmatprep.mubr.bf16.mxu0 %v256
    %2438 = vmatmul.mubr.bf16.gmra.mxu0 %v255
    %v2439 = vpop.f32.mrf.mxu0
    %v2440 = vadd.f32 %v2400, %v2439
    %v2441 = vpop.f32.mrf.mxu0
    %v2442 = vpop.f32.mrf.mxu0
    %v2443 = vpop.f32.mrf.mxu0
    %2444 = vdwg.mxu0
    %2445 = vmatprep.subr.bf16.mxu0 0
    %2446 = vmatpush1.bf16.xpose.msra.mxu0 0
    %2447 = vmatprep.subr.bf16.mxu0 0
    %2448 = vmatpush1.bf16.xpose.msra.mxu0 0
    %2449 = vmatprep.subr.bf16.mxu0 0
    %2450 = vmatpush1.bf16.xpose.msra.mxu0 0
    %2451 = vmatprep.subr.bf16.mxu0 0
    %2452 = vmatpush1.bf16.xpose.msra.mxu0 0
    %2453 = vmatprep.subr.bf16.mxu0 0
    %2454 = vmatpush1.bf16.xpose.msra.mxu0 0
    %2455 = vmatprep.subr.bf16.mxu0 0
    %2456 = vmatpush1.bf16.xpose.msra.mxu0 0
    %2457 = vmatprep.subr.bf16.mxu0 0
    %2458 = vmatpush1.bf16.xpose.msra.mxu0 0
    %2459 = vmatprep.subr.bf16.mxu0 %v676
    %2460 = vmatpush1.bf16.xpose.msra.mxu0 %v675
    %2461 = vmatprep.subr.bf16.mxu0 0
    %2462 = vmatpush2.bf16.xpose.msra.mxu0 0
    %2463 = vmatprep.subr.bf16.mxu0 0
    %2464 = vmatpush2.bf16.xpose.msra.mxu0 0
    %2465 = vmatprep.subr.bf16.mxu0 0
    %2466 = vmatpush2.bf16.xpose.msra.mxu0 0
    %2467 = vmatprep.subr.bf16.mxu0 0
    %2468 = vmatpush2.bf16.xpose.msra.mxu0 0
    %2469 = vmatprep.subr.bf16.mxu0 0
    %2470 = vmatpush2.bf16.xpose.msra.mxu0 0
    %2471 = vmatprep.subr.bf16.mxu0 0
    %2472 = vmatpush2.bf16.xpose.msra.mxu0 0
    %2473 = vmatprep.subr.bf16.mxu0 0
    %2474 = vmatpush2.bf16.xpose.msra.mxu0 0
    %2475 = vmatprep.subr.bf16.mxu0 0
    %2476 = vmatpush2.bf16.xpose.msra.mxu0 0
    %2477 = vmatprep.mubr.bf16.mxu0 %v258
    %2478 = vmatmul.mubr.bf16.gmra.mxu0 %v257
    %v2479 = vpop.f32.mrf.mxu0
    %v2480 = vadd.f32 %v2440, %v2479
    %v2481 = vpop.f32.mrf.mxu0
    %v2482 = vpop.f32.mrf.mxu0
    %v2483 = vpop.f32.mrf.mxu0
    %2484 = vdwg.mxu0
    %2485 = vmatprep.subr.bf16.mxu0 0
    %2486 = vmatpush1.bf16.xpose.msra.mxu0 0
    %2487 = vmatprep.subr.bf16.mxu0 0
    %2488 = vmatpush1.bf16.xpose.msra.mxu0 0
    %2489 = vmatprep.subr.bf16.mxu0 0
    %2490 = vmatpush1.bf16.xpose.msra.mxu0 0
    %2491 = vmatprep.subr.bf16.mxu0 0
    %2492 = vmatpush1.bf16.xpose.msra.mxu0 0
    %2493 = vmatprep.subr.bf16.mxu0 0
    %2494 = vmatpush1.bf16.xpose.msra.mxu0 0
    %2495 = vmatprep.subr.bf16.mxu0 0
    %2496 = vmatpush1.bf16.xpose.msra.mxu0 0
    %2497 = vmatprep.subr.bf16.mxu0 0
    %2498 = vmatpush1.bf16.xpose.msra.mxu0 0
    %2499 = vmatprep.subr.bf16.mxu0 %v678
    %2500 = vmatpush1.bf16.xpose.msra.mxu0 %v677
    %2501 = vmatprep.subr.bf16.mxu0 0
    %2502 = vmatpush2.bf16.xpose.msra.mxu0 0
    %2503 = vmatprep.subr.bf16.mxu0 0
    %2504 = vmatpush2.bf16.xpose.msra.mxu0 0
    %2505 = vmatprep.subr.bf16.mxu0 0
    %2506 = vmatpush2.bf16.xpose.msra.mxu0 0
    %2507 = vmatprep.subr.bf16.mxu0 0
    %2508 = vmatpush2.bf16.xpose.msra.mxu0 0
    %2509 = vmatprep.subr.bf16.mxu0 0
    %2510 = vmatpush2.bf16.xpose.msra.mxu0 0
    %2511 = vmatprep.subr.bf16.mxu0 0
    %2512 = vmatpush2.bf16.xpose.msra.mxu0 0
    %2513 = vmatprep.subr.bf16.mxu0 0
    %2514 = vmatpush2.bf16.xpose.msra.mxu0 0
    %2515 = vmatprep.subr.bf16.mxu0 0
    %2516 = vmatpush2.bf16.xpose.msra.mxu0 0
    %2517 = vmatprep.mubr.bf16.mxu0 %v260
    %2518 = vmatmul.mubr.bf16.gmra.mxu0 %v259
    %v2519 = vpop.f32.mrf.mxu0
    %v2520 = vadd.f32 %v2480, %v2519
    %v2521 = vpop.f32.mrf.mxu0
    %v2522 = vpop.f32.mrf.mxu0
    %v2523 = vpop.f32.mrf.mxu0
    %2524 = vdwg.mxu0
    %2525 = vmatprep.subr.bf16.mxu0 0
    %2526 = vmatpush1.bf16.xpose.msra.mxu0 0
    %2527 = vmatprep.subr.bf16.mxu0 0
    %2528 = vmatpush1.bf16.xpose.msra.mxu0 0
    %2529 = vmatprep.subr.bf16.mxu0 0
    %2530 = vmatpush1.bf16.xpose.msra.mxu0 0
    %2531 = vmatprep.subr.bf16.mxu0 0
    %2532 = vmatpush1.bf16.xpose.msra.mxu0 0
    %2533 = vmatprep.subr.bf16.mxu0 0
    %2534 = vmatpush1.bf16.xpose.msra.mxu0 0
    %2535 = vmatprep.subr.bf16.mxu0 0
    %2536 = vmatpush1.bf16.xpose.msra.mxu0 0
    %2537 = vmatprep.subr.bf16.mxu0 0
    %2538 = vmatpush1.bf16.xpose.msra.mxu0 0
    %2539 = vmatprep.subr.bf16.mxu0 %v680
    %2540 = vmatpush1.bf16.xpose.msra.mxu0 %v679
    %2541 = vmatprep.subr.bf16.mxu0 0
    %2542 = vmatpush2.bf16.xpose.msra.mxu0 0
    %2543 = vmatprep.subr.bf16.mxu0 0
    %2544 = vmatpush2.bf16.xpose.msra.mxu0 0
    %2545 = vmatprep.subr.bf16.mxu0 0
    %2546 = vmatpush2.bf16.xpose.msra.mxu0 0
    %2547 = vmatprep.subr.bf16.mxu0 0
    %2548 = vmatpush2.bf16.xpose.msra.mxu0 0
    %2549 = vmatprep.subr.bf16.mxu0 0
    %2550 = vmatpush2.bf16.xpose.msra.mxu0 0
    %2551 = vmatprep.subr.bf16.mxu0 0
    %2552 = vmatpush2.bf16.xpose.msra.mxu0 0
    %2553 = vmatprep.subr.bf16.mxu0 0
    %2554 = vmatpush2.bf16.xpose.msra.mxu0 0
    %2555 = vmatprep.subr.bf16.mxu0 0
    %2556 = vmatpush2.bf16.xpose.msra.mxu0 0
    %2557 = vmatprep.mubr.bf16.mxu0 %v262
    %2558 = vmatmul.mubr.bf16.gmra.mxu0 %v261
    %v2559 = vpop.f32.mrf.mxu0
    %v2560 = vadd.f32 %v2520, %v2559
    %v2561 = vpop.f32.mrf.mxu0
    %v2562 = vpop.f32.mrf.mxu0
    %v2563 = vpop.f32.mrf.mxu0
    %2564 = vdwg.mxu0
    %2565 = vmatprep.subr.bf16.mxu0 0
    %2566 = vmatpush1.bf16.xpose.msra.mxu0 0
    %2567 = vmatprep.subr.bf16.mxu0 0
    %2568 = vmatpush1.bf16.xpose.msra.mxu0 0
    %2569 = vmatprep.subr.bf16.mxu0 0
    %2570 = vmatpush1.bf16.xpose.msra.mxu0 0
    %2571 = vmatprep.subr.bf16.mxu0 0
    %2572 = vmatpush1.bf16.xpose.msra.mxu0 0
    %2573 = vmatprep.subr.bf16.mxu0 0
    %2574 = vmatpush1.bf16.xpose.msra.mxu0 0
    %2575 = vmatprep.subr.bf16.mxu0 0
    %2576 = vmatpush1.bf16.xpose.msra.mxu0 0
    %2577 = vmatprep.subr.bf16.mxu0 0
    %2578 = vmatpush1.bf16.xpose.msra.mxu0 0
    %2579 = vmatprep.subr.bf16.mxu0 %v682
    %2580 = vmatpush1.bf16.xpose.msra.mxu0 %v681
    %2581 = vmatprep.subr.bf16.mxu0 0
    %2582 = vmatpush2.bf16.xpose.msra.mxu0 0
    %2583 = vmatprep.subr.bf16.mxu0 0
    %2584 = vmatpush2.bf16.xpose.msra.mxu0 0
    %2585 = vmatprep.subr.bf16.mxu0 0
    %2586 = vmatpush2.bf16.xpose.msra.mxu0 0
    %2587 = vmatprep.subr.bf16.mxu0 0
    %2588 = vmatpush2.bf16.xpose.msra.mxu0 0
    %2589 = vmatprep.subr.bf16.mxu0 0
    %2590 = vmatpush2.bf16.xpose.msra.mxu0 0
    %2591 = vmatprep.subr.bf16.mxu0 0
    %2592 = vmatpush2.bf16.xpose.msra.mxu0 0
    %2593 = vmatprep.subr.bf16.mxu0 0
    %2594 = vmatpush2.bf16.xpose.msra.mxu0 0
    %2595 = vmatprep.subr.bf16.mxu0 0
    %2596 = vmatpush2.bf16.xpose.msra.mxu0 0
    %2597 = vmatprep.mubr.bf16.mxu0 %v264
    %2598 = vmatmul.mubr.bf16.gmra.mxu0 %v263
    %v2599 = vpop.f32.mrf.mxu0
    %v2600 = vadd.f32 %v2560, %v2599
    %v2601 = vpop.f32.mrf.mxu0
    %v2602 = vpop.f32.mrf.mxu0
    %v2603 = vpop.f32.mrf.mxu0
    %2604 = vdwg.mxu0
    %2605 = vmatprep.subr.bf16.mxu0 0
    %2606 = vmatpush1.bf16.xpose.msra.mxu0 0
    %2607 = vmatprep.subr.bf16.mxu0 0
    %2608 = vmatpush1.bf16.xpose.msra.mxu0 0
    %2609 = vmatprep.subr.bf16.mxu0 0
    %2610 = vmatpush1.bf16.xpose.msra.mxu0 0
    %2611 = vmatprep.subr.bf16.mxu0 0
    %2612 = vmatpush1.bf16.xpose.msra.mxu0 0
    %2613 = vmatprep.subr.bf16.mxu0 0
    %2614 = vmatpush1.bf16.xpose.msra.mxu0 0
    %2615 = vmatprep.subr.bf16.mxu0 0
    %2616 = vmatpush1.bf16.xpose.msra.mxu0 0
    %2617 = vmatprep.subr.bf16.mxu0 0
    %2618 = vmatpush1.bf16.xpose.msra.mxu0 0
    %2619 = vmatprep.subr.bf16.mxu0 %v684
    %2620 = vmatpush1.bf16.xpose.msra.mxu0 %v683
    %2621 = vmatprep.subr.bf16.mxu0 0
    %2622 = vmatpush2.bf16.xpose.msra.mxu0 0
    %2623 = vmatprep.subr.bf16.mxu0 0
    %2624 = vmatpush2.bf16.xpose.msra.mxu0 0
    %2625 = vmatprep.subr.bf16.mxu0 0
    %2626 = vmatpush2.bf16.xpose.msra.mxu0 0
    %2627 = vmatprep.subr.bf16.mxu0 0
    %2628 = vmatpush2.bf16.xpose.msra.mxu0 0
    %2629 = vmatprep.subr.bf16.mxu0 0
    %2630 = vmatpush2.bf16.xpose.msra.mxu0 0
    %2631 = vmatprep.subr.bf16.mxu0 0
    %2632 = vmatpush2.bf16.xpose.msra.mxu0 0
    %2633 = vmatprep.subr.bf16.mxu0 0
    %2634 = vmatpush2.bf16.xpose.msra.mxu0 0
    %2635 = vmatprep.subr.bf16.mxu0 0
    %2636 = vmatpush2.bf16.xpose.msra.mxu0 0
    %2637 = vmatprep.mubr.bf16.mxu0 %v266
    %2638 = vmatmul.mubr.bf16.gmra.mxu0 %v265
    %v2639 = vpop.f32.mrf.mxu0
    %v2640 = vadd.f32 %v2600, %v2639
    %v2641 = vpop.f32.mrf.mxu0
    %v2642 = vpop.f32.mrf.mxu0
    %v2643 = vpop.f32.mrf.mxu0
    %2644 = vdwg.mxu0
    %2645 = vmatprep.subr.bf16.mxu0 0
    %2646 = vmatpush1.bf16.xpose.msra.mxu0 0
    %2647 = vmatprep.subr.bf16.mxu0 0
    %2648 = vmatpush1.bf16.xpose.msra.mxu0 0
    %2649 = vmatprep.subr.bf16.mxu0 0
    %2650 = vmatpush1.bf16.xpose.msra.mxu0 0
    %2651 = vmatprep.subr.bf16.mxu0 0
    %2652 = vmatpush1.bf16.xpose.msra.mxu0 0
    %2653 = vmatprep.subr.bf16.mxu0 0
    %2654 = vmatpush1.bf16.xpose.msra.mxu0 0
    %2655 = vmatprep.subr.bf16.mxu0 0
    %2656 = vmatpush1.bf16.xpose.msra.mxu0 0
    %2657 = vmatprep.subr.bf16.mxu0 0
    %2658 = vmatpush1.bf16.xpose.msra.mxu0 0
    %2659 = vmatprep.subr.bf16.mxu0 %v686
    %2660 = vmatpush1.bf16.xpose.msra.mxu0 %v685
    %2661 = vmatprep.subr.bf16.mxu0 0
    %2662 = vmatpush2.bf16.xpose.msra.mxu0 0
    %2663 = vmatprep.subr.bf16.mxu0 0
    %2664 = vmatpush2.bf16.xpose.msra.mxu0 0
    %2665 = vmatprep.subr.bf16.mxu0 0
    %2666 = vmatpush2.bf16.xpose.msra.mxu0 0
    %2667 = vmatprep.subr.bf16.mxu0 0
    %2668 = vmatpush2.bf16.xpose.msra.mxu0 0
    %2669 = vmatprep.subr.bf16.mxu0 0
    %2670 = vmatpush2.bf16.xpose.msra.mxu0 0
    %2671 = vmatprep.subr.bf16.mxu0 0
    %2672 = vmatpush2.bf16.xpose.msra.mxu0 0
    %2673 = vmatprep.subr.bf16.mxu0 0
    %2674 = vmatpush2.bf16.xpose.msra.mxu0 0
    %2675 = vmatprep.subr.bf16.mxu0 0
    %2676 = vmatpush2.bf16.xpose.msra.mxu0 0
    %2677 = vmatprep.mubr.bf16.mxu0 %v268
    %2678 = vmatmul.mubr.bf16.gmra.mxu0 %v267
    %v2679 = vpop.f32.mrf.mxu0
    %v2680 = vadd.f32 %v2640, %v2679
    %v2681 = vpop.f32.mrf.mxu0
    %v2682 = vpop.f32.mrf.mxu0
    %v2683 = vpop.f32.mrf.mxu0
    %2684 = vdwg.mxu0
    %2685 = vmatprep.subr.bf16.mxu0 0
    %2686 = vmatpush1.bf16.xpose.msra.mxu0 0
    %2687 = vmatprep.subr.bf16.mxu0 0
    %2688 = vmatpush1.bf16.xpose.msra.mxu0 0
    %2689 = vmatprep.subr.bf16.mxu0 0
    %2690 = vmatpush1.bf16.xpose.msra.mxu0 0
    %2691 = vmatprep.subr.bf16.mxu0 0
    %2692 = vmatpush1.bf16.xpose.msra.mxu0 0
    %2693 = vmatprep.subr.bf16.mxu0 0
    %2694 = vmatpush1.bf16.xpose.msra.mxu0 0
    %2695 = vmatprep.subr.bf16.mxu0 0
    %2696 = vmatpush1.bf16.xpose.msra.mxu0 0
    %2697 = vmatprep.subr.bf16.mxu0 0
    %2698 = vmatpush1.bf16.xpose.msra.mxu0 0
    %2699 = vmatprep.subr.bf16.mxu0 %v688
    %2700 = vmatpush1.bf16.xpose.msra.mxu0 %v687
    %2701 = vmatprep.subr.bf16.mxu0 0
    %2702 = vmatpush2.bf16.xpose.msra.mxu0 0
    %2703 = vmatprep.subr.bf16.mxu0 0
    %2704 = vmatpush2.bf16.xpose.msra.mxu0 0
    %2705 = vmatprep.subr.bf16.mxu0 0
    %2706 = vmatpush2.bf16.xpose.msra.mxu0 0
    %2707 = vmatprep.subr.bf16.mxu0 0
    %2708 = vmatpush2.bf16.xpose.msra.mxu0 0
    %2709 = vmatprep.subr.bf16.mxu0 0
    %2710 = vmatpush2.bf16.xpose.msra.mxu0 0
    %2711 = vmatprep.subr.bf16.mxu0 0
    %2712 = vmatpush2.bf16.xpose.msra.mxu0 0
    %2713 = vmatprep.subr.bf16.mxu0 0
    %2714 = vmatpush2.bf16.xpose.msra.mxu0 0
    %2715 = vmatprep.subr.bf16.mxu0 0
    %2716 = vmatpush2.bf16.xpose.msra.mxu0 0
    %2717 = vmatprep.mubr.bf16.mxu0 %v270
    %2718 = vmatmul.mubr.bf16.gmra.mxu0 %v269
    %v2719 = vpop.f32.mrf.mxu0
    %v2720 = vadd.f32 %v2680, %v2719
    %v2721 = vpop.f32.mrf.mxu0
    %v2722 = vpop.f32.mrf.mxu0
    %v2723 = vpop.f32.mrf.mxu0
    %2724 = vdwg.mxu0
    %2725 = vmatprep.subr.bf16.mxu0 0
    %2726 = vmatpush1.bf16.xpose.msra.mxu0 0
    %2727 = vmatprep.subr.bf16.mxu0 0
    %2728 = vmatpush1.bf16.xpose.msra.mxu0 0
    %2729 = vmatprep.subr.bf16.mxu0 0
    %2730 = vmatpush1.bf16.xpose.msra.mxu0 0
    %2731 = vmatprep.subr.bf16.mxu0 0
    %2732 = vmatpush1.bf16.xpose.msra.mxu0 0
    %2733 = vmatprep.subr.bf16.mxu0 0
    %2734 = vmatpush1.bf16.xpose.msra.mxu0 0
    %2735 = vmatprep.subr.bf16.mxu0 0
    %2736 = vmatpush1.bf16.xpose.msra.mxu0 0
    %2737 = vmatprep.subr.bf16.mxu0 0
    %2738 = vmatpush1.bf16.xpose.msra.mxu0 0
    %2739 = vmatprep.subr.bf16.mxu0 %v690
    %2740 = vmatpush1.bf16.xpose.msra.mxu0 %v689
    %2741 = vmatprep.subr.bf16.mxu0 0
    %2742 = vmatpush2.bf16.xpose.msra.mxu0 0
    %2743 = vmatprep.subr.bf16.mxu0 0
    %2744 = vmatpush2.bf16.xpose.msra.mxu0 0
    %2745 = vmatprep.subr.bf16.mxu0 0
    %2746 = vmatpush2.bf16.xpose.msra.mxu0 0
    %2747 = vmatprep.subr.bf16.mxu0 0
    %2748 = vmatpush2.bf16.xpose.msra.mxu0 0
    %2749 = vmatprep.subr.bf16.mxu0 0
    %2750 = vmatpush2.bf16.xpose.msra.mxu0 0
    %2751 = vmatprep.subr.bf16.mxu0 0
    %2752 = vmatpush2.bf16.xpose.msra.mxu0 0
    %2753 = vmatprep.subr.bf16.mxu0 0
    %2754 = vmatpush2.bf16.xpose.msra.mxu0 0
    %2755 = vmatprep.subr.bf16.mxu0 0
    %2756 = vmatpush2.bf16.xpose.msra.mxu0 0
    %2757 = vmatprep.mubr.bf16.mxu0 %v272
    %2758 = vmatmul.mubr.bf16.gmra.mxu0 %v271
    %v2759 = vpop.f32.mrf.mxu0
    %v2760 = vadd.f32 %v2720, %v2759
    %v2761 = vpop.f32.mrf.mxu0
    %v2762 = vpop.f32.mrf.mxu0
    %v2763 = vpop.f32.mrf.mxu0
    %2764 = vdwg.mxu0
    %2765 = vmatprep.subr.bf16.mxu0 0
    %2766 = vmatpush1.bf16.xpose.msra.mxu0 0
    %2767 = vmatprep.subr.bf16.mxu0 0
    %2768 = vmatpush1.bf16.xpose.msra.mxu0 0
    %2769 = vmatprep.subr.bf16.mxu0 0
    %2770 = vmatpush1.bf16.xpose.msra.mxu0 0
    %2771 = vmatprep.subr.bf16.mxu0 0
    %2772 = vmatpush1.bf16.xpose.msra.mxu0 0
    %2773 = vmatprep.subr.bf16.mxu0 0
    %2774 = vmatpush1.bf16.xpose.msra.mxu0 0
    %2775 = vmatprep.subr.bf16.mxu0 0
    %2776 = vmatpush1.bf16.xpose.msra.mxu0 0
    %2777 = vmatprep.subr.bf16.mxu0 0
    %2778 = vmatpush1.bf16.xpose.msra.mxu0 0
    %2779 = vmatprep.subr.bf16.mxu0 %v692
    %2780 = vmatpush1.bf16.xpose.msra.mxu0 %v691
    %2781 = vmatprep.subr.bf16.mxu0 0
    %2782 = vmatpush2.bf16.xpose.msra.mxu0 0
    %2783 = vmatprep.subr.bf16.mxu0 0
    %2784 = vmatpush2.bf16.xpose.msra.mxu0 0
    %2785 = vmatprep.subr.bf16.mxu0 0
    %2786 = vmatpush2.bf16.xpose.msra.mxu0 0
    %2787 = vmatprep.subr.bf16.mxu0 0
    %2788 = vmatpush2.bf16.xpose.msra.mxu0 0
    %2789 = vmatprep.subr.bf16.mxu0 0
    %2790 = vmatpush2.bf16.xpose.msra.mxu0 0
    %2791 = vmatprep.subr.bf16.mxu0 0
    %2792 = vmatpush2.bf16.xpose.msra.mxu0 0
    %2793 = vmatprep.subr.bf16.mxu0 0
    %2794 = vmatpush2.bf16.xpose.msra.mxu0 0
    %2795 = vmatprep.subr.bf16.mxu0 0
    %2796 = vmatpush2.bf16.xpose.msra.mxu0 0
    %2797 = vmatprep.mubr.bf16.mxu0 %v274
    %2798 = vmatmul.mubr.bf16.gmra.mxu0 %v273
    %v2799 = vpop.f32.mrf.mxu0
    %v2800 = vadd.f32 %v2760, %v2799
    %v2801 = vpop.f32.mrf.mxu0
    %v2802 = vpop.f32.mrf.mxu0
    %v2803 = vpop.f32.mrf.mxu0
    %2804 = vdwg.mxu0
    %2805 = vmatprep.subr.bf16.mxu0 0
    %2806 = vmatpush1.bf16.xpose.msra.mxu0 0
    %2807 = vmatprep.subr.bf16.mxu0 0
    %2808 = vmatpush1.bf16.xpose.msra.mxu0 0
    %2809 = vmatprep.subr.bf16.mxu0 0
    %2810 = vmatpush1.bf16.xpose.msra.mxu0 0
    %2811 = vmatprep.subr.bf16.mxu0 0
    %2812 = vmatpush1.bf16.xpose.msra.mxu0 0
    %2813 = vmatprep.subr.bf16.mxu0 0
    %2814 = vmatpush1.bf16.xpose.msra.mxu0 0
    %2815 = vmatprep.subr.bf16.mxu0 0
    %2816 = vmatpush1.bf16.xpose.msra.mxu0 0
    %2817 = vmatprep.subr.bf16.mxu0 0
    %2818 = vmatpush1.bf16.xpose.msra.mxu0 0
    %2819 = vmatprep.subr.bf16.mxu0 %v694
    %2820 = vmatpush1.bf16.xpose.msra.mxu0 %v693
    %2821 = vmatprep.subr.bf16.mxu0 0
    %2822 = vmatpush2.bf16.xpose.msra.mxu0 0
    %2823 = vmatprep.subr.bf16.mxu0 0
    %2824 = vmatpush2.bf16.xpose.msra.mxu0 0
    %2825 = vmatprep.subr.bf16.mxu0 0
    %2826 = vmatpush2.bf16.xpose.msra.mxu0 0
    %2827 = vmatprep.subr.bf16.mxu0 0
    %2828 = vmatpush2.bf16.xpose.msra.mxu0 0
    %2829 = vmatprep.subr.bf16.mxu0 0
    %2830 = vmatpush2.bf16.xpose.msra.mxu0 0
    %2831 = vmatprep.subr.bf16.mxu0 0
    %2832 = vmatpush2.bf16.xpose.msra.mxu0 0
    %2833 = vmatprep.subr.bf16.mxu0 0
    %2834 = vmatpush2.bf16.xpose.msra.mxu0 0
    %2835 = vmatprep.subr.bf16.mxu0 0
    %2836 = vmatpush2.bf16.xpose.msra.mxu0 0
    %2837 = vmatprep.mubr.bf16.mxu0 %v276
    %2838 = vmatmul.mubr.bf16.gmra.mxu0 %v275
    %v2839 = vpop.f32.mrf.mxu0
    %v2840 = vadd.f32 %v2800, %v2839
    %v2841 = vpop.f32.mrf.mxu0
    %v2842 = vpop.f32.mrf.mxu0
    %v2843 = vpop.f32.mrf.mxu0
    %2844 = vdwg.mxu0
    %2845 = vmatprep.subr.bf16.mxu0 0
    %2846 = vmatpush1.bf16.xpose.msra.mxu0 0
    %2847 = vmatprep.subr.bf16.mxu0 0
    %2848 = vmatpush1.bf16.xpose.msra.mxu0 0
    %2849 = vmatprep.subr.bf16.mxu0 0
    %2850 = vmatpush1.bf16.xpose.msra.mxu0 0
    %2851 = vmatprep.subr.bf16.mxu0 0
    %2852 = vmatpush1.bf16.xpose.msra.mxu0 0
    %2853 = vmatprep.subr.bf16.mxu0 0
    %2854 = vmatpush1.bf16.xpose.msra.mxu0 0
    %2855 = vmatprep.subr.bf16.mxu0 0
    %2856 = vmatpush1.bf16.xpose.msra.mxu0 0
    %2857 = vmatprep.subr.bf16.mxu0 0
    %2858 = vmatpush1.bf16.xpose.msra.mxu0 0
    %2859 = vmatprep.subr.bf16.mxu0 %v696
    %2860 = vmatpush1.bf16.xpose.msra.mxu0 %v695
    %2861 = vmatprep.subr.bf16.mxu0 0
    %2862 = vmatpush2.bf16.xpose.msra.mxu0 0
    %2863 = vmatprep.subr.bf16.mxu0 0
    %2864 = vmatpush2.bf16.xpose.msra.mxu0 0
    %2865 = vmatprep.subr.bf16.mxu0 0
    %2866 = vmatpush2.bf16.xpose.msra.mxu0 0
    %2867 = vmatprep.subr.bf16.mxu0 0
    %2868 = vmatpush2.bf16.xpose.msra.mxu0 0
    %2869 = vmatprep.subr.bf16.mxu0 0
    %2870 = vmatpush2.bf16.xpose.msra.mxu0 0
    %2871 = vmatprep.subr.bf16.mxu0 0
    %2872 = vmatpush2.bf16.xpose.msra.mxu0 0
    %2873 = vmatprep.subr.bf16.mxu0 0
    %2874 = vmatpush2.bf16.xpose.msra.mxu0 0
    %2875 = vmatprep.subr.bf16.mxu0 0
    %2876 = vmatpush2.bf16.xpose.msra.mxu0 0
    %2877 = vmatprep.mubr.bf16.mxu0 %v278
    %2878 = vmatmul.mubr.bf16.gmra.mxu0 %v277
    %v2879 = vpop.f32.mrf.mxu0
    %v2880 = vadd.f32 %v2840, %v2879
    %v2881 = vpop.f32.mrf.mxu0
    %v2882 = vpop.f32.mrf.mxu0
    %v2883 = vpop.f32.mrf.mxu0
    %2884 = vdwg.mxu0
    %2885 = vmatprep.subr.bf16.mxu0 0
    %2886 = vmatpush1.bf16.xpose.msra.mxu0 0
    %2887 = vmatprep.subr.bf16.mxu0 0
    %2888 = vmatpush1.bf16.xpose.msra.mxu0 0
    %2889 = vmatprep.subr.bf16.mxu0 0
    %2890 = vmatpush1.bf16.xpose.msra.mxu0 0
    %2891 = vmatprep.subr.bf16.mxu0 0
    %2892 = vmatpush1.bf16.xpose.msra.mxu0 0
    %2893 = vmatprep.subr.bf16.mxu0 0
    %2894 = vmatpush1.bf16.xpose.msra.mxu0 0
    %2895 = vmatprep.subr.bf16.mxu0 0
    %2896 = vmatpush1.bf16.xpose.msra.mxu0 0
    %2897 = vmatprep.subr.bf16.mxu0 0
    %2898 = vmatpush1.bf16.xpose.msra.mxu0 0
    %2899 = vmatprep.subr.bf16.mxu0 %v698
    %2900 = vmatpush1.bf16.xpose.msra.mxu0 %v697
    %2901 = vmatprep.subr.bf16.mxu0 0
    %2902 = vmatpush2.bf16.xpose.msra.mxu0 0
    %2903 = vmatprep.subr.bf16.mxu0 0
    %2904 = vmatpush2.bf16.xpose.msra.mxu0 0
    %2905 = vmatprep.subr.bf16.mxu0 0
    %2906 = vmatpush2.bf16.xpose.msra.mxu0 0
    %2907 = vmatprep.subr.bf16.mxu0 0
    %2908 = vmatpush2.bf16.xpose.msra.mxu0 0
    %2909 = vmatprep.subr.bf16.mxu0 0
    %2910 = vmatpush2.bf16.xpose.msra.mxu0 0
    %2911 = vmatprep.subr.bf16.mxu0 0
    %2912 = vmatpush2.bf16.xpose.msra.mxu0 0
    %2913 = vmatprep.subr.bf16.mxu0 0
    %2914 = vmatpush2.bf16.xpose.msra.mxu0 0
    %2915 = vmatprep.subr.bf16.mxu0 0
    %2916 = vmatpush2.bf16.xpose.msra.mxu0 0
    %2917 = vmatprep.mubr.bf16.mxu0 %v280
    %2918 = vmatmul.mubr.bf16.gmra.mxu0 %v279
    %v2919 = vpop.f32.mrf.mxu0
    %v2920 = vadd.f32 %v2880, %v2919
    %v2921 = vpop.f32.mrf.mxu0
    %v2922 = vpop.f32.mrf.mxu0
    %v2923 = vpop.f32.mrf.mxu0
    %2924 = vdwg.mxu0
    %2925 = vmatprep.subr.bf16.mxu0 0
    %2926 = vmatpush1.bf16.xpose.msra.mxu0 0
    %2927 = vmatprep.subr.bf16.mxu0 0
    %2928 = vmatpush1.bf16.xpose.msra.mxu0 0
    %2929 = vmatprep.subr.bf16.mxu0 0
    %2930 = vmatpush1.bf16.xpose.msra.mxu0 0
    %2931 = vmatprep.subr.bf16.mxu0 0
    %2932 = vmatpush1.bf16.xpose.msra.mxu0 0
    %2933 = vmatprep.subr.bf16.mxu0 0
    %2934 = vmatpush1.bf16.xpose.msra.mxu0 0
    %2935 = vmatprep.subr.bf16.mxu0 0
    %2936 = vmatpush1.bf16.xpose.msra.mxu0 0
    %2937 = vmatprep.subr.bf16.mxu0 0
    %2938 = vmatpush1.bf16.xpose.msra.mxu0 0
    %2939 = vmatprep.subr.bf16.mxu0 %v700
    %2940 = vmatpush1.bf16.xpose.msra.mxu0 %v699
    %2941 = vmatprep.subr.bf16.mxu0 0
    %2942 = vmatpush2.bf16.xpose.msra.mxu0 0
    %2943 = vmatprep.subr.bf16.mxu0 0
    %2944 = vmatpush2.bf16.xpose.msra.mxu0 0
    %2945 = vmatprep.subr.bf16.mxu0 0
    %2946 = vmatpush2.bf16.xpose.msra.mxu0 0
    %2947 = vmatprep.subr.bf16.mxu0 0
    %2948 = vmatpush2.bf16.xpose.msra.mxu0 0
    %2949 = vmatprep.subr.bf16.mxu0 0
    %2950 = vmatpush2.bf16.xpose.msra.mxu0 0
    %2951 = vmatprep.subr.bf16.mxu0 0
    %2952 = vmatpush2.bf16.xpose.msra.mxu0 0
    %2953 = vmatprep.subr.bf16.mxu0 0
    %2954 = vmatpush2.bf16.xpose.msra.mxu0 0
    %2955 = vmatprep.subr.bf16.mxu0 0
    %2956 = vmatpush2.bf16.xpose.msra.mxu0 0
    %2957 = vmatprep.mubr.bf16.mxu0 %v282
    %2958 = vmatmul.mubr.bf16.gmra.mxu0 %v281
    %v2959 = vpop.f32.mrf.mxu0
    %v2960 = vadd.f32 %v2920, %v2959
    %v2961 = vpop.f32.mrf.mxu0
    %v2962 = vpop.f32.mrf.mxu0
    %v2963 = vpop.f32.mrf.mxu0
    %2964 = vdwg.mxu0
    %2965 = vmatprep.subr.bf16.mxu0 0
    %2966 = vmatpush1.bf16.xpose.msra.mxu0 0
    %2967 = vmatprep.subr.bf16.mxu0 0
    %2968 = vmatpush1.bf16.xpose.msra.mxu0 0
    %2969 = vmatprep.subr.bf16.mxu0 0
    %2970 = vmatpush1.bf16.xpose.msra.mxu0 0
    %2971 = vmatprep.subr.bf16.mxu0 0
    %2972 = vmatpush1.bf16.xpose.msra.mxu0 0
    %2973 = vmatprep.subr.bf16.mxu0 0
    %2974 = vmatpush1.bf16.xpose.msra.mxu0 0
    %2975 = vmatprep.subr.bf16.mxu0 0
    %2976 = vmatpush1.bf16.xpose.msra.mxu0 0
    %2977 = vmatprep.subr.bf16.mxu0 0
    %2978 = vmatpush1.bf16.xpose.msra.mxu0 0
    %2979 = vmatprep.subr.bf16.mxu0 %v702
    %2980 = vmatpush1.bf16.xpose.msra.mxu0 %v701
    %2981 = vmatprep.subr.bf16.mxu0 0
    %2982 = vmatpush2.bf16.xpose.msra.mxu0 0
    %2983 = vmatprep.subr.bf16.mxu0 0
    %2984 = vmatpush2.bf16.xpose.msra.mxu0 0
    %2985 = vmatprep.subr.bf16.mxu0 0
    %2986 = vmatpush2.bf16.xpose.msra.mxu0 0
    %2987 = vmatprep.subr.bf16.mxu0 0
    %2988 = vmatpush2.bf16.xpose.msra.mxu0 0
    %2989 = vmatprep.subr.bf16.mxu0 0
    %2990 = vmatpush2.bf16.xpose.msra.mxu0 0
    %2991 = vmatprep.subr.bf16.mxu0 0
    %2992 = vmatpush2.bf16.xpose.msra.mxu0 0
    %2993 = vmatprep.subr.bf16.mxu0 0
    %2994 = vmatpush2.bf16.xpose.msra.mxu0 0
    %2995 = vmatprep.subr.bf16.mxu0 0
    %2996 = vmatpush2.bf16.xpose.msra.mxu0 0
    %2997 = vmatprep.mubr.bf16.mxu0 %v284
    %2998 = vmatmul.mubr.bf16.gmra.mxu0 %v283
    %v2999 = vpop.f32.mrf.mxu0
    %v3000 = vadd.f32 %v2960, %v2999
    %v3001 = vpop.f32.mrf.mxu0
    %v3002 = vpop.f32.mrf.mxu0
    %v3003 = vpop.f32.mrf.mxu0
    %3004 = vdwg.mxu0
    %3005 = vmatprep.subr.bf16.mxu0 0
    %3006 = vmatpush1.bf16.xpose.msra.mxu0 0
    %3007 = vmatprep.subr.bf16.mxu0 0
    %3008 = vmatpush1.bf16.xpose.msra.mxu0 0
    %3009 = vmatprep.subr.bf16.mxu0 0
    %3010 = vmatpush1.bf16.xpose.msra.mxu0 0
    %3011 = vmatprep.subr.bf16.mxu0 0
    %3012 = vmatpush1.bf16.xpose.msra.mxu0 0
    %3013 = vmatprep.subr.bf16.mxu0 0
    %3014 = vmatpush1.bf16.xpose.msra.mxu0 0
    %3015 = vmatprep.subr.bf16.mxu0 0
    %3016 = vmatpush1.bf16.xpose.msra.mxu0 0
    %3017 = vmatprep.subr.bf16.mxu0 0
    %3018 = vmatpush1.bf16.xpose.msra.mxu0 0
    %3019 = vmatprep.subr.bf16.mxu0 %v704
    %3020 = vmatpush1.bf16.xpose.msra.mxu0 %v703
    %3021 = vmatprep.subr.bf16.mxu0 0
    %3022 = vmatpush2.bf16.xpose.msra.mxu0 0
    %3023 = vmatprep.subr.bf16.mxu0 0
    %3024 = vmatpush2.bf16.xpose.msra.mxu0 0
    %3025 = vmatprep.subr.bf16.mxu0 0
    %3026 = vmatpush2.bf16.xpose.msra.mxu0 0
    %3027 = vmatprep.subr.bf16.mxu0 0
    %3028 = vmatpush2.bf16.xpose.msra.mxu0 0
    %3029 = vmatprep.subr.bf16.mxu0 0
    %3030 = vmatpush2.bf16.xpose.msra.mxu0 0
    %3031 = vmatprep.subr.bf16.mxu0 0
    %3032 = vmatpush2.bf16.xpose.msra.mxu0 0
    %3033 = vmatprep.subr.bf16.mxu0 0
    %3034 = vmatpush2.bf16.xpose.msra.mxu0 0
    %3035 = vmatprep.subr.bf16.mxu0 0
    %3036 = vmatpush2.bf16.xpose.msra.mxu0 0
    %3037 = vmatprep.mubr.bf16.mxu0 %v286
    %3038 = vmatmul.mubr.bf16.gmra.mxu0 %v285
    %v3039 = vpop.f32.mrf.mxu0
    %v3040 = vadd.f32 %v3000, %v3039
    %v3041 = vpop.f32.mrf.mxu0
    %v3042 = vpop.f32.mrf.mxu0
    %v3043 = vpop.f32.mrf.mxu0
    %3044 = vdwg.mxu0
    %3045 = vmatprep.subr.bf16.mxu0 0
    %3046 = vmatpush1.bf16.xpose.msra.mxu0 0
    %3047 = vmatprep.subr.bf16.mxu0 0
    %3048 = vmatpush1.bf16.xpose.msra.mxu0 0
    %3049 = vmatprep.subr.bf16.mxu0 0
    %3050 = vmatpush1.bf16.xpose.msra.mxu0 0
    %3051 = vmatprep.subr.bf16.mxu0 0
    %3052 = vmatpush1.bf16.xpose.msra.mxu0 0
    %3053 = vmatprep.subr.bf16.mxu0 0
    %3054 = vmatpush1.bf16.xpose.msra.mxu0 0
    %3055 = vmatprep.subr.bf16.mxu0 0
    %3056 = vmatpush1.bf16.xpose.msra.mxu0 0
    %3057 = vmatprep.subr.bf16.mxu0 0
    %3058 = vmatpush1.bf16.xpose.msra.mxu0 0
    %3059 = vmatprep.subr.bf16.mxu0 %v706
    %3060 = vmatpush1.bf16.xpose.msra.mxu0 %v705
    %3061 = vmatprep.subr.bf16.mxu0 0
    %3062 = vmatpush2.bf16.xpose.msra.mxu0 0
    %3063 = vmatprep.subr.bf16.mxu0 0
    %3064 = vmatpush2.bf16.xpose.msra.mxu0 0
    %3065 = vmatprep.subr.bf16.mxu0 0
    %3066 = vmatpush2.bf16.xpose.msra.mxu0 0
    %3067 = vmatprep.subr.bf16.mxu0 0
    %3068 = vmatpush2.bf16.xpose.msra.mxu0 0
    %3069 = vmatprep.subr.bf16.mxu0 0
    %3070 = vmatpush2.bf16.xpose.msra.mxu0 0
    %3071 = vmatprep.subr.bf16.mxu0 0
    %3072 = vmatpush2.bf16.xpose.msra.mxu0 0
    %3073 = vmatprep.subr.bf16.mxu0 0
    %3074 = vmatpush2.bf16.xpose.msra.mxu0 0
    %3075 = vmatprep.subr.bf16.mxu0 0
    %3076 = vmatpush2.bf16.xpose.msra.mxu0 0
    %3077 = vmatprep.mubr.bf16.mxu0 %v288
    %3078 = vmatmul.mubr.bf16.gmra.mxu0 %v287
    %v3079 = vpop.f32.mrf.mxu0
    %v3080 = vadd.f32 %v3040, %v3079
    %v3081 = vpop.f32.mrf.mxu0
    %v3082 = vpop.f32.mrf.mxu0
    %v3083 = vpop.f32.mrf.mxu0
    %3084 = vdwg.mxu0
    %3085 = vmatprep.subr.bf16.mxu0 0
    %3086 = vmatpush1.bf16.xpose.msra.mxu0 0
    %3087 = vmatprep.subr.bf16.mxu0 0
    %3088 = vmatpush1.bf16.xpose.msra.mxu0 0
    %3089 = vmatprep.subr.bf16.mxu0 0
    %3090 = vmatpush1.bf16.xpose.msra.mxu0 0
    %3091 = vmatprep.subr.bf16.mxu0 0
    %3092 = vmatpush1.bf16.xpose.msra.mxu0 0
    %3093 = vmatprep.subr.bf16.mxu0 0
    %3094 = vmatpush1.bf16.xpose.msra.mxu0 0
    %3095 = vmatprep.subr.bf16.mxu0 0
    %3096 = vmatpush1.bf16.xpose.msra.mxu0 0
    %3097 = vmatprep.subr.bf16.mxu0 0
    %3098 = vmatpush1.bf16.xpose.msra.mxu0 0
    %3099 = vmatprep.subr.bf16.mxu0 %v708
    %3100 = vmatpush1.bf16.xpose.msra.mxu0 %v707
    %3101 = vmatprep.subr.bf16.mxu0 0
    %3102 = vmatpush2.bf16.xpose.msra.mxu0 0
    %3103 = vmatprep.subr.bf16.mxu0 0
    %3104 = vmatpush2.bf16.xpose.msra.mxu0 0
    %3105 = vmatprep.subr.bf16.mxu0 0
    %3106 = vmatpush2.bf16.xpose.msra.mxu0 0
    %3107 = vmatprep.subr.bf16.mxu0 0
    %3108 = vmatpush2.bf16.xpose.msra.mxu0 0
    %3109 = vmatprep.subr.bf16.mxu0 0
    %3110 = vmatpush2.bf16.xpose.msra.mxu0 0
    %3111 = vmatprep.subr.bf16.mxu0 0
    %3112 = vmatpush2.bf16.xpose.msra.mxu0 0
    %3113 = vmatprep.subr.bf16.mxu0 0
    %3114 = vmatpush2.bf16.xpose.msra.mxu0 0
    %3115 = vmatprep.subr.bf16.mxu0 0
    %3116 = vmatpush2.bf16.xpose.msra.mxu0 0
    %3117 = vmatprep.mubr.bf16.mxu0 %v290
    %3118 = vmatmul.mubr.bf16.gmra.mxu0 %v289
    %v3119 = vpop.f32.mrf.mxu0
    %v3120 = vadd.f32 %v3080, %v3119
    %v3121 = vpop.f32.mrf.mxu0
    %v3122 = vpop.f32.mrf.mxu0
    %v3123 = vpop.f32.mrf.mxu0
    %3124 = vdwg.mxu0
    %3125 = vmatprep.subr.bf16.mxu0 0
    %3126 = vmatpush1.bf16.xpose.msra.mxu0 0
    %3127 = vmatprep.subr.bf16.mxu0 0
    %3128 = vmatpush1.bf16.xpose.msra.mxu0 0
    %3129 = vmatprep.subr.bf16.mxu0 0
    %3130 = vmatpush1.bf16.xpose.msra.mxu0 0
    %3131 = vmatprep.subr.bf16.mxu0 0
    %3132 = vmatpush1.bf16.xpose.msra.mxu0 0
    %3133 = vmatprep.subr.bf16.mxu0 0
    %3134 = vmatpush1.bf16.xpose.msra.mxu0 0
    %3135 = vmatprep.subr.bf16.mxu0 0
    %3136 = vmatpush1.bf16.xpose.msra.mxu0 0
    %3137 = vmatprep.subr.bf16.mxu0 0
    %3138 = vmatpush1.bf16.xpose.msra.mxu0 0
    %3139 = vmatprep.subr.bf16.mxu0 %v710
    %3140 = vmatpush1.bf16.xpose.msra.mxu0 %v709
    %3141 = vmatprep.subr.bf16.mxu0 0
    %3142 = vmatpush2.bf16.xpose.msra.mxu0 0
    %3143 = vmatprep.subr.bf16.mxu0 0
    %3144 = vmatpush2.bf16.xpose.msra.mxu0 0
    %3145 = vmatprep.subr.bf16.mxu0 0
    %3146 = vmatpush2.bf16.xpose.msra.mxu0 0
    %3147 = vmatprep.subr.bf16.mxu0 0
    %3148 = vmatpush2.bf16.xpose.msra.mxu0 0
    %3149 = vmatprep.subr.bf16.mxu0 0
    %3150 = vmatpush2.bf16.xpose.msra.mxu0 0
    %3151 = vmatprep.subr.bf16.mxu0 0
    %3152 = vmatpush2.bf16.xpose.msra.mxu0 0
    %3153 = vmatprep.subr.bf16.mxu0 0
    %3154 = vmatpush2.bf16.xpose.msra.mxu0 0
    %3155 = vmatprep.subr.bf16.mxu0 0
    %3156 = vmatpush2.bf16.xpose.msra.mxu0 0
    %3157 = vmatprep.mubr.bf16.mxu0 %v292
    %3158 = vmatmul.mubr.bf16.gmra.mxu0 %v291
    %v3159 = vpop.f32.mrf.mxu0
    %v3160 = vadd.f32 %v3120, %v3159
    %v3161 = vpop.f32.mrf.mxu0
    %v3162 = vpop.f32.mrf.mxu0
    %v3163 = vpop.f32.mrf.mxu0
    %3164 = vdwg.mxu0
    %3165 = vmatprep.subr.bf16.mxu0 0
    %3166 = vmatpush1.bf16.xpose.msra.mxu0 0
    %3167 = vmatprep.subr.bf16.mxu0 0
    %3168 = vmatpush1.bf16.xpose.msra.mxu0 0
    %3169 = vmatprep.subr.bf16.mxu0 0
    %3170 = vmatpush1.bf16.xpose.msra.mxu0 0
    %3171 = vmatprep.subr.bf16.mxu0 0
    %3172 = vmatpush1.bf16.xpose.msra.mxu0 0
    %3173 = vmatprep.subr.bf16.mxu0 0
    %3174 = vmatpush1.bf16.xpose.msra.mxu0 0
    %3175 = vmatprep.subr.bf16.mxu0 0
    %3176 = vmatpush1.bf16.xpose.msra.mxu0 0
    %3177 = vmatprep.subr.bf16.mxu0 0
    %3178 = vmatpush1.bf16.xpose.msra.mxu0 0
    %3179 = vmatprep.subr.bf16.mxu0 %v712
    %3180 = vmatpush1.bf16.xpose.msra.mxu0 %v711
    %3181 = vmatprep.subr.bf16.mxu0 0
    %3182 = vmatpush2.bf16.xpose.msra.mxu0 0
    %3183 = vmatprep.subr.bf16.mxu0 0
    %3184 = vmatpush2.bf16.xpose.msra.mxu0 0
    %3185 = vmatprep.subr.bf16.mxu0 0
    %3186 = vmatpush2.bf16.xpose.msra.mxu0 0
    %3187 = vmatprep.subr.bf16.mxu0 0
    %3188 = vmatpush2.bf16.xpose.msra.mxu0 0
    %3189 = vmatprep.subr.bf16.mxu0 0
    %3190 = vmatpush2.bf16.xpose.msra.mxu0 0
    %3191 = vmatprep.subr.bf16.mxu0 0
    %3192 = vmatpush2.bf16.xpose.msra.mxu0 0
    %3193 = vmatprep.subr.bf16.mxu0 0
    %3194 = vmatpush2.bf16.xpose.msra.mxu0 0
    %3195 = vmatprep.subr.bf16.mxu0 0
    %3196 = vmatpush2.bf16.xpose.msra.mxu0 0
    %3197 = vmatprep.mubr.bf16.mxu0 %v294
    %3198 = vmatmul.mubr.bf16.gmra.mxu0 %v293
    %v3199 = vpop.f32.mrf.mxu0
    %v3200 = vadd.f32 %v3160, %v3199
    %v3201 = vpop.f32.mrf.mxu0
    %v3202 = vpop.f32.mrf.mxu0
    %v3203 = vpop.f32.mrf.mxu0
    %3204 = vdwg.mxu0
    %3205 = vmatprep.subr.bf16.mxu0 0
    %3206 = vmatpush1.bf16.xpose.msra.mxu0 0
    %3207 = vmatprep.subr.bf16.mxu0 0
    %3208 = vmatpush1.bf16.xpose.msra.mxu0 0
    %3209 = vmatprep.subr.bf16.mxu0 0
    %3210 = vmatpush1.bf16.xpose.msra.mxu0 0
    %3211 = vmatprep.subr.bf16.mxu0 0
    %3212 = vmatpush1.bf16.xpose.msra.mxu0 0
    %3213 = vmatprep.subr.bf16.mxu0 0
    %3214 = vmatpush1.bf16.xpose.msra.mxu0 0
    %3215 = vmatprep.subr.bf16.mxu0 0
    %3216 = vmatpush1.bf16.xpose.msra.mxu0 0
    %3217 = vmatprep.subr.bf16.mxu0 0
    %3218 = vmatpush1.bf16.xpose.msra.mxu0 0
    %3219 = vmatprep.subr.bf16.mxu0 %v714
    %3220 = vmatpush1.bf16.xpose.msra.mxu0 %v713
    %3221 = vmatprep.subr.bf16.mxu0 0
    %3222 = vmatpush2.bf16.xpose.msra.mxu0 0
    %3223 = vmatprep.subr.bf16.mxu0 0
    %3224 = vmatpush2.bf16.xpose.msra.mxu0 0
    %3225 = vmatprep.subr.bf16.mxu0 0
    %3226 = vmatpush2.bf16.xpose.msra.mxu0 0
    %3227 = vmatprep.subr.bf16.mxu0 0
    %3228 = vmatpush2.bf16.xpose.msra.mxu0 0
    %3229 = vmatprep.subr.bf16.mxu0 0
    %3230 = vmatpush2.bf16.xpose.msra.mxu0 0
    %3231 = vmatprep.subr.bf16.mxu0 0
    %3232 = vmatpush2.bf16.xpose.msra.mxu0 0
    %3233 = vmatprep.subr.bf16.mxu0 0
    %3234 = vmatpush2.bf16.xpose.msra.mxu0 0
    %3235 = vmatprep.subr.bf16.mxu0 0
    %3236 = vmatpush2.bf16.xpose.msra.mxu0 0
    %3237 = vmatprep.mubr.bf16.mxu0 %v296
    %3238 = vmatmul.mubr.bf16.gmra.mxu0 %v295
    %v3239 = vpop.f32.mrf.mxu0
    %v3240 = vadd.f32 %v3200, %v3239
    %v3241 = vpop.f32.mrf.mxu0
    %v3242 = vpop.f32.mrf.mxu0
    %v3243 = vpop.f32.mrf.mxu0
    %3244 = vdwg.mxu0
    %3245 = vmatprep.subr.bf16.mxu0 0
    %3246 = vmatpush1.bf16.xpose.msra.mxu0 0
    %3247 = vmatprep.subr.bf16.mxu0 0
    %3248 = vmatpush1.bf16.xpose.msra.mxu0 0
    %3249 = vmatprep.subr.bf16.mxu0 0
    %3250 = vmatpush1.bf16.xpose.msra.mxu0 0
    %3251 = vmatprep.subr.bf16.mxu0 0
    %3252 = vmatpush1.bf16.xpose.msra.mxu0 0
    %3253 = vmatprep.subr.bf16.mxu0 0
    %3254 = vmatpush1.bf16.xpose.msra.mxu0 0
    %3255 = vmatprep.subr.bf16.mxu0 0
    %3256 = vmatpush1.bf16.xpose.msra.mxu0 0
    %3257 = vmatprep.subr.bf16.mxu0 0
    %3258 = vmatpush1.bf16.xpose.msra.mxu0 0
    %3259 = vmatprep.subr.bf16.mxu0 %v716
    %3260 = vmatpush1.bf16.xpose.msra.mxu0 %v715
    %3261 = vmatprep.subr.bf16.mxu0 0
    %3262 = vmatpush2.bf16.xpose.msra.mxu0 0
    %3263 = vmatprep.subr.bf16.mxu0 0
    %3264 = vmatpush2.bf16.xpose.msra.mxu0 0
    %3265 = vmatprep.subr.bf16.mxu0 0
    %3266 = vmatpush2.bf16.xpose.msra.mxu0 0
    %3267 = vmatprep.subr.bf16.mxu0 0
    %3268 = vmatpush2.bf16.xpose.msra.mxu0 0
    %3269 = vmatprep.subr.bf16.mxu0 0
    %3270 = vmatpush2.bf16.xpose.msra.mxu0 0
    %3271 = vmatprep.subr.bf16.mxu0 0
    %3272 = vmatpush2.bf16.xpose.msra.mxu0 0
    %3273 = vmatprep.subr.bf16.mxu0 0
    %3274 = vmatpush2.bf16.xpose.msra.mxu0 0
    %3275 = vmatprep.subr.bf16.mxu0 0
    %3276 = vmatpush2.bf16.xpose.msra.mxu0 0
    %3277 = vmatprep.mubr.bf16.mxu0 %v298
    %3278 = vmatmul.mubr.bf16.gmra.mxu0 %v297
    %v3279 = vpop.f32.mrf.mxu0
    %v3280 = vadd.f32 %v3240, %v3279
    %v3281 = vpop.f32.mrf.mxu0
    %v3282 = vpop.f32.mrf.mxu0
    %v3283 = vpop.f32.mrf.mxu0
    %3284 = vdwg.mxu0
    %3285 = vmatprep.subr.bf16.mxu0 0
    %3286 = vmatpush1.bf16.xpose.msra.mxu0 0
    %3287 = vmatprep.subr.bf16.mxu0 0
    %3288 = vmatpush1.bf16.xpose.msra.mxu0 0
    %3289 = vmatprep.subr.bf16.mxu0 0
    %3290 = vmatpush1.bf16.xpose.msra.mxu0 0
    %3291 = vmatprep.subr.bf16.mxu0 0
    %3292 = vmatpush1.bf16.xpose.msra.mxu0 0
    %3293 = vmatprep.subr.bf16.mxu0 0
    %3294 = vmatpush1.bf16.xpose.msra.mxu0 0
    %3295 = vmatprep.subr.bf16.mxu0 0
    %3296 = vmatpush1.bf16.xpose.msra.mxu0 0
    %3297 = vmatprep.subr.bf16.mxu0 0
    %3298 = vmatpush1.bf16.xpose.msra.mxu0 0
    %3299 = vmatprep.subr.bf16.mxu0 %v718
    %3300 = vmatpush1.bf16.xpose.msra.mxu0 %v717
    %3301 = vmatprep.subr.bf16.mxu0 0
    %3302 = vmatpush2.bf16.xpose.msra.mxu0 0
    %3303 = vmatprep.subr.bf16.mxu0 0
    %3304 = vmatpush2.bf16.xpose.msra.mxu0 0
    %3305 = vmatprep.subr.bf16.mxu0 0
    %3306 = vmatpush2.bf16.xpose.msra.mxu0 0
    %3307 = vmatprep.subr.bf16.mxu0 0
    %3308 = vmatpush2.bf16.xpose.msra.mxu0 0
    %3309 = vmatprep.subr.bf16.mxu0 0
    %3310 = vmatpush2.bf16.xpose.msra.mxu0 0
    %3311 = vmatprep.subr.bf16.mxu0 0
    %3312 = vmatpush2.bf16.xpose.msra.mxu0 0
    %3313 = vmatprep.subr.bf16.mxu0 0
    %3314 = vmatpush2.bf16.xpose.msra.mxu0 0
    %3315 = vmatprep.subr.bf16.mxu0 0
    %3316 = vmatpush2.bf16.xpose.msra.mxu0 0
    %3317 = vmatprep.mubr.bf16.mxu0 %v300
    %3318 = vmatmul.mubr.bf16.gmra.mxu0 %v299
    %v3319 = vpop.f32.mrf.mxu0
    %v3320 = vadd.f32 %v3280, %v3319
    %v3321 = vpop.f32.mrf.mxu0
    %v3322 = vpop.f32.mrf.mxu0
    %v3323 = vpop.f32.mrf.mxu0
    %3324 = vdwg.mxu0
    %3325 = vmatprep.subr.bf16.mxu0 0
    %3326 = vmatpush1.bf16.xpose.msra.mxu0 0
    %3327 = vmatprep.subr.bf16.mxu0 0
    %3328 = vmatpush1.bf16.xpose.msra.mxu0 0
    %3329 = vmatprep.subr.bf16.mxu0 0
    %3330 = vmatpush1.bf16.xpose.msra.mxu0 0
    %3331 = vmatprep.subr.bf16.mxu0 0
    %3332 = vmatpush1.bf16.xpose.msra.mxu0 0
    %3333 = vmatprep.subr.bf16.mxu0 0
    %3334 = vmatpush1.bf16.xpose.msra.mxu0 0
    %3335 = vmatprep.subr.bf16.mxu0 0
    %3336 = vmatpush1.bf16.xpose.msra.mxu0 0
    %3337 = vmatprep.subr.bf16.mxu0 0
    %3338 = vmatpush1.bf16.xpose.msra.mxu0 0
    %3339 = vmatprep.subr.bf16.mxu0 0
    %3340 = vmatpush1.bf16.xpose.msra.mxu0 %v719
    %3341 = vmatprep.subr.bf16.mxu0 0
    %3342 = vmatpush2.bf16.xpose.msra.mxu0 0
    %3343 = vmatprep.subr.bf16.mxu0 0
    %3344 = vmatpush2.bf16.xpose.msra.mxu0 0
    %3345 = vmatprep.subr.bf16.mxu0 0
    %3346 = vmatpush2.bf16.xpose.msra.mxu0 0
    %3347 = vmatprep.subr.bf16.mxu0 0
    %3348 = vmatpush2.bf16.xpose.msra.mxu0 0
    %3349 = vmatprep.subr.bf16.mxu0 0
    %3350 = vmatpush2.bf16.xpose.msra.mxu0 0
    %3351 = vmatprep.subr.bf16.mxu0 0
    %3352 = vmatpush2.bf16.xpose.msra.mxu0 0
    %3353 = vmatprep.subr.bf16.mxu0 0
    %3354 = vmatpush2.bf16.xpose.msra.mxu0 0
    %3355 = vmatprep.subr.bf16.mxu0 0
    %3356 = vmatpush2.bf16.xpose.msra.mxu0 0
    %3357 = vmatprep.mubr.bf16.mxu0 0
    %3358 = vmatmul.mubr.bf16.gmra.mxu0 %v301
    %v3359 = vpop.f32.mrf.mxu0
    %v3360 = vadd.f32 %v3320, %v3359
    %v3361 = vpop.f32.mrf.mxu0
    %v3362 = vpop.f32.mrf.mxu0
    %v3363 = vpop.f32.mrf.mxu0
    %3364 = vdwg.mxu0
    %v3365 = vld [vmem:[%s4] sm:$0x1]
    %v3367 = vlaneseq
    %v3368 = vshrl.u32 %v3367, 7
    %v3369 = vsub.s32 0, %v3368
    %v3370 = vrot.slane %v3365, %v3369
    %v3372 = vadd.f32 %v3360, %v3370
    %v3373 = vmax.f32 %v3372, -1.0
    %v3374 = vmin.f32 %v3373, 1.0
    %vm3375 = vcmask 62464
    %3376 = vst.msk [vmem:[#allocation7] sm:$0x3f] %vm3375, %v3374
    %v3377 = vld [vmem:[%s5] sm:$0x3f]
    %v3378 = vmul.f32 %v3374, %v3377
    %s3379 = scalar_lea.vmem %s5, 8
    %v3380 = vld [vmem:[%s3379] sm:$0x3f]
    %v3381 = vmul.f32 %v3374, %v3380
    %v3382 = vmax.f32 %v3378, %v3381
    %s3383 = scalar_lea.vmem %s5, 16
    %v3384 = vld [vmem:[%s3383] sm:$0x3f]
    %v3385 = vmul.f32 %v3374, %v3384
    %v3386 = vmax.f32 %v3382, %v3385
    %s3387 = scalar_lea.vmem %s5, 24
    %v3388 = vld [vmem:[%s3387] sm:$0x3f]
    %v3389 = vmul.f32 %v3374, %v3388
    %v3390 = vmax.f32 %v3386, %v3389
    %v3391 = vsub.f32 %v3378, %v3390
    %v3392 = vmul.f32 %v3391, 1.442695
    %v3393 = vpow.pop %v3392
    %v3394 = vadd.f32 %v3393, 0.0
    %v3395 = vmul.f32 %v3393, %v3393
    %v3396 = vadd.f32 %v3395, 0.0
    %v3397 = vsub.f32 %v3381, %v3390
    %v3398 = vmul.f32 %v3397, 1.442695
    %v3399 = vpow.pop %v3398
    %v3400 = vadd.f32 %v3394, %v3399
    %v3401 = vmul.f32 %v3399, %v3399
    %v3402 = vadd.f32 %v3396, %v3401
    %v3403 = vsub.f32 %v3385, %v3390
    %v3404 = vmul.f32 %v3403, 1.442695
    %v3405 = vpow.pop %v3404
    %v3406 = vadd.f32 %v3400, %v3405
    %v3407 = vmul.f32 %v3405, %v3405
    %v3408 = vadd.f32 %v3402, %v3407
    %v3409 = vsub.f32 %v3389, %v3390
    %v3410 = vmul.f32 %v3409, 1.442695
    %v3411 = vpow.pop %v3410
    %v3412 = vadd.f32 %v3406, %v3411
    %v3413 = vmul.f32 %v3411, %v3411
    %v3414 = vadd.f32 %v3408, %v3413
    %v3415 = vmul.f32 %v3412, %v3412
    %v3416 = vrcp.pop %v3415
    %v3417 = vmul.f32 %v3414, %v3416
    %v3418 = vsub.f32 4.0, %v3417
    %3419 = vst.msk [vmem:[#allocation8] sm:$0x3f] %vm3375, %v3418
    // Predicated region
    $region34: #{tpu_custom_call.1} parent=1 // pred_check
      _
    $region35: #{tpu_custom_call.1} parent=1 // pred_check_branch
      %3421 = sbr.rel (0) target = $region37
    $region36: #{tpu_custom_call.1} parent=1 // pred_region
      %s3423 = ssub.s32 128, 128
      %3424 = vsyncadd [#allocation4], %s3423
      %s3426 = sshll.u32 [#allocation7], 4
      %s3427 = int_to_ptr.vmem [resolvable:$true] %s3426
      %3429 = dma.vmem_to_hbm [thread:$0]  %s3427, 128, %s6, [#allocation4]
    $region37: #{tpu_custom_call.1} parent=1 // pred_fallthru
      _
    // Predicated region
    $region38: #{tpu_custom_call.1} parent=1 // pred_check
      _
    $region39: #{tpu_custom_call.1} parent=1 // pred_check_branch
      %3431 = sbr.rel (0) target = $region41
    $region40: #{tpu_custom_call.1} parent=1 // pred_region
      %s3433 = ssub.s32 128, 128
      %3434 = vsyncadd [#allocation9], %s3433
      %s3436 = sshll.u32 [#allocation8], 4
      %s3437 = int_to_ptr.vmem [resolvable:$true] %s3436
      %3439 = dma.vmem_to_hbm [thread:$0]  %s3437, 128, %s7, [#allocation9]
    $region41: #{tpu_custom_call.1} parent=1 // pred_fallthru
      _
    // Predicated region
    $region42: #{tpu_custom_call.1} parent=1 // pred_check
      _
    $region43: #{tpu_custom_call.1} parent=1 // pred_check_branch
      %3441 = sbr.rel (0) target = $region45
    $region44: #{tpu_custom_call.1} parent=1 // pred_region
      %3442 = dma.done [#allocation4], 128
    $region45: #{tpu_custom_call.1} parent=1 // pred_fallthru
      _
    // Predicated region
    $region46: #{tpu_custom_call.1} parent=1 // pred_check
      _
    $region47: #{tpu_custom_call.1} parent=1 // pred_check_branch
      %3444 = sbr.rel (0) target = $region49
    $region48: #{tpu_custom_call.1} parent=1 // pred_region
      %3445 = dma.done [#allocation9], 128
    $region49: #{tpu_custom_call.1} parent=1 // pred_fallthru
      _
    %3446 = vsyncpa [#allocation3], 1
    %3447 = vsyncpa [#allocation6], 1
    %3448 = vsyncpa [#allocation4], 1
    %3449 = vsyncpa [#allocation9], 1

</llo_original>
